<compile_context>
chip_gen: v7x
topology: tpu7x:2x2x1
jax: 0.10.0
libtpu: 0.0.40
codegen_flags: <defaults>
</compile_context>

<pallas_src>
import functools

import jax
import jax.numpy as jnp
from jax import lax
from jax.experimental import pallas as pl
from jax.experimental.pallas import tpu as pltpu

INPUT_DIM = 5          # len(features)
INPUT_PAD = 16         # features padded to a tile-aligned contraction dim
HIDDEN = 64            # hidden_dim
N_HEADS = 4
HEAD_DIM = HIDDEN // N_HEADS
N_LAYERS = 2
FFN_DIM = 2048         # nn.TransformerEncoderLayer default dim_feedforward
LN_EPS = 1e-5
PARAMS_PER_LAYER = 12  # in_proj(w,b) out_proj(w,b) ln1(w,b) lin1(w,b) lin2(w,b) ln2(w,b)

# ---- packed-parameter slab layout --------------------------------------------------
# wqkv slab (bf16, 192 lanes): [emb weight (16 rows, lanes 0:64)] then per layer a
#   fused (64, 192) block with lanes ordered [Wq | Wk | Wv] in (in, out) layout.
QKV_ROW_BASE = INPUT_PAD
WQKV_ROWS = INPUT_PAD + N_LAYERS * HIDDEN            # 144
# wmix slab (bf16, 128 lanes): rows [0,64) = Wo of both layers (layer l in lanes
#   64l:64l+64); rows [64, 64+2048) = W2 of both layers, same lane pairing.
WO_BASE = 0
W2_BASE = HIDDEN
WMIX_ROWS = HIDDEN + FFN_DIM                         # 2112
# vec slab (f32, 192 lanes): emb_b; per layer [qkv_bias(192), bo, ln1w, ln1b, b2,
#   ln2w, ln2b]; fc_w; fc_b.  64-wide params live in lanes 0:64.
VEC_EMB_B = 0
VEC_LAYER = 7
VEC_FC_W = 1 + N_LAYERS * VEC_LAYER                  # 15
VEC_FC_B = VEC_FC_W + 1                              # 16
VEC_LANES = 3 * HIDDEN                               # 192
VEC_ROWS = ((VEC_FC_B + 1 + 7) // 8) * 8             # 24


def _mm(a_bf16, w_bf16):
    """bf16 x bf16 (in,out)-layout matmul with f32 accumulation (MXU bf16 path)."""
    return jnp.dot(a_bf16, w_bf16, preferred_element_type=jnp.float32)


def _qkt(a, b):
    """a @ b.T for two f32 (rows, d) tiles."""
    return lax.dot_general(a, b, (((1,), (1,)), ((), ())),
                           preferred_element_type=jnp.float32)


def _layer_norm(x, w, b):
    mu = jnp.mean(x, axis=-1, keepdims=True)
    var = jnp.mean((x - mu) ** 2, axis=-1, keepdims=True)   # biased var, like PyTorch
    return (x - mu) * lax.rsqrt(var + LN_EPS) * w + b


def _transformer_kernel(x_ref, wqkv_ref, wmix_ref, w1_ref, vec_ref, b1_ref,
                        out_ref, *, seq, batch):
    rows = seq * batch
    scale = 1.0 / (HEAD_DIM ** 0.5)

    x = x_ref[...]                                   # (B*S, INPUT_PAD) f32, rows = (b, s)
    vec = vec_ref[...]                               # (VEC_ROWS, 192) f32

    # Block-diagonal attention mask: token (b, s) only attends within its own batch b.
    r = lax.broadcasted_iota(jnp.int32, (rows, rows), 0)
    c = lax.broadcasted_iota(jnp.int32, (rows, rows), 1)
    if seq & (seq - 1) == 0:                         # power of two: shift + compare
        sh = seq.bit_length() - 1
        keep = (r >> sh) == (c >> sh)
    else:
        keep = (r // seq) == (c // seq)

    # Per-head lane masks over the 64 hidden lanes (built once, reused by all layers).
    lane = lax.broadcasted_iota(jnp.int32, (1, HIDDEN), 1)
    head_masks = [((lane >= h * HEAD_DIM) & (lane < (h + 1) * HEAD_DIM)
                   ).astype(jnp.float32) for h in range(N_HEADS)]

    # embedding (weight rows beyond INPUT_DIM are zero-padded)
    emb_w = wqkv_ref[0:INPUT_PAD, 0:HIDDEN]
    h = _mm(x.astype(jnp.bfloat16), emb_w) + vec[VEC_EMB_B:VEC_EMB_B + 1, 0:HIDDEN]

    # layer-paired (lane-dense) RHS slabs; identical slice for both layers
    wo_pair = wmix_ref[WO_BASE:WO_BASE + HIDDEN, :]          # (64, 128) bf16
    w2_pair = wmix_ref[W2_BASE:W2_BASE + FFN_DIM, :]         # (2048, 128) bf16

    for layer in range(N_LAYERS):
        qrb = QKV_ROW_BASE + layer * HIDDEN
        vb = 1 + layer * VEC_LAYER
        col = layer * HIDDEN                                 # lane offset in paired slabs

        bo   = vec[vb + 1:vb + 2, 0:HIDDEN]
        ln1w = vec[vb + 2:vb + 3, 0:HIDDEN]
        ln1b = vec[vb + 3:vb + 4, 0:HIDDEN]
        b2   = vec[vb + 4:vb + 5, 0:HIDDEN]
        ln2w = vec[vb + 5:vb + 6, 0:HIDDEN]
        ln2b = vec[vb + 6:vb + 7, 0:HIDDEN]
        b1   = b1_ref[layer:layer + 1, :]                    # (1, 2048) f32

        # ---- fused QKV projection: one matmul + one fused bias add ----
        h_bf = h.astype(jnp.bfloat16)
        qkv = _mm(h_bf, wqkv_ref[qrb:qrb + HIDDEN, :]) + vec[vb:vb + 1, :]   # (B*S, 192)
        q = qkv[:, 0:HIDDEN]
        k = qkv[:, HIDDEN:2 * HIDDEN]
        v = qkv[:, 2 * HIDDEN:3 * HIDDEN]

        # ---- multi-head self-attention via head lane masks (dropout = identity) ----
        ctx = jnp.zeros((rows, HIDDEN), jnp.float32)
        for hm in head_masks:
            s = _qkt(q * hm, k) * scale                      # only head-h lanes contribute
            s = jnp.where(keep, s, -1e30)
            m = jnp.max(s, axis=-1, keepdims=True)
            e = jnp.exp(s - m)
            p = e / jnp.sum(e, axis=-1, keepdims=True)       # exact reciprocal (tiny rows)
            ctx = ctx + jnp.dot(p, v * hm, preferred_element_type=jnp.float32)

        # single out_proj matmul for all heads; take this layer's 64 output lanes
        attn = _mm(ctx.astype(jnp.bfloat16), wo_pair)[:, col:col + HIDDEN] + bo
        h = _layer_norm(h + attn, ln1w, ln1b)                # post-LN (norm_first=False)

        # ---- feed-forward (ReLU); only a bf16 copy of the (B*S, 2048) act stays live ----
        h_bf = h.astype(jnp.bfloat16)
        w1 = w1_ref[layer * HIDDEN:(layer + 1) * HIDDEN, :]  # (64, 2048) bf16
        ff = jnp.maximum(_mm(h_bf, w1) + b1, 0.0)            # f32 bias+ReLU (v5e-safe)
        ff_bf = ff.astype(jnp.bfloat16)
        ff = _mm(ff_bf, w2_pair)[:, col:col + HIDDEN] + b2   # (B*S, 64)
        h = _layer_norm(h + ff, ln2w, ln2b)

    # x.mean(dim=1): average over the batch rows (rows are grouped per batch)
    pooled = jnp.zeros((seq, HIDDEN), jnp.float32)
    for b in range(batch):
        pooled = pooled + h[b * seq:(b + 1) * seq, :]
    pooled = pooled * (1.0 / batch)

    fc_w = vec[VEC_FC_W:VEC_FC_W + 1, 0:HIDDEN]              # (1, 64)
    fc_b = vec[VEC_FC_B:VEC_FC_B + 1, 0:1]                   # (1, 1)
    logits = jnp.sum(pooled * fc_w, axis=-1, keepdims=True) + fc_b   # (S, 1)
    out_ref[...] = 1.0 / (1.0 + jnp.exp(-logits))            # sigmoid (exact; 8 elements)


@jax.jit
def transformer_forward(x, wqkv, wmix, w1, vec, b1):
    S, B, _ = x.shape
    # (S, B, I) -> (B*S, I) rows ordered (b, s); pad features 5 -> 16 with zeros
    xf = jnp.transpose(x, (1, 0, 2)).reshape(B * S, INPUT_DIM)
    xf = jnp.pad(xf, ((0, 0), (0, INPUT_PAD - INPUT_DIM)))
    kernel = functools.partial(_transformer_kernel, seq=S, batch=B)
    return pl.pallas_call(
        kernel,
        out_shape=jax.ShapeDtypeStruct((S, 1), jnp.float32),
        in_specs=[pl.BlockSpec(memory_space=pltpu.MemorySpace.VMEM)] * 6,
        out_specs=pl.BlockSpec(memory_space=pltpu.MemorySpace.VMEM),
    )(xf, wqkv, wmix, w1, vec, b1)


def init_params(key):
    """Deterministic synthetic parameters in PyTorch (out, in) weight layout."""
    keys = iter(jax.random.split(key, 64))

    def normal(shape, scale):
        return scale * jax.random.normal(next(keys), shape, dtype=jnp.float32)

    params = []
    params.append(normal((HIDDEN, INPUT_DIM), 0.3))              # embedding.weight
    params.append(normal((1, HIDDEN), 0.1))                      # embedding.bias
    for _ in range(N_LAYERS):
        params.append(normal((3 * HIDDEN, HIDDEN), 0.1))         # in_proj_weight
        params.append(jnp.zeros((1, 3 * HIDDEN), jnp.float32))   # in_proj_bias
        params.append(normal((HIDDEN, HIDDEN), 0.1))             # out_proj.weight
        params.append(jnp.zeros((1, HIDDEN), jnp.float32))       # out_proj.bias
        params.append(jnp.ones((1, HIDDEN), jnp.float32))        # norm1.weight
        params.append(jnp.zeros((1, HIDDEN), jnp.float32))       # norm1.bias
        params.append(normal((FFN_DIM, HIDDEN), 0.05))           # linear1.weight
        params.append(jnp.zeros((1, FFN_DIM), jnp.float32))      # linear1.bias
        params.append(normal((HIDDEN, FFN_DIM), 0.05))           # linear2.weight
        params.append(jnp.zeros((1, HIDDEN), jnp.float32))       # linear2.bias
        params.append(jnp.ones((1, HIDDEN), jnp.float32))        # norm2.weight
        params.append(jnp.zeros((1, HIDDEN), jnp.float32))       # norm2.bias
    params.append(normal((1, HIDDEN), 0.2))                      # fc.weight
    params.append(jnp.zeros((1, 1), jnp.float32))                # fc.bias
    return params


def pack_params(params):
    """Pack PyTorch-layout params into 5 slabs (weights pre-transposed to (in, out))."""
    emb_w, emb_b = params[0], params[1]

    emb_blk = jnp.zeros((INPUT_PAD, 3 * HIDDEN), jnp.float32)
    emb_blk = emb_blk.at[:INPUT_DIM, :HIDDEN].set(emb_w.T)

    def row192(v):                                   # (1, n<=192) -> (1, 192)
        return jnp.pad(v, ((0, 0), (0, VEC_LANES - v.shape[1])))

    wqkv_blocks = [emb_blk]
    wo_cols, w2_cols, w1_rows, b1_rows = [], [], [], []
    vec_rows = [row192(emb_b.reshape(1, HIDDEN))]

    for l in range(N_LAYERS):
        base = 2 + l * PARAMS_PER_LAYER
        (ipw, ipb, opw, opb, ln1w, ln1b,
         l1w, l1b, l2w, l2b, ln2w, ln2b) = params[base:base + PARAMS_PER_LAYER]
        wqkv_blocks.append(ipw.T)                    # (64, 192), lanes = [Wq | Wk | Wv]
        wo_cols.append(opw.T)                        # (64, 64)
        w2_cols.append(l2w.T)                        # (2048, 64)
        w1_rows.append(l1w.T)                        # (64, 2048)
        b1_rows.append(l1b)                          # (1, 2048)
        vec_rows += [ipb,                            # fused (1, 192) qkv bias
                     row192(opb), row192(ln1w), row192(ln1b),
                     row192(l2b), row192(ln2w), row192(ln2b)]

    fc_w, fc_b = params[-2], params[-1]
    vec_rows += [row192(fc_w), row192(fc_b)]

    wqkv = jnp.concatenate(wqkv_blocks, axis=0).astype(jnp.bfloat16)        # (144, 192)
    wmix = jnp.concatenate(
        [jnp.concatenate(wo_cols, axis=1), jnp.concatenate(w2_cols, axis=1)],
        axis=0).astype(jnp.bfloat16)                                        # (2112, 128)
    w1 = jnp.concatenate(w1_rows, axis=0).astype(jnp.bfloat16)              # (128, 2048)
    vec = jnp.concatenate(vec_rows, axis=0)
    vec = jnp.pad(vec, ((0, VEC_ROWS - vec.shape[0]), (0, 0)))              # (24, 192)
    b1 = jnp.concatenate(b1_rows, axis=0)                                   # (2, 2048)

    assert wqkv.shape == (WQKV_ROWS, 3 * HIDDEN)
    assert wmix.shape == (WMIX_ROWS, 2 * HIDDEN)
    assert w1.shape == (N_LAYERS * HIDDEN, FFN_DIM)
    assert vec.shape == (VEC_ROWS, VEC_LANES)
    assert b1.shape == (N_LAYERS, FFN_DIM)
    return wqkv, wmix, w1, vec, b1


if __name__ == "__main__":
    key = jax.random.PRNGKey(0)
    pkey, xkey = jax.random.split(key)
    params = init_params(pkey)
    wqkv, wmix, w1, vec, b1 = pack_params(params)

    S, B = 8, 2   # (seq, batch) — small shapes; features = 5
    x = jax.random.normal(xkey, (S, B, INPUT_DIM), dtype=jnp.float32)

    out = transformer_forward(x, wqkv, wmix, w1, vec, b1)
    out = jax.block_until_ready(out)
    assert out.shape == (S, 1)
    assert bool(jnp.all(jnp.isfinite(out)))
    assert bool(jnp.all((out >= 0.0) & (out <= 1.0)))   # sigmoid range
    print("KERNEL_OK")
</pallas_src>

<mosaic_0001>
module attributes {stable_mosaic.version = 11 : i64} {
  func.func @_transformer_kernel(%arg0: memref<16x16xf32, #tpu.memory_space<vmem>>, %arg1: memref<144x192xbf16, #tpu.memory_space<vmem>>, %arg2: memref<2112x128xbf16, #tpu.memory_space<vmem>>, %arg3: memref<128x2048xbf16, #tpu.memory_space<vmem>>, %arg4: memref<24x192xf32, #tpu.memory_space<vmem>>, %arg5: memref<2x2048xf32, #tpu.memory_space<vmem>>, %arg6: memref<8x1xf32, #tpu.memory_space<vmem>>) attributes {dimension_semantics = [], scalar_prefetch = 0 : i64, scratch_operands = 0 : i64, tpu.core_type = #tpu.core_type<tc>} {
    %c0 = arith.constant 0 : index
    %c0_0 = arith.constant 0 : index
    %0 = vector.load %arg0[%c0, %c0_0] : memref<16x16xf32, #tpu.memory_space<vmem>>, vector<16x16xf32>
    %c0_1 = arith.constant 0 : index
    %c0_2 = arith.constant 0 : index
    %1 = vector.load %arg4[%c0_1, %c0_2] : memref<24x192xf32, #tpu.memory_space<vmem>>, vector<24x192xf32>
    %2 = tpu.iota {dimensions = array<i32: 0>} : vector<16x16xi32>
    %3 = tpu.iota {dimensions = array<i32: 1>} : vector<16x16xi32>
    %c3_i32 = arith.constant 3 : i32
    %4 = vector.broadcast %c3_i32 : i32 to vector<16x16xi32>
    %5 = arith.shrsi %2, %4 : vector<16x16xi32>
    %c3_i32_3 = arith.constant 3 : i32
    %6 = vector.broadcast %c3_i32_3 : i32 to vector<16x16xi32>
    %7 = arith.shrsi %3, %6 : vector<16x16xi32>
    %8 = arith.cmpi eq, %5, %7 : vector<16x16xi32>
    %9 = tpu.iota {dimensions = array<i32: 1>} : vector<1x64xi32>
    %c0_i32 = arith.constant 0 : i32
    %10 = vector.broadcast %c0_i32 : i32 to vector<1x64xi32>
    %11 = arith.cmpi sge, %9, %10 : vector<1x64xi32>
    %c16_i32 = arith.constant 16 : i32
    %12 = vector.broadcast %c16_i32 : i32 to vector<1x64xi32>
    %13 = arith.cmpi slt, %9, %12 : vector<1x64xi32>
    %14 = arith.andi %11, %13 : vector<1x64xi1>
    %15 = arith.extui %14 : vector<1x64xi1> to vector<1x64xi32>
    %16 = arith.sitofp %15 : vector<1x64xi32> to vector<1x64xf32>
    %c16_i32_4 = arith.constant 16 : i32
    %17 = vector.broadcast %c16_i32_4 : i32 to vector<1x64xi32>
    %18 = arith.cmpi sge, %9, %17 : vector<1x64xi32>
    %c32_i32 = arith.constant 32 : i32
    %19 = vector.broadcast %c32_i32 : i32 to vector<1x64xi32>
    %20 = arith.cmpi slt, %9, %19 : vector<1x64xi32>
    %21 = arith.andi %18, %20 : vector<1x64xi1>
    %22 = arith.extui %21 : vector<1x64xi1> to vector<1x64xi32>
    %23 = arith.sitofp %22 : vector<1x64xi32> to vector<1x64xf32>
    %c32_i32_5 = arith.constant 32 : i32
    %24 = vector.broadcast %c32_i32_5 : i32 to vector<1x64xi32>
    %25 = arith.cmpi sge, %9, %24 : vector<1x64xi32>
    %c48_i32 = arith.constant 48 : i32
    %26 = vector.broadcast %c48_i32 : i32 to vector<1x64xi32>
    %27 = arith.cmpi slt, %9, %26 : vector<1x64xi32>
    %28 = arith.andi %25, %27 : vector<1x64xi1>
    %29 = arith.extui %28 : vector<1x64xi1> to vector<1x64xi32>
    %30 = arith.sitofp %29 : vector<1x64xi32> to vector<1x64xf32>
    %c48_i32_6 = arith.constant 48 : i32
    %31 = vector.broadcast %c48_i32_6 : i32 to vector<1x64xi32>
    %32 = arith.cmpi sge, %9, %31 : vector<1x64xi32>
    %c64_i32 = arith.constant 64 : i32
    %33 = vector.broadcast %c64_i32 : i32 to vector<1x64xi32>
    %34 = arith.cmpi slt, %9, %33 : vector<1x64xi32>
    %35 = arith.andi %32, %34 : vector<1x64xi1>
    %36 = arith.extui %35 : vector<1x64xi1> to vector<1x64xi32>
    %37 = arith.sitofp %36 : vector<1x64xi32> to vector<1x64xf32>
    %c0_7 = arith.constant 0 : index
    %c0_8 = arith.constant 0 : index
    %38 = vector.load %arg1[%c0_7, %c0_8] : memref<144x192xbf16, #tpu.memory_space<vmem>>, vector<16x64xbf16>
    %39 = arith.truncf %0 : vector<16x16xf32> to vector<16x16xbf16>
    %cst = arith.constant dense<0.000000e+00> : vector<16x64xf32>
    %40 = tpu.matmul %39, %38, %cst {dimension_numbers = #tpu.dot_dimension_numbers<[1], [0], [0], [1], [0, 0, 1, 1], [], []>} : vector<16x16xbf16>, vector<16x64xbf16>, vector<16x64xf32> -> vector<16x64xf32>
    %41 = vector.extract_strided_slice %1 {offsets = [0, 0], sizes = [1, 64], strides = [1, 1]} : vector<24x192xf32> to vector<1x64xf32>
    %42 = vector.broadcast %41 : vector<1x64xf32> to vector<16x64xf32>
    %43 = arith.addf %40, %42 : vector<16x64xf32>
    %c0_9 = arith.constant 0 : index
    %c0_10 = arith.constant 0 : index
    %44 = vector.load %arg2[%c0_9, %c0_10] : memref<2112x128xbf16, #tpu.memory_space<vmem>>, vector<64x128xbf16>
    %c64 = arith.constant 64 : index
    %c0_11 = arith.constant 0 : index
    %45 = vector.load %arg2[%c64, %c0_11] : memref<2112x128xbf16, #tpu.memory_space<vmem>>, vector<2048x128xbf16>
    %46 = vector.extract_strided_slice %1 {offsets = [2, 0], sizes = [1, 64], strides = [1, 1]} : vector<24x192xf32> to vector<1x64xf32>
    %47 = vector.extract_strided_slice %1 {offsets = [3, 0], sizes = [1, 64], strides = [1, 1]} : vector<24x192xf32> to vector<1x64xf32>
    %48 = vector.extract_strided_slice %1 {offsets = [4, 0], sizes = [1, 64], strides = [1, 1]} : vector<24x192xf32> to vector<1x64xf32>
    %49 = vector.extract_strided_slice %1 {offsets = [5, 0], sizes = [1, 64], strides = [1, 1]} : vector<24x192xf32> to vector<1x64xf32>
    %50 = vector.extract_strided_slice %1 {offsets = [6, 0], sizes = [1, 64], strides = [1, 1]} : vector<24x192xf32> to vector<1x64xf32>
    %51 = vector.extract_strided_slice %1 {offsets = [7, 0], sizes = [1, 64], strides = [1, 1]} : vector<24x192xf32> to vector<1x64xf32>
    %c0_12 = arith.constant 0 : index
    %c0_13 = arith.constant 0 : index
    %52 = vector.load %arg5[%c0_12, %c0_13] : memref<2x2048xf32, #tpu.memory_space<vmem>>, vector<1x2048xf32>
    %53 = arith.truncf %43 : vector<16x64xf32> to vector<16x64xbf16>
    %c16 = arith.constant 16 : index
    %c0_14 = arith.constant 0 : index
    %54 = vector.load %arg1[%c16, %c0_14] : memref<144x192xbf16, #tpu.memory_space<vmem>>, vector<64x192xbf16>
    %cst_15 = arith.constant dense<0.000000e+00> : vector<16x192xf32>
    %55 = tpu.matmul %53, %54, %cst_15 {dimension_numbers = #tpu.dot_dimension_numbers<[1], [0], [0], [1], [0, 0, 1, 1], [], []>} : vector<16x64xbf16>, vector<64x192xbf16>, vector<16x192xf32> -> vector<16x192xf32>
    %56 = vector.extract_strided_slice %1 {offsets = [1, 0], sizes = [1, 192], strides = [1, 1]} : vector<24x192xf32> to vector<1x192xf32>
    %57 = vector.broadcast %56 : vector<1x192xf32> to vector<16x192xf32>
    %58 = arith.addf %55, %57 : vector<16x192xf32>
    %59 = vector.extract_strided_slice %58 {offsets = [0, 0], sizes = [16, 64], strides = [1, 1]} : vector<16x192xf32> to vector<16x64xf32>
    %60 = vector.extract_strided_slice %58 {offsets = [0, 64], sizes = [16, 64], strides = [1, 1]} : vector<16x192xf32> to vector<16x64xf32>
    %61 = vector.extract_strided_slice %58 {offsets = [0, 128], sizes = [16, 64], strides = [1, 1]} : vector<16x192xf32> to vector<16x64xf32>
    %cst_16 = arith.constant 0.000000e+00 : f32
    %62 = vector.broadcast %cst_16 : f32 to vector<16x64xf32>
    %63 = vector.broadcast %16 : vector<1x64xf32> to vector<16x64xf32>
    %64 = arith.mulf %59, %63 : vector<16x64xf32>
    %cst_17 = arith.constant dense<0.000000e+00> : vector<16x16xf32>
    %65 = tpu.matmul %64, %60, %cst_17 {dimension_numbers = #tpu.dot_dimension_numbers<[1], [1], [0], [0], [0, 0, 1, 0], [], []>} : vector<16x64xf32>, vector<16x64xf32>, vector<16x16xf32> -> vector<16x16xf32>
    %cst_18 = arith.constant 2.500000e-01 : f32
    %66 = vector.broadcast %cst_18 : f32 to vector<16x16xf32>
    %67 = arith.mulf %65, %66 : vector<16x16xf32>
    %cst_19 = arith.constant -1.000000e+30 : f32
    %68 = vector.broadcast %cst_19 : f32 to vector<16x16xf32>
    %69 = arith.select %8, %67, %68 : vector<16x16xi1>, vector<16x16xf32>
    %cst_20 = arith.constant dense<0xFF800000> : vector<16xf32>
    %70 = vector.multi_reduction <maximumf>, %69, %cst_20 [1] : vector<16x16xf32> to vector<16xf32>
    %71 = vector.shape_cast %70 : vector<16xf32> to vector<16x1xf32>
    %72 = vector.broadcast %71 : vector<16x1xf32> to vector<16x16xf32>
    %73 = arith.subf %69, %72 : vector<16x16xf32>
    %74 = math.exp %73 : vector<16x16xf32>
    %cst_21 = arith.constant dense<0.000000e+00> : vector<16xf32>
    %75 = vector.multi_reduction <add>, %74, %cst_21 [1] : vector<16x16xf32> to vector<16xf32>
    %76 = vector.shape_cast %75 : vector<16xf32> to vector<16x1xf32>
    %77 = vector.broadcast %76 : vector<16x1xf32> to vector<16x16xf32>
    %78 = arith.divf %74, %77 : vector<16x16xf32>
    %79 = vector.broadcast %16 : vector<1x64xf32> to vector<16x64xf32>
    %80 = arith.mulf %61, %79 : vector<16x64xf32>
    %cst_22 = arith.constant dense<0.000000e+00> : vector<16x64xf32>
    %81 = tpu.matmul %78, %80, %cst_22 {dimension_numbers = #tpu.dot_dimension_numbers<[1], [0], [0], [1], [0, 0, 1, 1], [], []>} : vector<16x16xf32>, vector<16x64xf32>, vector<16x64xf32> -> vector<16x64xf32>
    %82 = arith.addf %62, %81 : vector<16x64xf32>
    %83 = vector.broadcast %23 : vector<1x64xf32> to vector<16x64xf32>
    %84 = arith.mulf %59, %83 : vector<16x64xf32>
    %cst_23 = arith.constant dense<0.000000e+00> : vector<16x16xf32>
    %85 = tpu.matmul %84, %60, %cst_23 {dimension_numbers = #tpu.dot_dimension_numbers<[1], [1], [0], [0], [0, 0, 1, 0], [], []>} : vector<16x64xf32>, vector<16x64xf32>, vector<16x16xf32> -> vector<16x16xf32>
    %cst_24 = arith.constant 2.500000e-01 : f32
    %86 = vector.broadcast %cst_24 : f32 to vector<16x16xf32>
    %87 = arith.mulf %85, %86 : vector<16x16xf32>
    %cst_25 = arith.constant -1.000000e+30 : f32
    %88 = vector.broadcast %cst_25 : f32 to vector<16x16xf32>
    %89 = arith.select %8, %87, %88 : vector<16x16xi1>, vector<16x16xf32>
    %cst_26 = arith.constant dense<0xFF800000> : vector<16xf32>
    %90 = vector.multi_reduction <maximumf>, %89, %cst_26 [1] : vector<16x16xf32> to vector<16xf32>
    %91 = vector.shape_cast %90 : vector<16xf32> to vector<16x1xf32>
    %92 = vector.broadcast %91 : vector<16x1xf32> to vector<16x16xf32>
    %93 = arith.subf %89, %92 : vector<16x16xf32>
    %94 = math.exp %93 : vector<16x16xf32>
    %cst_27 = arith.constant dense<0.000000e+00> : vector<16xf32>
    %95 = vector.multi_reduction <add>, %94, %cst_27 [1] : vector<16x16xf32> to vector<16xf32>
    %96 = vector.shape_cast %95 : vector<16xf32> to vector<16x1xf32>
    %97 = vector.broadcast %96 : vector<16x1xf32> to vector<16x16xf32>
    %98 = arith.divf %94, %97 : vector<16x16xf32>
    %99 = vector.broadcast %23 : vector<1x64xf32> to vector<16x64xf32>
    %100 = arith.mulf %61, %99 : vector<16x64xf32>
    %cst_28 = arith.constant dense<0.000000e+00> : vector<16x64xf32>
    %101 = tpu.matmul %98, %100, %cst_28 {dimension_numbers = #tpu.dot_dimension_numbers<[1], [0], [0], [1], [0, 0, 1, 1], [], []>} : vector<16x16xf32>, vector<16x64xf32>, vector<16x64xf32> -> vector<16x64xf32>
    %102 = arith.addf %82, %101 : vector<16x64xf32>
    %103 = vector.broadcast %30 : vector<1x64xf32> to vector<16x64xf32>
    %104 = arith.mulf %59, %103 : vector<16x64xf32>
    %cst_29 = arith.constant dense<0.000000e+00> : vector<16x16xf32>
    %105 = tpu.matmul %104, %60, %cst_29 {dimension_numbers = #tpu.dot_dimension_numbers<[1], [1], [0], [0], [0, 0, 1, 0], [], []>} : vector<16x64xf32>, vector<16x64xf32>, vector<16x16xf32> -> vector<16x16xf32>
    %cst_30 = arith.constant 2.500000e-01 : f32
    %106 = vector.broadcast %cst_30 : f32 to vector<16x16xf32>
    %107 = arith.mulf %105, %106 : vector<16x16xf32>
    %cst_31 = arith.constant -1.000000e+30 : f32
    %108 = vector.broadcast %cst_31 : f32 to vector<16x16xf32>
    %109 = arith.select %8, %107, %108 : vector<16x16xi1>, vector<16x16xf32>
    %cst_32 = arith.constant dense<0xFF800000> : vector<16xf32>
    %110 = vector.multi_reduction <maximumf>, %109, %cst_32 [1] : vector<16x16xf32> to vector<16xf32>
    %111 = vector.shape_cast %110 : vector<16xf32> to vector<16x1xf32>
    %112 = vector.broadcast %111 : vector<16x1xf32> to vector<16x16xf32>
    %113 = arith.subf %109, %112 : vector<16x16xf32>
    %114 = math.exp %113 : vector<16x16xf32>
    %cst_33 = arith.constant dense<0.000000e+00> : vector<16xf32>
    %115 = vector.multi_reduction <add>, %114, %cst_33 [1] : vector<16x16xf32> to vector<16xf32>
    %116 = vector.shape_cast %115 : vector<16xf32> to vector<16x1xf32>
    %117 = vector.broadcast %116 : vector<16x1xf32> to vector<16x16xf32>
    %118 = arith.divf %114, %117 : vector<16x16xf32>
    %119 = vector.broadcast %30 : vector<1x64xf32> to vector<16x64xf32>
    %120 = arith.mulf %61, %119 : vector<16x64xf32>
    %cst_34 = arith.constant dense<0.000000e+00> : vector<16x64xf32>
    %121 = tpu.matmul %118, %120, %cst_34 {dimension_numbers = #tpu.dot_dimension_numbers<[1], [0], [0], [1], [0, 0, 1, 1], [], []>} : vector<16x16xf32>, vector<16x64xf32>, vector<16x64xf32> -> vector<16x64xf32>
    %122 = arith.addf %102, %121 : vector<16x64xf32>
    %123 = vector.broadcast %37 : vector<1x64xf32> to vector<16x64xf32>
    %124 = arith.mulf %59, %123 : vector<16x64xf32>
    %cst_35 = arith.constant dense<0.000000e+00> : vector<16x16xf32>
    %125 = tpu.matmul %124, %60, %cst_35 {dimension_numbers = #tpu.dot_dimension_numbers<[1], [1], [0], [0], [0, 0, 1, 0], [], []>} : vector<16x64xf32>, vector<16x64xf32>, vector<16x16xf32> -> vector<16x16xf32>
    %cst_36 = arith.constant 2.500000e-01 : f32
    %126 = vector.broadcast %cst_36 : f32 to vector<16x16xf32>
    %127 = arith.mulf %125, %126 : vector<16x16xf32>
    %cst_37 = arith.constant -1.000000e+30 : f32
    %128 = vector.broadcast %cst_37 : f32 to vector<16x16xf32>
    %129 = arith.select %8, %127, %128 : vector<16x16xi1>, vector<16x16xf32>
    %cst_38 = arith.constant dense<0xFF800000> : vector<16xf32>
    %130 = vector.multi_reduction <maximumf>, %129, %cst_38 [1] : vector<16x16xf32> to vector<16xf32>
    %131 = vector.shape_cast %130 : vector<16xf32> to vector<16x1xf32>
    %132 = vector.broadcast %131 : vector<16x1xf32> to vector<16x16xf32>
    %133 = arith.subf %129, %132 : vector<16x16xf32>
    %134 = math.exp %133 : vector<16x16xf32>
    %cst_39 = arith.constant dense<0.000000e+00> : vector<16xf32>
    %135 = vector.multi_reduction <add>, %134, %cst_39 [1] : vector<16x16xf32> to vector<16xf32>
    %136 = vector.shape_cast %135 : vector<16xf32> to vector<16x1xf32>
    %137 = vector.broadcast %136 : vector<16x1xf32> to vector<16x16xf32>
    %138 = arith.divf %134, %137 : vector<16x16xf32>
    %139 = vector.broadcast %37 : vector<1x64xf32> to vector<16x64xf32>
    %140 = arith.mulf %61, %139 : vector<16x64xf32>
    %cst_40 = arith.constant dense<0.000000e+00> : vector<16x64xf32>
    %141 = tpu.matmul %138, %140, %cst_40 {dimension_numbers = #tpu.dot_dimension_numbers<[1], [0], [0], [1], [0, 0, 1, 1], [], []>} : vector<16x16xf32>, vector<16x64xf32>, vector<16x64xf32> -> vector<16x64xf32>
    %142 = arith.addf %122, %141 : vector<16x64xf32>
    %143 = arith.truncf %142 : vector<16x64xf32> to vector<16x64xbf16>
    %cst_41 = arith.constant dense<0.000000e+00> : vector<16x128xf32>
    %144 = tpu.matmul %143, %44, %cst_41 {dimension_numbers = #tpu.dot_dimension_numbers<[1], [0], [0], [1], [0, 0, 1, 1], [], []>} : vector<16x64xbf16>, vector<64x128xbf16>, vector<16x128xf32> -> vector<16x128xf32>
    %145 = vector.extract_strided_slice %144 {offsets = [0, 0], sizes = [16, 64], strides = [1, 1]} : vector<16x128xf32> to vector<16x64xf32>
    %146 = vector.broadcast %46 : vector<1x64xf32> to vector<16x64xf32>
    %147 = arith.addf %145, %146 : vector<16x64xf32>
    %148 = arith.addf %43, %147 : vector<16x64xf32>
    %cst_42 = arith.constant dense<0.000000e+00> : vector<16xf32>
    %149 = vector.multi_reduction <add>, %148, %cst_42 [1] : vector<16x64xf32> to vector<16xf32>
    %150 = vector.shape_cast %149 : vector<16xf32> to vector<16x1xf32>
    %cst_43 = arith.constant 6.400000e+01 : f32
    %151 = vector.broadcast %cst_43 : f32 to vector<16x1xf32>
    %152 = arith.divf %150, %151 : vector<16x1xf32>
    %153 = vector.broadcast %152 : vector<16x1xf32> to vector<16x64xf32>
    %154 = arith.subf %148, %153 : vector<16x64xf32>
    %155 = arith.mulf %154, %154 : vector<16x64xf32>
    %cst_44 = arith.constant dense<0.000000e+00> : vector<16xf32>
    %156 = vector.multi_reduction <add>, %155, %cst_44 [1] : vector<16x64xf32> to vector<16xf32>
    %157 = vector.shape_cast %156 : vector<16xf32> to vector<16x1xf32>
    %cst_45 = arith.constant 6.400000e+01 : f32
    %158 = vector.broadcast %cst_45 : f32 to vector<16x1xf32>
    %159 = arith.divf %157, %158 : vector<16x1xf32>
    %160 = vector.broadcast %152 : vector<16x1xf32> to vector<16x64xf32>
    %161 = arith.subf %148, %160 : vector<16x64xf32>
    %cst_46 = arith.constant 9.99999974E-6 : f32
    %162 = vector.broadcast %cst_46 : f32 to vector<16x1xf32>
    %163 = arith.addf %159, %162 : vector<16x1xf32>
    %164 = math.rsqrt %163 : vector<16x1xf32>
    %165 = vector.broadcast %164 : vector<16x1xf32> to vector<16x64xf32>
    %166 = arith.mulf %161, %165 : vector<16x64xf32>
    %167 = vector.broadcast %47 : vector<1x64xf32> to vector<16x64xf32>
    %168 = arith.mulf %166, %167 : vector<16x64xf32>
    %169 = vector.broadcast %48 : vector<1x64xf32> to vector<16x64xf32>
    %170 = arith.addf %168, %169 : vector<16x64xf32>
    %171 = arith.truncf %170 : vector<16x64xf32> to vector<16x64xbf16>
    %c0_47 = arith.constant 0 : index
    %c0_48 = arith.constant 0 : index
    %172 = vector.load %arg3[%c0_47, %c0_48] : memref<128x2048xbf16, #tpu.memory_space<vmem>>, vector<64x2048xbf16>
    %cst_49 = arith.constant dense<0.000000e+00> : vector<16x2048xf32>
    %173 = tpu.matmul %171, %172, %cst_49 {dimension_numbers = #tpu.dot_dimension_numbers<[1], [0], [0], [1], [0, 0, 1, 1], [], []>} : vector<16x64xbf16>, vector<64x2048xbf16>, vector<16x2048xf32> -> vector<16x2048xf32>
    %174 = vector.broadcast %52 : vector<1x2048xf32> to vector<16x2048xf32>
    %175 = arith.addf %173, %174 : vector<16x2048xf32>
    %cst_50 = arith.constant 0.000000e+00 : f32
    %176 = vector.broadcast %cst_50 : f32 to vector<16x2048xf32>
    %177 = arith.maximumf %175, %176 : vector<16x2048xf32>
    %178 = arith.truncf %177 : vector<16x2048xf32> to vector<16x2048xbf16>
    %cst_51 = arith.constant dense<0.000000e+00> : vector<16x128xf32>
    %179 = tpu.matmul %178, %45, %cst_51 {dimension_numbers = #tpu.dot_dimension_numbers<[1], [0], [0], [1], [0, 0, 1, 1], [], []>} : vector<16x2048xbf16>, vector<2048x128xbf16>, vector<16x128xf32> -> vector<16x128xf32>
    %180 = vector.extract_strided_slice %179 {offsets = [0, 0], sizes = [16, 64], strides = [1, 1]} : vector<16x128xf32> to vector<16x64xf32>
    %181 = vector.broadcast %49 : vector<1x64xf32> to vector<16x64xf32>
    %182 = arith.addf %180, %181 : vector<16x64xf32>
    %183 = arith.addf %170, %182 : vector<16x64xf32>
    %cst_52 = arith.constant dense<0.000000e+00> : vector<16xf32>
    %184 = vector.multi_reduction <add>, %183, %cst_52 [1] : vector<16x64xf32> to vector<16xf32>
    %185 = vector.shape_cast %184 : vector<16xf32> to vector<16x1xf32>
    %cst_53 = arith.constant 6.400000e+01 : f32
    %186 = vector.broadcast %cst_53 : f32 to vector<16x1xf32>
    %187 = arith.divf %185, %186 : vector<16x1xf32>
    %188 = vector.broadcast %187 : vector<16x1xf32> to vector<16x64xf32>
    %189 = arith.subf %183, %188 : vector<16x64xf32>
    %190 = arith.mulf %189, %189 : vector<16x64xf32>
    %cst_54 = arith.constant dense<0.000000e+00> : vector<16xf32>
    %191 = vector.multi_reduction <add>, %190, %cst_54 [1] : vector<16x64xf32> to vector<16xf32>
    %192 = vector.shape_cast %191 : vector<16xf32> to vector<16x1xf32>
    %cst_55 = arith.constant 6.400000e+01 : f32
    %193 = vector.broadcast %cst_55 : f32 to vector<16x1xf32>
    %194 = arith.divf %192, %193 : vector<16x1xf32>
    %195 = vector.broadcast %187 : vector<16x1xf32> to vector<16x64xf32>
    %196 = arith.subf %183, %195 : vector<16x64xf32>
    %cst_56 = arith.constant 9.99999974E-6 : f32
    %197 = vector.broadcast %cst_56 : f32 to vector<16x1xf32>
    %198 = arith.addf %194, %197 : vector<16x1xf32>
    %199 = math.rsqrt %198 : vector<16x1xf32>
    %200 = vector.broadcast %199 : vector<16x1xf32> to vector<16x64xf32>
    %201 = arith.mulf %196, %200 : vector<16x64xf32>
    %202 = vector.broadcast %50 : vector<1x64xf32> to vector<16x64xf32>
    %203 = arith.mulf %201, %202 : vector<16x64xf32>
    %204 = vector.broadcast %51 : vector<1x64xf32> to vector<16x64xf32>
    %205 = arith.addf %203, %204 : vector<16x64xf32>
    %206 = vector.extract_strided_slice %1 {offsets = [9, 0], sizes = [1, 64], strides = [1, 1]} : vector<24x192xf32> to vector<1x64xf32>
    %207 = vector.extract_strided_slice %1 {offsets = [10, 0], sizes = [1, 64], strides = [1, 1]} : vector<24x192xf32> to vector<1x64xf32>
    %208 = vector.extract_strided_slice %1 {offsets = [11, 0], sizes = [1, 64], strides = [1, 1]} : vector<24x192xf32> to vector<1x64xf32>
    %209 = vector.extract_strided_slice %1 {offsets = [12, 0], sizes = [1, 64], strides = [1, 1]} : vector<24x192xf32> to vector<1x64xf32>
    %210 = vector.extract_strided_slice %1 {offsets = [13, 0], sizes = [1, 64], strides = [1, 1]} : vector<24x192xf32> to vector<1x64xf32>
    %211 = vector.extract_strided_slice %1 {offsets = [14, 0], sizes = [1, 64], strides = [1, 1]} : vector<24x192xf32> to vector<1x64xf32>
    %c1 = arith.constant 1 : index
    %c0_57 = arith.constant 0 : index
    %212 = vector.load %arg5[%c1, %c0_57] : memref<2x2048xf32, #tpu.memory_space<vmem>>, vector<1x2048xf32>
    %213 = arith.truncf %205 : vector<16x64xf32> to vector<16x64xbf16>
    %c80 = arith.constant 80 : index
    %c0_58 = arith.constant 0 : index
    %214 = vector.load %arg1[%c80, %c0_58] : memref<144x192xbf16, #tpu.memory_space<vmem>>, vector<64x192xbf16>
    %cst_59 = arith.constant dense<0.000000e+00> : vector<16x192xf32>
    %215 = tpu.matmul %213, %214, %cst_59 {dimension_numbers = #tpu.dot_dimension_numbers<[1], [0], [0], [1], [0, 0, 1, 1], [], []>} : vector<16x64xbf16>, vector<64x192xbf16>, vector<16x192xf32> -> vector<16x192xf32>
    %216 = vector.extract_strided_slice %1 {offsets = [8, 0], sizes = [1, 192], strides = [1, 1]} : vector<24x192xf32> to vector<1x192xf32>
    %217 = vector.broadcast %216 : vector<1x192xf32> to vector<16x192xf32>
    %218 = arith.addf %215, %217 : vector<16x192xf32>
    %219 = vector.extract_strided_slice %218 {offsets = [0, 0], sizes = [16, 64], strides = [1, 1]} : vector<16x192xf32> to vector<16x64xf32>
    %220 = vector.extract_strided_slice %218 {offsets = [0, 64], sizes = [16, 64], strides = [1, 1]} : vector<16x192xf32> to vector<16x64xf32>
    %221 = vector.extract_strided_slice %218 {offsets = [0, 128], sizes = [16, 64], strides = [1, 1]} : vector<16x192xf32> to vector<16x64xf32>
    %cst_60 = arith.constant 0.000000e+00 : f32
    %222 = vector.broadcast %cst_60 : f32 to vector<16x64xf32>
    %223 = vector.broadcast %16 : vector<1x64xf32> to vector<16x64xf32>
    %224 = arith.mulf %219, %223 : vector<16x64xf32>
    %cst_61 = arith.constant dense<0.000000e+00> : vector<16x16xf32>
    %225 = tpu.matmul %224, %220, %cst_61 {dimension_numbers = #tpu.dot_dimension_numbers<[1], [1], [0], [0], [0, 0, 1, 0], [], []>} : vector<16x64xf32>, vector<16x64xf32>, vector<16x16xf32> -> vector<16x16xf32>
    %cst_62 = arith.constant 2.500000e-01 : f32
    %226 = vector.broadcast %cst_62 : f32 to vector<16x16xf32>
    %227 = arith.mulf %225, %226 : vector<16x16xf32>
    %cst_63 = arith.constant -1.000000e+30 : f32
    %228 = vector.broadcast %cst_63 : f32 to vector<16x16xf32>
    %229 = arith.select %8, %227, %228 : vector<16x16xi1>, vector<16x16xf32>
    %cst_64 = arith.constant dense<0xFF800000> : vector<16xf32>
    %230 = vector.multi_reduction <maximumf>, %229, %cst_64 [1] : vector<16x16xf32> to vector<16xf32>
    %231 = vector.shape_cast %230 : vector<16xf32> to vector<16x1xf32>
    %232 = vector.broadcast %231 : vector<16x1xf32> to vector<16x16xf32>
    %233 = arith.subf %229, %232 : vector<16x16xf32>
    %234 = math.exp %233 : vector<16x16xf32>
    %cst_65 = arith.constant dense<0.000000e+00> : vector<16xf32>
    %235 = vector.multi_reduction <add>, %234, %cst_65 [1] : vector<16x16xf32> to vector<16xf32>
    %236 = vector.shape_cast %235 : vector<16xf32> to vector<16x1xf32>
    %237 = vector.broadcast %236 : vector<16x1xf32> to vector<16x16xf32>
    %238 = arith.divf %234, %237 : vector<16x16xf32>
    %239 = vector.broadcast %16 : vector<1x64xf32> to vector<16x64xf32>
    %240 = arith.mulf %221, %239 : vector<16x64xf32>
    %cst_66 = arith.constant dense<0.000000e+00> : vector<16x64xf32>
    %241 = tpu.matmul %238, %240, %cst_66 {dimension_numbers = #tpu.dot_dimension_numbers<[1], [0], [0], [1], [0, 0, 1, 1], [], []>} : vector<16x16xf32>, vector<16x64xf32>, vector<16x64xf32> -> vector<16x64xf32>
    %242 = arith.addf %222, %241 : vector<16x64xf32>
    %243 = vector.broadcast %23 : vector<1x64xf32> to vector<16x64xf32>
    %244 = arith.mulf %219, %243 : vector<16x64xf32>
    %cst_67 = arith.constant dense<0.000000e+00> : vector<16x16xf32>
    %245 = tpu.matmul %244, %220, %cst_67 {dimension_numbers = #tpu.dot_dimension_numbers<[1], [1], [0], [0], [0, 0, 1, 0], [], []>} : vector<16x64xf32>, vector<16x64xf32>, vector<16x16xf32> -> vector<16x16xf32>
    %cst_68 = arith.constant 2.500000e-01 : f32
    %246 = vector.broadcast %cst_68 : f32 to vector<16x16xf32>
    %247 = arith.mulf %245, %246 : vector<16x16xf32>
    %cst_69 = arith.constant -1.000000e+30 : f32
    %248 = vector.broadcast %cst_69 : f32 to vector<16x16xf32>
    %249 = arith.select %8, %247, %248 : vector<16x16xi1>, vector<16x16xf32>
    %cst_70 = arith.constant dense<0xFF800000> : vector<16xf32>
    %250 = vector.multi_reduction <maximumf>, %249, %cst_70 [1] : vector<16x16xf32> to vector<16xf32>
    %251 = vector.shape_cast %250 : vector<16xf32> to vector<16x1xf32>
    %252 = vector.broadcast %251 : vector<16x1xf32> to vector<16x16xf32>
    %253 = arith.subf %249, %252 : vector<16x16xf32>
    %254 = math.exp %253 : vector<16x16xf32>
    %cst_71 = arith.constant dense<0.000000e+00> : vector<16xf32>
    %255 = vector.multi_reduction <add>, %254, %cst_71 [1] : vector<16x16xf32> to vector<16xf32>
    %256 = vector.shape_cast %255 : vector<16xf32> to vector<16x1xf32>
    %257 = vector.broadcast %256 : vector<16x1xf32> to vector<16x16xf32>
    %258 = arith.divf %254, %257 : vector<16x16xf32>
    %259 = vector.broadcast %23 : vector<1x64xf32> to vector<16x64xf32>
    %260 = arith.mulf %221, %259 : vector<16x64xf32>
    %cst_72 = arith.constant dense<0.000000e+00> : vector<16x64xf32>
    %261 = tpu.matmul %258, %260, %cst_72 {dimension_numbers = #tpu.dot_dimension_numbers<[1], [0], [0], [1], [0, 0, 1, 1], [], []>} : vector<16x16xf32>, vector<16x64xf32>, vector<16x64xf32> -> vector<16x64xf32>
    %262 = arith.addf %242, %261 : vector<16x64xf32>
    %263 = vector.broadcast %30 : vector<1x64xf32> to vector<16x64xf32>
    %264 = arith.mulf %219, %263 : vector<16x64xf32>
    %cst_73 = arith.constant dense<0.000000e+00> : vector<16x16xf32>
    %265 = tpu.matmul %264, %220, %cst_73 {dimension_numbers = #tpu.dot_dimension_numbers<[1], [1], [0], [0], [0, 0, 1, 0], [], []>} : vector<16x64xf32>, vector<16x64xf32>, vector<16x16xf32> -> vector<16x16xf32>
    %cst_74 = arith.constant 2.500000e-01 : f32
    %266 = vector.broadcast %cst_74 : f32 to vector<16x16xf32>
    %267 = arith.mulf %265, %266 : vector<16x16xf32>
    %cst_75 = arith.constant -1.000000e+30 : f32
    %268 = vector.broadcast %cst_75 : f32 to vector<16x16xf32>
    %269 = arith.select %8, %267, %268 : vector<16x16xi1>, vector<16x16xf32>
    %cst_76 = arith.constant dense<0xFF800000> : vector<16xf32>
    %270 = vector.multi_reduction <maximumf>, %269, %cst_76 [1] : vector<16x16xf32> to vector<16xf32>
    %271 = vector.shape_cast %270 : vector<16xf32> to vector<16x1xf32>
    %272 = vector.broadcast %271 : vector<16x1xf32> to vector<16x16xf32>
    %273 = arith.subf %269, %272 : vector<16x16xf32>
    %274 = math.exp %273 : vector<16x16xf32>
    %cst_77 = arith.constant dense<0.000000e+00> : vector<16xf32>
    %275 = vector.multi_reduction <add>, %274, %cst_77 [1] : vector<16x16xf32> to vector<16xf32>
    %276 = vector.shape_cast %275 : vector<16xf32> to vector<16x1xf32>
    %277 = vector.broadcast %276 : vector<16x1xf32> to vector<16x16xf32>
    %278 = arith.divf %274, %277 : vector<16x16xf32>
    %279 = vector.broadcast %30 : vector<1x64xf32> to vector<16x64xf32>
    %280 = arith.mulf %221, %279 : vector<16x64xf32>
    %cst_78 = arith.constant dense<0.000000e+00> : vector<16x64xf32>
    %281 = tpu.matmul %278, %280, %cst_78 {dimension_numbers = #tpu.dot_dimension_numbers<[1], [0], [0], [1], [0, 0, 1, 1], [], []>} : vector<16x16xf32>, vector<16x64xf32>, vector<16x64xf32> -> vector<16x64xf32>
    %282 = arith.addf %262, %281 : vector<16x64xf32>
    %283 = vector.broadcast %37 : vector<1x64xf32> to vector<16x64xf32>
    %284 = arith.mulf %219, %283 : vector<16x64xf32>
    %cst_79 = arith.constant dense<0.000000e+00> : vector<16x16xf32>
    %285 = tpu.matmul %284, %220, %cst_79 {dimension_numbers = #tpu.dot_dimension_numbers<[1], [1], [0], [0], [0, 0, 1, 0], [], []>} : vector<16x64xf32>, vector<16x64xf32>, vector<16x16xf32> -> vector<16x16xf32>
    %cst_80 = arith.constant 2.500000e-01 : f32
    %286 = vector.broadcast %cst_80 : f32 to vector<16x16xf32>
    %287 = arith.mulf %285, %286 : vector<16x16xf32>
    %cst_81 = arith.constant -1.000000e+30 : f32
    %288 = vector.broadcast %cst_81 : f32 to vector<16x16xf32>
    %289 = arith.select %8, %287, %288 : vector<16x16xi1>, vector<16x16xf32>
    %cst_82 = arith.constant dense<0xFF800000> : vector<16xf32>
    %290 = vector.multi_reduction <maximumf>, %289, %cst_82 [1] : vector<16x16xf32> to vector<16xf32>
    %291 = vector.shape_cast %290 : vector<16xf32> to vector<16x1xf32>
    %292 = vector.broadcast %291 : vector<16x1xf32> to vector<16x16xf32>
    %293 = arith.subf %289, %292 : vector<16x16xf32>
    %294 = math.exp %293 : vector<16x16xf32>
    %cst_83 = arith.constant dense<0.000000e+00> : vector<16xf32>
    %295 = vector.multi_reduction <add>, %294, %cst_83 [1] : vector<16x16xf32> to vector<16xf32>
    %296 = vector.shape_cast %295 : vector<16xf32> to vector<16x1xf32>
    %297 = vector.broadcast %296 : vector<16x1xf32> to vector<16x16xf32>
    %298 = arith.divf %294, %297 : vector<16x16xf32>
    %299 = vector.broadcast %37 : vector<1x64xf32> to vector<16x64xf32>
    %300 = arith.mulf %221, %299 : vector<16x64xf32>
    %cst_84 = arith.constant dense<0.000000e+00> : vector<16x64xf32>
    %301 = tpu.matmul %298, %300, %cst_84 {dimension_numbers = #tpu.dot_dimension_numbers<[1], [0], [0], [1], [0, 0, 1, 1], [], []>} : vector<16x16xf32>, vector<16x64xf32>, vector<16x64xf32> -> vector<16x64xf32>
    %302 = arith.addf %282, %301 : vector<16x64xf32>
    %303 = arith.truncf %302 : vector<16x64xf32> to vector<16x64xbf16>
    %cst_85 = arith.constant dense<0.000000e+00> : vector<16x128xf32>
    %304 = tpu.matmul %303, %44, %cst_85 {dimension_numbers = #tpu.dot_dimension_numbers<[1], [0], [0], [1], [0, 0, 1, 1], [], []>} : vector<16x64xbf16>, vector<64x128xbf16>, vector<16x128xf32> -> vector<16x128xf32>
    %305 = vector.extract_strided_slice %304 {offsets = [0, 64], sizes = [16, 64], strides = [1, 1]} : vector<16x128xf32> to vector<16x64xf32>
    %306 = vector.broadcast %206 : vector<1x64xf32> to vector<16x64xf32>
    %307 = arith.addf %305, %306 : vector<16x64xf32>
    %308 = arith.addf %205, %307 : vector<16x64xf32>
    %cst_86 = arith.constant dense<0.000000e+00> : vector<16xf32>
    %309 = vector.multi_reduction <add>, %308, %cst_86 [1] : vector<16x64xf32> to vector<16xf32>
    %310 = vector.shape_cast %309 : vector<16xf32> to vector<16x1xf32>
    %cst_87 = arith.constant 6.400000e+01 : f32
    %311 = vector.broadcast %cst_87 : f32 to vector<16x1xf32>
    %312 = arith.divf %310, %311 : vector<16x1xf32>
    %313 = vector.broadcast %312 : vector<16x1xf32> to vector<16x64xf32>
    %314 = arith.subf %308, %313 : vector<16x64xf32>
    %315 = arith.mulf %314, %314 : vector<16x64xf32>
    %cst_88 = arith.constant dense<0.000000e+00> : vector<16xf32>
    %316 = vector.multi_reduction <add>, %315, %cst_88 [1] : vector<16x64xf32> to vector<16xf32>
    %317 = vector.shape_cast %316 : vector<16xf32> to vector<16x1xf32>
    %cst_89 = arith.constant 6.400000e+01 : f32
    %318 = vector.broadcast %cst_89 : f32 to vector<16x1xf32>
    %319 = arith.divf %317, %318 : vector<16x1xf32>
    %320 = vector.broadcast %312 : vector<16x1xf32> to vector<16x64xf32>
    %321 = arith.subf %308, %320 : vector<16x64xf32>
    %cst_90 = arith.constant 9.99999974E-6 : f32
    %322 = vector.broadcast %cst_90 : f32 to vector<16x1xf32>
    %323 = arith.addf %319, %322 : vector<16x1xf32>
    %324 = math.rsqrt %323 : vector<16x1xf32>
    %325 = vector.broadcast %324 : vector<16x1xf32> to vector<16x64xf32>
    %326 = arith.mulf %321, %325 : vector<16x64xf32>
    %327 = vector.broadcast %207 : vector<1x64xf32> to vector<16x64xf32>
    %328 = arith.mulf %326, %327 : vector<16x64xf32>
    %329 = vector.broadcast %208 : vector<1x64xf32> to vector<16x64xf32>
    %330 = arith.addf %328, %329 : vector<16x64xf32>
    %331 = arith.truncf %330 : vector<16x64xf32> to vector<16x64xbf16>
    %c64_91 = arith.constant 64 : index
    %c0_92 = arith.constant 0 : index
    %332 = vector.load %arg3[%c64_91, %c0_92] : memref<128x2048xbf16, #tpu.memory_space<vmem>>, vector<64x2048xbf16>
    %cst_93 = arith.constant dense<0.000000e+00> : vector<16x2048xf32>
    %333 = tpu.matmul %331, %332, %cst_93 {dimension_numbers = #tpu.dot_dimension_numbers<[1], [0], [0], [1], [0, 0, 1, 1], [], []>} : vector<16x64xbf16>, vector<64x2048xbf16>, vector<16x2048xf32> -> vector<16x2048xf32>
    %334 = vector.broadcast %212 : vector<1x2048xf32> to vector<16x2048xf32>
    %335 = arith.addf %333, %334 : vector<16x2048xf32>
    %cst_94 = arith.constant 0.000000e+00 : f32
    %336 = vector.broadcast %cst_94 : f32 to vector<16x2048xf32>
    %337 = arith.maximumf %335, %336 : vector<16x2048xf32>
    %338 = arith.truncf %337 : vector<16x2048xf32> to vector<16x2048xbf16>
    %cst_95 = arith.constant dense<0.000000e+00> : vector<16x128xf32>
    %339 = tpu.matmul %338, %45, %cst_95 {dimension_numbers = #tpu.dot_dimension_numbers<[1], [0], [0], [1], [0, 0, 1, 1], [], []>} : vector<16x2048xbf16>, vector<2048x128xbf16>, vector<16x128xf32> -> vector<16x128xf32>
    %340 = vector.extract_strided_slice %339 {offsets = [0, 64], sizes = [16, 64], strides = [1, 1]} : vector<16x128xf32> to vector<16x64xf32>
    %341 = vector.broadcast %209 : vector<1x64xf32> to vector<16x64xf32>
    %342 = arith.addf %340, %341 : vector<16x64xf32>
    %343 = arith.addf %330, %342 : vector<16x64xf32>
    %cst_96 = arith.constant dense<0.000000e+00> : vector<16xf32>
    %344 = vector.multi_reduction <add>, %343, %cst_96 [1] : vector<16x64xf32> to vector<16xf32>
    %345 = vector.shape_cast %344 : vector<16xf32> to vector<16x1xf32>
    %cst_97 = arith.constant 6.400000e+01 : f32
    %346 = vector.broadcast %cst_97 : f32 to vector<16x1xf32>
    %347 = arith.divf %345, %346 : vector<16x1xf32>
    %348 = vector.broadcast %347 : vector<16x1xf32> to vector<16x64xf32>
    %349 = arith.subf %343, %348 : vector<16x64xf32>
    %350 = arith.mulf %349, %349 : vector<16x64xf32>
    %cst_98 = arith.constant dense<0.000000e+00> : vector<16xf32>
    %351 = vector.multi_reduction <add>, %350, %cst_98 [1] : vector<16x64xf32> to vector<16xf32>
    %352 = vector.shape_cast %351 : vector<16xf32> to vector<16x1xf32>
    %cst_99 = arith.constant 6.400000e+01 : f32
    %353 = vector.broadcast %cst_99 : f32 to vector<16x1xf32>
    %354 = arith.divf %352, %353 : vector<16x1xf32>
    %355 = vector.broadcast %347 : vector<16x1xf32> to vector<16x64xf32>
    %356 = arith.subf %343, %355 : vector<16x64xf32>
    %cst_100 = arith.constant 9.99999974E-6 : f32
    %357 = vector.broadcast %cst_100 : f32 to vector<16x1xf32>
    %358 = arith.addf %354, %357 : vector<16x1xf32>
    %359 = math.rsqrt %358 : vector<16x1xf32>
    %360 = vector.broadcast %359 : vector<16x1xf32> to vector<16x64xf32>
    %361 = arith.mulf %356, %360 : vector<16x64xf32>
    %362 = vector.broadcast %210 : vector<1x64xf32> to vector<16x64xf32>
    %363 = arith.mulf %361, %362 : vector<16x64xf32>
    %364 = vector.broadcast %211 : vector<1x64xf32> to vector<16x64xf32>
    %365 = arith.addf %363, %364 : vector<16x64xf32>
    %cst_101 = arith.constant 0.000000e+00 : f32
    %366 = vector.broadcast %cst_101 : f32 to vector<8x64xf32>
    %367 = vector.extract_strided_slice %365 {offsets = [0, 0], sizes = [8, 64], strides = [1, 1]} : vector<16x64xf32> to vector<8x64xf32>
    %368 = arith.addf %366, %367 : vector<8x64xf32>
    %369 = vector.extract_strided_slice %365 {offsets = [8, 0], sizes = [8, 64], strides = [1, 1]} : vector<16x64xf32> to vector<8x64xf32>
    %370 = arith.addf %368, %369 : vector<8x64xf32>
    %cst_102 = arith.constant 5.000000e-01 : f32
    %371 = vector.broadcast %cst_102 : f32 to vector<8x64xf32>
    %372 = arith.mulf %370, %371 : vector<8x64xf32>
    %373 = vector.extract_strided_slice %1 {offsets = [15, 0], sizes = [1, 64], strides = [1, 1]} : vector<24x192xf32> to vector<1x64xf32>
    %374 = vector.extract_strided_slice %1 {offsets = [16, 0], sizes = [1, 1], strides = [1, 1]} : vector<24x192xf32> to vector<1x1xf32>
    %375 = vector.broadcast %373 : vector<1x64xf32> to vector<8x64xf32>
    %376 = arith.mulf %372, %375 : vector<8x64xf32>
    %cst_103 = arith.constant dense<0.000000e+00> : vector<8xf32>
    %377 = vector.multi_reduction <add>, %376, %cst_103 [1] : vector<8x64xf32> to vector<8xf32>
    %378 = vector.shape_cast %377 : vector<8xf32> to vector<8x1xf32>
    %379 = vector.broadcast %374 : vector<1x1xf32> to vector<8x1xf32>
    %380 = arith.addf %378, %379 : vector<8x1xf32>
    %cst_104 = arith.constant 0.000000e+00 : f32
    %381 = vector.broadcast %cst_104 : f32 to vector<8x1xf32>
    %382 = arith.subf %381, %380 : vector<8x1xf32>
    %383 = math.exp %382 : vector<8x1xf32>
    %cst_105 = arith.constant 1.000000e+00 : f32
    %384 = vector.broadcast %cst_105 : f32 to vector<8x1xf32>
    %385 = arith.addf %384, %383 : vector<8x1xf32>
    %cst_106 = arith.constant 1.000000e+00 : f32
    %386 = vector.broadcast %cst_106 : f32 to vector<8x1xf32>
    %387 = arith.divf %386, %385 : vector<8x1xf32>
    %c0_107 = arith.constant 0 : index
    %c0_108 = arith.constant 0 : index
    %388 = vector.load %arg6[%c0_107, %c0_108] : memref<8x1xf32, #tpu.memory_space<vmem>>, vector<8x1xf32>
    tpu.vector_store %arg6[%c0_107, %c0_108], %387 {strides = array<i32>} : memref<8x1xf32, #tpu.memory_space<vmem>>, vector<8x1xf32>,
    return
  }
}

</mosaic_0001>

<llo_original>
// kernel: transformer_forward.1
$region0: #{transformer_forward.1}
  #allocation0 [shape = 'u32[]', space=smem, size = 0x4, offset = 0x4, fixed_abs, tag = 'smem constant byte address 0x4 - core index']
  #allocation1 [shape = 'u32[144,128]{1,0:T(1,128)}', space=vmem, size = 0x12000, scoped, tag = 'internal scratch']
  %s0 = inlined_call_operand.vmem [shape: f32[16,16], index: 0, kind: input, shape index: {}]
  %s1 = inlined_call_operand.hbm [shape: bf16[144,192], index: 1, kind: input, shape index: {}]
  %s2 = inlined_call_operand.hbm [shape: bf16[2112,128], index: 2, kind: input, shape index: {}]
  %s3 = inlined_call_operand.hbm [shape: bf16[128,2048], index: 3, kind: input, shape index: {}]
  %s4 = inlined_call_operand.vmem [shape: f32[24,192], index: 4, kind: input, shape index: {}]
  %s5 = inlined_call_operand.vmem [shape: f32[2,2048], index: 5, kind: input, shape index: {}]
  %s6 = inlined_call_operand.vmem [shape: f32[8,1], index: 6, kind: output, shape index: {}]
  %s7 = sld [smem:[#allocation0]]
  $region46: #{transformer_forward.1} parent=0
    _
  %s9 = ssub.s32 1, %s7
  %s10 = scalar_select 0, %s9, %s7
  $region1: #{transformer_forward.1} parent=0
    #allocation2 [shape = 'u8[73728]{0}', space=vmem, size = 0x12000, scoped, tag = 'input window, operand 1, single buffered']
    #allocation3 [shape = 's32[1]{0}', space=sflag, size = 0x4, scoped, tag = 'scoped memory for transformer_forward.1']
    #allocation4 [shape = 'u8[540672]{0}', space=vmem, size = 0x84000, scoped, tag = 'input window, operand 2, single buffered']
    #allocation5 [shape = 's32[1]{0}', space=sflag, size = 0x4, scoped, tag = 'scoped memory for transformer_forward.1']
    #allocation6 [shape = 'u8[524288]{0}', space=vmem, size = 0x80000, scoped, tag = 'input window, operand 3, single buffered']
    %11 = vsyncpa [#allocation3], 0
    %12 = vsyncpa [#allocation5], 0
    // Predicated region
    $region2: #{transformer_forward.1} parent=1 // pred_check
      _
    $region3: #{transformer_forward.1} parent=1 // pred_check_branch
      %14 = sbr.rel (0) target = $region5
    $region4: #{transformer_forward.1} parent=1 // pred_region
      _
    $region5: #{transformer_forward.1} parent=1 // pred_fallthru
      _
    // Predicated region
    $region6: #{transformer_forward.1} parent=1 // pred_check
      _
    $region7: #{transformer_forward.1} parent=1 // pred_check_branch
      %16 = sbr.rel (0) target = $region9
    $region8: #{transformer_forward.1} parent=1 // pred_region
      %s18 = ssub.s32 2304, 2304
      %19 = vsyncadd [#allocation3], %s18
      %s20 = sshll.u32 [#allocation2], 4
      %s21 = int_to_ptr.vmem [resolvable:$true] %s20
      %26 = dma.hbm_to_vmem [thread:$0]  %s1, 2304, %s21, [#allocation3], 128, 128, 8
    $region9: #{transformer_forward.1} parent=1 // pred_fallthru
      _
    // Predicated region
    $region10: #{transformer_forward.1} parent=1 // pred_check
      _
    $region11: #{transformer_forward.1} parent=1 // pred_check_branch
      %28 = sbr.rel (0) target = $region13
    $region12: #{transformer_forward.1} parent=1 // pred_region
      %s30 = ssub.s32 16896, 16896
      %31 = vsyncadd [#allocation5], %s30
      %s32 = sshll.u32 [#allocation4], 4
      %s33 = int_to_ptr.vmem [resolvable:$true] %s32
      %38 = dma.hbm_to_vmem [thread:$0]  %s2, 16896, %s33, [#allocation5], 64, 64, 4
    $region13: #{transformer_forward.1} parent=1 // pred_fallthru
      _
    // Predicated region
    $region14: #{transformer_forward.1} parent=1 // pred_check
      _
    $region15: #{transformer_forward.1} parent=1 // pred_check_branch
      %40 = sbr.rel (0) target = $region17
    $region16: #{transformer_forward.1} parent=1 // pred_region
      %s42 = ssub.s32 16384, 16384
      %43 = vsyncadd [#allocation5], %s42
      %s44 = sshll.u32 [#allocation6], 4
      %s45 = int_to_ptr.vmem [resolvable:$true] %s44
      %50 = dma.hbm_to_vmem [thread:$0]  %s3, 16384, %s45, [#allocation5], 1024, 1024, 64
    $region17: #{transformer_forward.1} parent=1 // pred_fallthru
      _
    // Predicated region
    $region18: #{transformer_forward.1} parent=1 // pred_check
      _
    $region19: #{transformer_forward.1} parent=1 // pred_check_branch
      %52 = sbr.rel (0) target = $region21
    $region20: #{transformer_forward.1} parent=1 // pred_region
      _
    $region21: #{transformer_forward.1} parent=1 // pred_fallthru
      _
    // Predicated region
    $region22: #{transformer_forward.1} parent=1 // pred_check
      _
    $region23: #{transformer_forward.1} parent=1 // pred_check_branch
      %54 = sbr.rel (0) target = $region25
    $region24: #{transformer_forward.1} parent=1 // pred_region
      _
    $region25: #{transformer_forward.1} parent=1 // pred_fallthru
      _
    // Predicated region
    $region26: #{transformer_forward.1} parent=1 // pred_check
      _
    $region27: #{transformer_forward.1} parent=1 // pred_check_branch
      %56 = sbr.rel (0) target = $region29
    $region28: #{transformer_forward.1} parent=1 // pred_region
      %57 = dma.done [#allocation3], 2304
    $region29: #{transformer_forward.1} parent=1 // pred_fallthru
      _
    // Predicated region
    $region30: #{transformer_forward.1} parent=1 // pred_check
      _
    $region31: #{transformer_forward.1} parent=1 // pred_check_branch
      %59 = sbr.rel (0) target = $region33
    $region32: #{transformer_forward.1} parent=1 // pred_region
      %60 = dma.done [#allocation5], 16896
    $region33: #{transformer_forward.1} parent=1 // pred_fallthru
      _
    // Predicated region
    $region34: #{transformer_forward.1} parent=1 // pred_check
      _
    $region35: #{transformer_forward.1} parent=1 // pred_check_branch
      %62 = sbr.rel (0) target = $region37
    $region36: #{transformer_forward.1} parent=1 // pred_region
      %63 = dma.done [#allocation5], 16384
    $region37: #{transformer_forward.1} parent=1 // pred_fallthru
      _
    %v65 = vld [vmem:[%s0] sm:$0xff]
    %v66 = vld [vmem:[%s0 + $0x8] sm:$0xff]
    %v67 = vld [vmem:[%s4] sm:$0xff]
    %v68 = vld [vmem:[%s4 + $0x8] sm:$0xff]
    %v69 = vld [vmem:[%s4 + $0x10] sm:$0xff]
    %v70 = vld [vmem:[%s4 + $0x18] sm:$0xff]
    %v71 = vld [vmem:[%s4 + $0x20] sm:$0xff]
    %v72 = vlaneseq
    %v73 = vshrl.u32 %v72, 7
    %v74 = vadd.s32 %v73, 8
    %v75 = vlaneseq
    %v76 = vand.u32 %v75, 127
    %v77 = vshra.s32 %v73, 3
    %v78 = vshra.s32 %v74, 3
    %v79 = vshra.s32 %v76, 3
    %vm80 = vcmp.eq.s32.totalorder %v77, %v79
    %vm81 = vcmp.eq.s32.totalorder %v78, %v79
    %vm82 = vcmp.ge.s32.totalorder %v76, 0
    %vm83 = vcmp.lt.s32.totalorder %v76, 16
    %vm84 = vmand %vm82, %vm83
    %v85 = vsel %vm84, 1, 0
    %v86 = vcvt.s32.f32 %v85
    %vm87 = vcmp.ge.s32.totalorder %v76, 16
    %vm88 = vcmp.lt.s32.totalorder %v76, 32
    %vm89 = vmand %vm87, %vm88
    %v90 = vsel %vm89, 1, 0
    %v91 = vcvt.s32.f32 %v90
    %vm92 = vcmp.ge.s32.totalorder %v76, 32
    %vm93 = vcmp.lt.s32.totalorder %v76, 48
    %vm94 = vmand %vm92, %vm93
    %v95 = vsel %vm94, 1, 0
    %v96 = vcvt.s32.f32 %v95
    %vm97 = vcmp.ge.s32.totalorder %v76, 48
    %vm98 = vcmp.lt.s32.totalorder %v76, 64
    %vm99 = vmand %vm97, %vm98
    %v100 = vsel %vm99, 1, 0
    %v101 = vcvt.s32.f32 %v100
    %v102 = vld [vmem:[#allocation2] sm:$0xf]
    %v103 = vld [vmem:[#allocation2 + $0x8] sm:$0xf]
    %v104 = vpack.c.bf16 %v66, %v65
    %v105 = vlaneseq
    %v106 = vshrl.u32 %v105, 7
    %v107 = vsub.s32 0, %v106
    %v108 = vrot.slane %v67, %v107
    %v111 = vunpack.c.l.b16 %v102
    %v112 = vunpack.c.l.b16 %v103
    %v113 = vpack.c.b16 %v112, %v111
    %vm115 = vcmask 130048
    %v117 = vsel %vm115, %v104, 0
    %119 = vmatprep.subr.bf16.mxu0 0
    %120 = vmatpush1.bf16.msra.mxu0 %v113
    %121 = vmatprep.subr.bf16.mxu0 0
    %122 = vmatpush1.bf16.msra.mxu0 0
    %123 = vmatprep.subr.bf16.mxu0 0
    %124 = vmatpush1.bf16.msra.mxu0 0
    %125 = vmatprep.subr.bf16.mxu0 0
    %126 = vmatpush1.bf16.msra.mxu0 0
    %127 = vmatprep.subr.bf16.mxu0 0
    %128 = vmatpush1.bf16.msra.mxu0 0
    %129 = vmatprep.subr.bf16.mxu0 0
    %130 = vmatpush1.bf16.msra.mxu0 0
    %131 = vmatprep.subr.bf16.mxu0 0
    %132 = vmatpush1.bf16.msra.mxu0 0
    %133 = vmatprep.subr.bf16.mxu0 0
    %134 = vmatpush1.bf16.msra.mxu0 0
    %135 = vmatprep.subr.bf16.mxu0 0
    %136 = vmatpush1.bf16.msra.mxu0 0
    %137 = vmatprep.subr.bf16.mxu0 0
    %138 = vmatpush1.bf16.msra.mxu0 0
    %139 = vmatprep.subr.bf16.mxu0 0
    %140 = vmatpush1.bf16.msra.mxu0 0
    %141 = vmatprep.subr.bf16.mxu0 0
    %142 = vmatpush1.bf16.msra.mxu0 0
    %143 = vmatprep.subr.bf16.mxu0 0
    %144 = vmatpush1.bf16.msra.mxu0 0
    %145 = vmatprep.subr.bf16.mxu0 0
    %146 = vmatpush1.bf16.msra.mxu0 0
    %147 = vmatprep.subr.bf16.mxu0 0
    %148 = vmatpush1.bf16.msra.mxu0 0
    %149 = vmatprep.subr.bf16.mxu0 0
    %150 = vmatpush1.bf16.msra.mxu0 0
    %151 = vmatprep.mubr.bf16.mxu0 0
    %152 = vmatmul.mubr.bf16.gmra.mrb[0].mxu0 %v117
    %v153 = vpop.f32.mrb[0].mxu0
    %v154 = vadd.f32 %v108, %v153
    %v155 = vpop.f32.mrb[0].mxu0
    %v156 = vpop.f32.mrb[0].mxu0
    %v157 = vadd.f32 %v108, %v156
    %v158 = vpop.f32.mrb[0].mxu0
    %159 = vdwg.mxu0
    %v160 = vld [vmem:[#allocation4] sm:$0xf]
    %v161 = vld [vmem:[#allocation4 + $0x4] sm:$0xf]
    %v162 = vld [vmem:[#allocation4 + $0x8] sm:$0xf]
    %v163 = vld [vmem:[#allocation4 + $0xc] sm:$0xf]
    %v164 = vld [vmem:[#allocation4 + $0x10] sm:$0xf]
    %v165 = vld [vmem:[#allocation4 + $0x14] sm:$0xf]
    %v166 = vld [vmem:[#allocation4 + $0x18] sm:$0xf]
    %v167 = vld [vmem:[#allocation4 + $0x1c] sm:$0xf]
    %v168 = vld [vmem:[#allocation4 + $0x20] sm:$0xf]
    %v169 = vld [vmem:[#allocation4 + $0x24] sm:$0xf]
    %v170 = vld [vmem:[#allocation4 + $0x28] sm:$0xf]
    %v171 = vld [vmem:[#allocation4 + $0x2c] sm:$0xf]
    %v172 = vld [vmem:[#allocation4 + $0x30] sm:$0xf]
    %v173 = vld [vmem:[#allocation4 + $0x34] sm:$0xf]
    %v174 = vld [vmem:[#allocation4 + $0x38] sm:$0xf]
    %v175 = vld [vmem:[#allocation4 + $0x3c] sm:$0xf]
    %v176 = vld [vmem:[#allocation4 + $0x40] sm:$0xf]
    %v177 = vld [vmem:[#allocation4 + $0x44] sm:$0xf]
    %v178 = vld [vmem:[#allocation4 + $0x48] sm:$0xf]
    %v179 = vld [vmem:[#allocation4 + $0x4c] sm:$0xf]
    %v180 = vld [vmem:[#allocation4 + $0x50] sm:$0xf]
    %v181 = vld [vmem:[#allocation4 + $0x54] sm:$0xf]
    %v182 = vld [vmem:[#allocation4 + $0x58] sm:$0xf]
    %v183 = vld [vmem:[#allocation4 + $0x5c] sm:$0xf]
    %v184 = vld [vmem:[#allocation4 + $0x60] sm:$0xf]
    %v185 = vld [vmem:[#allocation4 + $0x64] sm:$0xf]
    %v186 = vld [vmem:[#allocation4 + $0x68] sm:$0xf]
    %v187 = vld [vmem:[#allocation4 + $0x6c] sm:$0xf]
    %v188 = vld [vmem:[#allocation4 + $0x70] sm:$0xf]
    %v189 = vld [vmem:[#allocation4 + $0x74] sm:$0xf]
    %v190 = vld [vmem:[#allocation4 + $0x78] sm:$0xf]
    %v191 = vld [vmem:[#allocation4 + $0x7c] sm:$0xf]
    %v192 = vld [vmem:[#allocation4 + $0x80] sm:$0xf]
    %v193 = vld [vmem:[#allocation4 + $0x84] sm:$0xf]
    %v194 = vld [vmem:[#allocation4 + $0x88] sm:$0xf]
    %v195 = vld [vmem:[#allocation4 + $0x8c] sm:$0xf]
    %v196 = vld [vmem:[#allocation4 + $0x90] sm:$0xf]
    %v197 = vld [vmem:[#allocation4 + $0x94] sm:$0xf]
    %v198 = vld [vmem:[#allocation4 + $0x98] sm:$0xf]
    %v199 = vld [vmem:[#allocation4 + $0x9c] sm:$0xf]
    %v200 = vld [vmem:[#allocation4 + $0xa0] sm:$0xf]
    %v201 = vld [vmem:[#allocation4 + $0xa4] sm:$0xf]
    %v202 = vld [vmem:[#allocation4 + $0xa8] sm:$0xf]
    %v203 = vld [vmem:[#allocation4 + $0xac] sm:$0xf]
    %v204 = vld [vmem:[#allocation4 + $0xb0] sm:$0xf]
    %v205 = vld [vmem:[#allocation4 + $0xb4] sm:$0xf]
    %v206 = vld [vmem:[#allocation4 + $0xb8] sm:$0xf]
    %v207 = vld [vmem:[#allocation4 + $0xbc] sm:$0xf]
    %v208 = vld [vmem:[#allocation4 + $0xc0] sm:$0xf]
    %v209 = vld [vmem:[#allocation4 + $0xc4] sm:$0xf]
    %v210 = vld [vmem:[#allocation4 + $0xc8] sm:$0xf]
    %v211 = vld [vmem:[#allocation4 + $0xcc] sm:$0xf]
    %v212 = vld [vmem:[#allocation4 + $0xd0] sm:$0xf]
    %v213 = vld [vmem:[#allocation4 + $0xd4] sm:$0xf]
    %v214 = vld [vmem:[#allocation4 + $0xd8] sm:$0xf]
    %v215 = vld [vmem:[#allocation4 + $0xdc] sm:$0xf]
    %v216 = vld [vmem:[#allocation4 + $0xe0] sm:$0xf]
    %v217 = vld [vmem:[#allocation4 + $0xe4] sm:$0xf]
    %v218 = vld [vmem:[#allocation4 + $0xe8] sm:$0xf]
    %v219 = vld [vmem:[#allocation4 + $0xec] sm:$0xf]
    %v220 = vld [vmem:[#allocation4 + $0xf0] sm:$0xf]
    %v221 = vld [vmem:[#allocation4 + $0xf4] sm:$0xf]
    %v222 = vld [vmem:[#allocation4 + $0xf8] sm:$0xf]
    %v223 = vld [vmem:[#allocation4 + $0xfc] sm:$0xf]
    %v224 = vld [vmem:[#allocation4 + $0x100] sm:$0xf]
    %v225 = vld [vmem:[#allocation4 + $0x104] sm:$0xf]
    %v226 = vld [vmem:[#allocation4 + $0x108] sm:$0xf]
    %v227 = vld [vmem:[#allocation4 + $0x10c] sm:$0xf]
    %v228 = vld [vmem:[#allocation4 + $0x110] sm:$0xf]
    %v229 = vld [vmem:[#allocation4 + $0x114] sm:$0xf]
    %v230 = vld [vmem:[#allocation4 + $0x118] sm:$0xf]
    %v231 = vld [vmem:[#allocation4 + $0x11c] sm:$0xf]
    %v232 = vld [vmem:[#allocation4 + $0x120] sm:$0xf]
    %v233 = vld [vmem:[#allocation4 + $0x124] sm:$0xf]
    %v234 = vld [vmem:[#allocation4 + $0x128] sm:$0xf]
    %v235 = vld [vmem:[#allocation4 + $0x12c] sm:$0xf]
    %v236 = vld [vmem:[#allocation4 + $0x130] sm:$0xf]
    %v237 = vld [vmem:[#allocation4 + $0x134] sm:$0xf]
    %v238 = vld [vmem:[#allocation4 + $0x138] sm:$0xf]
    %v239 = vld [vmem:[#allocation4 + $0x13c] sm:$0xf]
    %v240 = vld [vmem:[#allocation4 + $0x140] sm:$0xf]
    %v241 = vld [vmem:[#allocation4 + $0x144] sm:$0xf]
    %v242 = vld [vmem:[#allocation4 + $0x148] sm:$0xf]
    %v243 = vld [vmem:[#allocation4 + $0x14c] sm:$0xf]
    %v244 = vld [vmem:[#allocation4 + $0x150] sm:$0xf]
    %v245 = vld [vmem:[#allocation4 + $0x154] sm:$0xf]
    %v246 = vld [vmem:[#allocation4 + $0x158] sm:$0xf]
    %v247 = vld [vmem:[#allocation4 + $0x15c] sm:$0xf]
    %v248 = vld [vmem:[#allocation4 + $0x160] sm:$0xf]
    %v249 = vld [vmem:[#allocation4 + $0x164] sm:$0xf]
    %v250 = vld [vmem:[#allocation4 + $0x168] sm:$0xf]
    %v251 = vld [vmem:[#allocation4 + $0x16c] sm:$0xf]
    %v252 = vld [vmem:[#allocation4 + $0x170] sm:$0xf]
    %v253 = vld [vmem:[#allocation4 + $0x174] sm:$0xf]
    %v254 = vld [vmem:[#allocation4 + $0x178] sm:$0xf]
    %v255 = vld [vmem:[#allocation4 + $0x17c] sm:$0xf]
    %v256 = vld [vmem:[#allocation4 + $0x180] sm:$0xf]
    %v257 = vld [vmem:[#allocation4 + $0x184] sm:$0xf]
    %v258 = vld [vmem:[#allocation4 + $0x188] sm:$0xf]
    %v259 = vld [vmem:[#allocation4 + $0x18c] sm:$0xf]
    %v260 = vld [vmem:[#allocation4 + $0x190] sm:$0xf]
    %v261 = vld [vmem:[#allocation4 + $0x194] sm:$0xf]
    %v262 = vld [vmem:[#allocation4 + $0x198] sm:$0xf]
    %v263 = vld [vmem:[#allocation4 + $0x19c] sm:$0xf]
    %v264 = vld [vmem:[#allocation4 + $0x1a0] sm:$0xf]
    %v265 = vld [vmem:[#allocation4 + $0x1a4] sm:$0xf]
    %v266 = vld [vmem:[#allocation4 + $0x1a8] sm:$0xf]
    %v267 = vld [vmem:[#allocation4 + $0x1ac] sm:$0xf]
    %v268 = vld [vmem:[#allocation4 + $0x1b0] sm:$0xf]
    %v269 = vld [vmem:[#allocation4 + $0x1b4] sm:$0xf]
    %v270 = vld [vmem:[#allocation4 + $0x1b8] sm:$0xf]
    %v271 = vld [vmem:[#allocation4 + $0x1bc] sm:$0xf]
    %v272 = vld [vmem:[#allocation4 + $0x1c0] sm:$0xf]
    %v273 = vld [vmem:[#allocation4 + $0x1c4] sm:$0xf]
    %v274 = vld [vmem:[#allocation4 + $0x1c8] sm:$0xf]
    %v275 = vld [vmem:[#allocation4 + $0x1cc] sm:$0xf]
    %v276 = vld [vmem:[#allocation4 + $0x1d0] sm:$0xf]
    %v277 = vld [vmem:[#allocation4 + $0x1d4] sm:$0xf]
    %v278 = vld [vmem:[#allocation4 + $0x1d8] sm:$0xf]
    %v279 = vld [vmem:[#allocation4 + $0x1dc] sm:$0xf]
    %v280 = vld [vmem:[#allocation4 + $0x1e0] sm:$0xf]
    %v281 = vld [vmem:[#allocation4 + $0x1e4] sm:$0xf]
    %v282 = vld [vmem:[#allocation4 + $0x1e8] sm:$0xf]
    %v283 = vld [vmem:[#allocation4 + $0x1ec] sm:$0xf]
    %v284 = vld [vmem:[#allocation4 + $0x1f0] sm:$0xf]
    %v285 = vld [vmem:[#allocation4 + $0x1f4] sm:$0xf]
    %v286 = vld [vmem:[#allocation4 + $0x1f8] sm:$0xf]
    %v287 = vld [vmem:[#allocation4 + $0x1fc] sm:$0xf]
    %v288 = vld [vmem:[#allocation4 + $0x200] sm:$0xf]
    %v289 = vld [vmem:[#allocation4 + $0x204] sm:$0xf]
    %v290 = vld [vmem:[#allocation4 + $0x208] sm:$0xf]
    %v291 = vld [vmem:[#allocation4 + $0x20c] sm:$0xf]
    %v292 = vld [vmem:[#allocation4 + $0x210] sm:$0xf]
    %v293 = vld [vmem:[#allocation4 + $0x214] sm:$0xf]
    %v294 = vld [vmem:[#allocation4 + $0x218] sm:$0xf]
    %v295 = vld [vmem:[#allocation4 + $0x21c] sm:$0xf]
    %v296 = vld [vmem:[#allocation4 + $0x220] sm:$0xf]
    %v297 = vld [vmem:[#allocation4 + $0x224] sm:$0xf]
    %v298 = vld [vmem:[#allocation4 + $0x228] sm:$0xf]
    %v299 = vld [vmem:[#allocation4 + $0x22c] sm:$0xf]
    %v300 = vld [vmem:[#allocation4 + $0x230] sm:$0xf]
    %v301 = vld [vmem:[#allocation4 + $0x234] sm:$0xf]
    %v302 = vld [vmem:[#allocation4 + $0x238] sm:$0xf]
    %v303 = vld [vmem:[#allocation4 + $0x23c] sm:$0xf]
    %v304 = vld [vmem:[#allocation4 + $0x240] sm:$0xf]
    %v305 = vld [vmem:[#allocation4 + $0x244] sm:$0xf]
    %v306 = vld [vmem:[#allocation4 + $0x248] sm:$0xf]
    %v307 = vld [vmem:[#allocation4 + $0x24c] sm:$0xf]
    %v308 = vld [vmem:[#allocation4 + $0x250] sm:$0xf]
    %v309 = vld [vmem:[#allocation4 + $0x254] sm:$0xf]
    %v310 = vld [vmem:[#allocation4 + $0x258] sm:$0xf]
    %v311 = vld [vmem:[#allocation4 + $0x25c] sm:$0xf]
    %v312 = vld [vmem:[#allocation4 + $0x260] sm:$0xf]
    %v313 = vld [vmem:[#allocation4 + $0x264] sm:$0xf]
    %v314 = vld [vmem:[#allocation4 + $0x268] sm:$0xf]
    %v315 = vld [vmem:[#allocation4 + $0x26c] sm:$0xf]
    %v316 = vld [vmem:[#allocation4 + $0x270] sm:$0xf]
    %v317 = vld [vmem:[#allocation4 + $0x274] sm:$0xf]
    %v318 = vld [vmem:[#allocation4 + $0x278] sm:$0xf]
    %v319 = vld [vmem:[#allocation4 + $0x27c] sm:$0xf]
    %v320 = vld [vmem:[#allocation4 + $0x280] sm:$0xf]
    %v321 = vld [vmem:[#allocation4 + $0x284] sm:$0xf]
    %v322 = vld [vmem:[#allocation4 + $0x288] sm:$0xf]
    %v323 = vld [vmem:[#allocation4 + $0x28c] sm:$0xf]
    %v324 = vld [vmem:[#allocation4 + $0x290] sm:$0xf]
    %v325 = vld [vmem:[#allocation4 + $0x294] sm:$0xf]
    %v326 = vld [vmem:[#allocation4 + $0x298] sm:$0xf]
    %v327 = vld [vmem:[#allocation4 + $0x29c] sm:$0xf]
    %v328 = vld [vmem:[#allocation4 + $0x2a0] sm:$0xf]
    %v329 = vld [vmem:[#allocation4 + $0x2a4] sm:$0xf]
    %v330 = vld [vmem:[#allocation4 + $0x2a8] sm:$0xf]
    %v331 = vld [vmem:[#allocation4 + $0x2ac] sm:$0xf]
    %v332 = vld [vmem:[#allocation4 + $0x2b0] sm:$0xf]
    %v333 = vld [vmem:[#allocation4 + $0x2b4] sm:$0xf]
    %v334 = vld [vmem:[#allocation4 + $0x2b8] sm:$0xf]
    %v335 = vld [vmem:[#allocation4 + $0x2bc] sm:$0xf]
    %v336 = vld [vmem:[#allocation4 + $0x2c0] sm:$0xf]
    %v337 = vld [vmem:[#allocation4 + $0x2c4] sm:$0xf]
    %v338 = vld [vmem:[#allocation4 + $0x2c8] sm:$0xf]
    %v339 = vld [vmem:[#allocation4 + $0x2cc] sm:$0xf]
    %v340 = vld [vmem:[#allocation4 + $0x2d0] sm:$0xf]
    %v341 = vld [vmem:[#allocation4 + $0x2d4] sm:$0xf]
    %v342 = vld [vmem:[#allocation4 + $0x2d8] sm:$0xf]
    %v343 = vld [vmem:[#allocation4 + $0x2dc] sm:$0xf]
    %v344 = vld [vmem:[#allocation4 + $0x2e0] sm:$0xf]
    %v345 = vld [vmem:[#allocation4 + $0x2e4] sm:$0xf]
    %v346 = vld [vmem:[#allocation4 + $0x2e8] sm:$0xf]
    %v347 = vld [vmem:[#allocation4 + $0x2ec] sm:$0xf]
    %v348 = vld [vmem:[#allocation4 + $0x2f0] sm:$0xf]
    %v349 = vld [vmem:[#allocation4 + $0x2f4] sm:$0xf]
    %v350 = vld [vmem:[#allocation4 + $0x2f8] sm:$0xf]
    %v351 = vld [vmem:[#allocation4 + $0x2fc] sm:$0xf]
    %v352 = vld [vmem:[#allocation4 + $0x300] sm:$0xf]
    %v353 = vld [vmem:[#allocation4 + $0x304] sm:$0xf]
    %v354 = vld [vmem:[#allocation4 + $0x308] sm:$0xf]
    %v355 = vld [vmem:[#allocation4 + $0x30c] sm:$0xf]
    %v356 = vld [vmem:[#allocation4 + $0x310] sm:$0xf]
    %v357 = vld [vmem:[#allocation4 + $0x314] sm:$0xf]
    %v358 = vld [vmem:[#allocation4 + $0x318] sm:$0xf]
    %v359 = vld [vmem:[#allocation4 + $0x31c] sm:$0xf]
    %v360 = vld [vmem:[#allocation4 + $0x320] sm:$0xf]
    %v361 = vld [vmem:[#allocation4 + $0x324] sm:$0xf]
    %v362 = vld [vmem:[#allocation4 + $0x328] sm:$0xf]
    %v363 = vld [vmem:[#allocation4 + $0x32c] sm:$0xf]
    %v364 = vld [vmem:[#allocation4 + $0x330] sm:$0xf]
    %v365 = vld [vmem:[#allocation4 + $0x334] sm:$0xf]
    %v366 = vld [vmem:[#allocation4 + $0x338] sm:$0xf]
    %v367 = vld [vmem:[#allocation4 + $0x33c] sm:$0xf]
    %v368 = vld [vmem:[#allocation4 + $0x340] sm:$0xf]
    %v369 = vld [vmem:[#allocation4 + $0x344] sm:$0xf]
    %v370 = vld [vmem:[#allocation4 + $0x348] sm:$0xf]
    %v371 = vld [vmem:[#allocation4 + $0x34c] sm:$0xf]
    %v372 = vld [vmem:[#allocation4 + $0x350] sm:$0xf]
    %v373 = vld [vmem:[#allocation4 + $0x354] sm:$0xf]
    %v374 = vld [vmem:[#allocation4 + $0x358] sm:$0xf]
    %v375 = vld [vmem:[#allocation4 + $0x35c] sm:$0xf]
    %v376 = vld [vmem:[#allocation4 + $0x360] sm:$0xf]
    %v377 = vld [vmem:[#allocation4 + $0x364] sm:$0xf]
    %v378 = vld [vmem:[#allocation4 + $0x368] sm:$0xf]
    %v379 = vld [vmem:[#allocation4 + $0x36c] sm:$0xf]
    %v380 = vld [vmem:[#allocation4 + $0x370] sm:$0xf]
    %v381 = vld [vmem:[#allocation4 + $0x374] sm:$0xf]
    %v382 = vld [vmem:[#allocation4 + $0x378] sm:$0xf]
    %v383 = vld [vmem:[#allocation4 + $0x37c] sm:$0xf]
    %v384 = vld [vmem:[#allocation4 + $0x380] sm:$0xf]
    %v385 = vld [vmem:[#allocation4 + $0x384] sm:$0xf]
    %v386 = vld [vmem:[#allocation4 + $0x388] sm:$0xf]
    %v387 = vld [vmem:[#allocation4 + $0x38c] sm:$0xf]
    %v388 = vld [vmem:[#allocation4 + $0x390] sm:$0xf]
    %v389 = vld [vmem:[#allocation4 + $0x394] sm:$0xf]
    %v390 = vld [vmem:[#allocation4 + $0x398] sm:$0xf]
    %v391 = vld [vmem:[#allocation4 + $0x39c] sm:$0xf]
    %v392 = vld [vmem:[#allocation4 + $0x3a0] sm:$0xf]
    %v393 = vld [vmem:[#allocation4 + $0x3a4] sm:$0xf]
    %v394 = vld [vmem:[#allocation4 + $0x3a8] sm:$0xf]
    %v395 = vld [vmem:[#allocation4 + $0x3ac] sm:$0xf]
    %v396 = vld [vmem:[#allocation4 + $0x3b0] sm:$0xf]
    %v397 = vld [vmem:[#allocation4 + $0x3b4] sm:$0xf]
    %v398 = vld [vmem:[#allocation4 + $0x3b8] sm:$0xf]
    %v399 = vld [vmem:[#allocation4 + $0x3bc] sm:$0xf]
    %v400 = vld [vmem:[#allocation4 + $0x3c0] sm:$0xf]
    %v401 = vld [vmem:[#allocation4 + $0x3c4] sm:$0xf]
    %v402 = vld [vmem:[#allocation4 + $0x3c8] sm:$0xf]
    %v403 = vld [vmem:[#allocation4 + $0x3cc] sm:$0xf]
    %v404 = vld [vmem:[#allocation4 + $0x3d0] sm:$0xf]
    %v405 = vld [vmem:[#allocation4 + $0x3d4] sm:$0xf]
    %v406 = vld [vmem:[#allocation4 + $0x3d8] sm:$0xf]
    %v407 = vld [vmem:[#allocation4 + $0x3dc] sm:$0xf]
    %v408 = vld [vmem:[#allocation4 + $0x3e0] sm:$0xf]
    %v409 = vld [vmem:[#allocation4 + $0x3e4] sm:$0xf]
    %v410 = vld [vmem:[#allocation4 + $0x3e8] sm:$0xf]
    %v411 = vld [vmem:[#allocation4 + $0x3ec] sm:$0xf]
    %v412 = vld [vmem:[#allocation4 + $0x3f0] sm:$0xf]
    %v413 = vld [vmem:[#allocation4 + $0x3f4] sm:$0xf]
    %v414 = vld [vmem:[#allocation4 + $0x3f8] sm:$0xf]
    %v415 = vld [vmem:[#allocation4 + $0x3fc] sm:$0xf]
    %v416 = vld [vmem:[#allocation4 + $0x400] sm:$0xf]
    %v417 = vld [vmem:[#allocation4 + $0x404] sm:$0xf]
    %v418 = vld [vmem:[#allocation4 + $0x408] sm:$0xf]
    %v419 = vld [vmem:[#allocation4 + $0x40c] sm:$0xf]
    %v420 = vld [vmem:[#allocation4 + $0x410] sm:$0xf]
    %v421 = vld [vmem:[#allocation4 + $0x414] sm:$0xf]
    %v422 = vld [vmem:[#allocation4 + $0x418] sm:$0xf]
    %v423 = vld [vmem:[#allocation4 + $0x41c] sm:$0xf]
    %v424 = vld [vmem:[%s5] ss:$2 sm:$0xff]
    %s425 = scalar_lea.vmem %s5, 16
    %v426 = vld [vmem:[%s425] ss:$2 sm:$0xff]
    %v427 = vpack.c.bf16 %v157, %v154
    %v428 = vld [vmem:[#allocation2 + $0x10] sm:$0xff]
    %v429 = vld [vmem:[#allocation2 + $0x18] sm:$0xff]
    %v430 = vld [vmem:[#allocation2 + $0x20] sm:$0xff]
    %v431 = vld [vmem:[#allocation2 + $0x28] sm:$0xff]
    %v432 = vld [vmem:[#allocation2 + $0x30] sm:$0xff]
    %v433 = vld [vmem:[#allocation2 + $0x38] sm:$0xff]
    %v434 = vld [vmem:[#allocation2 + $0x40] sm:$0xff]
    %v435 = vld [vmem:[#allocation2 + $0x48] sm:$0xff]
    %v436 = vlaneseq
    %v437 = vshrl.u32 %v436, 7
    %v438 = vsub.s32 1, %v437
    %v439 = vrot.slane %v67, %v438
    %v440 = vlaneseq
    %v441 = vshrl.u32 %v440, 7
    %v442 = vsub.s32 1, %v441
    %v443 = vrot.slane %v68, %v442
    %v452 = vunpack.c.l.b16 %v428
    %v453 = vunpack.c.h.b16 %v428
    %v454 = vunpack.c.l.b16 %v429
    %v455 = vunpack.c.h.b16 %v429
    %v456 = vunpack.c.l.b16 %v430
    %v457 = vunpack.c.h.b16 %v430
    %v458 = vunpack.c.l.b16 %v431
    %v459 = vunpack.c.h.b16 %v431
    %v460 = vunpack.c.l.b16 %v432
    %v461 = vunpack.c.h.b16 %v432
    %v462 = vunpack.c.l.b16 %v433
    %v463 = vunpack.c.h.b16 %v433
    %v464 = vunpack.c.l.b16 %v434
    %v465 = vunpack.c.h.b16 %v434
    %v466 = vunpack.c.l.b16 %v435
    %v467 = vunpack.c.h.b16 %v435
    %v468 = vpack.c.b16 %v454, %v452
    %v469 = vpack.c.b16 %v455, %v453
    %v470 = vpack.c.b16 %v458, %v456
    %v471 = vpack.c.b16 %v459, %v457
    %v472 = vpack.c.b16 %v462, %v460
    %v473 = vpack.c.b16 %v463, %v461
    %v474 = vpack.c.b16 %v466, %v464
    %v475 = vpack.c.b16 %v467, %v465
    %vm484 = vcmask 523264
    %v486 = vsel %vm484, %v427, 0
    %488 = vmatprep.subr.bf16.mxu0 %v469
    %489 = vmatpush1.bf16.msra.mxu0 %v468
    %490 = vmatprep.subr.bf16.mxu0 %v471
    %491 = vmatpush1.bf16.msra.mxu0 %v470
    %492 = vmatprep.subr.bf16.mxu0 %v473
    %493 = vmatpush1.bf16.msra.mxu0 %v472
    %494 = vmatprep.subr.bf16.mxu0 %v475
    %495 = vmatpush1.bf16.msra.mxu0 %v474
    %496 = vmatprep.subr.bf16.mxu0 0
    %497 = vmatpush1.bf16.msra.mxu0 0
    %498 = vmatprep.subr.bf16.mxu0 0
    %499 = vmatpush1.bf16.msra.mxu0 0
    %500 = vmatprep.subr.bf16.mxu0 0
    %501 = vmatpush1.bf16.msra.mxu0 0
    %502 = vmatprep.subr.bf16.mxu0 0
    %503 = vmatpush1.bf16.msra.mxu0 0
    %504 = vmatprep.subr.bf16.mxu0 0
    %505 = vmatpush1.bf16.msra.mxu0 0
    %506 = vmatprep.subr.bf16.mxu0 0
    %507 = vmatpush1.bf16.msra.mxu0 0
    %508 = vmatprep.subr.bf16.mxu0 0
    %509 = vmatpush1.bf16.msra.mxu0 0
    %510 = vmatprep.subr.bf16.mxu0 0
    %511 = vmatpush1.bf16.msra.mxu0 0
    %512 = vmatprep.subr.bf16.mxu0 0
    %513 = vmatpush1.bf16.msra.mxu0 0
    %514 = vmatprep.subr.bf16.mxu0 0
    %515 = vmatpush1.bf16.msra.mxu0 0
    %516 = vmatprep.subr.bf16.mxu0 0
    %517 = vmatpush1.bf16.msra.mxu0 0
    %518 = vmatprep.subr.bf16.mxu0 0
    %519 = vmatpush1.bf16.msra.mxu0 0
    %520 = vmatprep.mubr.bf16.mxu0 0
    %521 = vmatmul.mubr.bf16.gmra.mrb[0].mxu0 %v486
    %v522 = vpop.f32.mrb[0].mxu0
    %v523 = vadd.f32 %v439, %v522
    %v524 = vpop.f32.mrb[0].mxu0
    %v525 = vadd.f32 %v443, %v524
    %v526 = vpop.f32.mrb[0].mxu0
    %v527 = vadd.f32 %v439, %v526
    %v528 = vpop.f32.mrb[0].mxu0
    %v529 = vadd.f32 %v443, %v528
    %530 = vdwg.mxu0
    %v531 = vmul.f32 %v523, %v86
    %v532 = vmul.f32 %v527, %v86
    %535 = vrot.lane.b32.xlu0 %v523, 64
    %v536 = vpop.permute.xlu0 %535
    %537 = vrot.lane.b32.xlu0 %v527, 64
    %v538 = vpop.permute.xlu0 %537
    %v540 = vsel %vm484, %v531, 0
    %v543 = vsel %vm484, %v532, 0
    %v545 = vsel %vm484, %v536, 0
    %v547 = vsel %vm484, %v538, 0
    %549 = vmatprep.subr.mxu0 0.0
    %550 = vmatpush1.xpose.msra.mxu0 %v545
    %551 = vmatprep.subr.mxu0 0.0
    %552 = vmatpush1.xpose.msra.mxu0 %v547
    %553 = vmatprep.subr.mxu0 0.0
    %554 = vmatpush1.xpose.msra.mxu0 0.0
    %555 = vmatprep.subr.mxu0 0.0
    %556 = vmatpush1.xpose.msra.mxu0 0.0
    %557 = vmatprep.subr.mxu0 0.0
    %558 = vmatpush1.xpose.msra.mxu0 0.0
    %559 = vmatprep.subr.mxu0 0.0
    %560 = vmatpush1.xpose.msra.mxu0 0.0
    %561 = vmatprep.subr.mxu0 0.0
    %562 = vmatpush1.xpose.msra.mxu0 0.0
    %563 = vmatprep.subr.mxu0 0.0
    %564 = vmatpush1.xpose.msra.mxu0 0.0
    %565 = vmatprep.subr.mxu0 0.0
    %566 = vmatpush1.xpose.msra.mxu0 0.0
    %567 = vmatprep.subr.mxu0 0.0
    %568 = vmatpush1.xpose.msra.mxu0 0.0
    %569 = vmatprep.subr.mxu0 0.0
    %570 = vmatpush1.xpose.msra.mxu0 0.0
    %571 = vmatprep.subr.mxu0 0.0
    %572 = vmatpush1.xpose.msra.mxu0 0.0
    %573 = vmatprep.subr.mxu0 0.0
    %574 = vmatpush1.xpose.msra.mxu0 0.0
    %575 = vmatprep.subr.mxu0 0.0
    %576 = vmatpush1.xpose.msra.mxu0 0.0
    %577 = vmatprep.subr.mxu0 0.0
    %578 = vmatpush1.xpose.msra.mxu0 0.0
    %579 = vmatprep.subr.mxu0 0.0
    %580 = vmatpush1.xpose.msra.mxu0 0.0
    %581 = vmatprep.subr.mxu0 0.0
    %582 = vmatpush1.xpose.msra.mxu0 0.0
    %583 = vmatprep.subr.mxu0 0.0
    %584 = vmatpush1.xpose.msra.mxu0 0.0
    %585 = vmatprep.subr.mxu0 0.0
    %586 = vmatpush1.xpose.msra.mxu0 0.0
    %587 = vmatprep.subr.mxu0 0.0
    %588 = vmatpush1.xpose.msra.mxu0 0.0
    %589 = vmatprep.subr.mxu0 0.0
    %590 = vmatpush1.xpose.msra.mxu0 0.0
    %591 = vmatprep.subr.mxu0 0.0
    %592 = vmatpush1.xpose.msra.mxu0 0.0
    %593 = vmatprep.subr.mxu0 0.0
    %594 = vmatpush1.xpose.msra.mxu0 0.0
    %595 = vmatprep.subr.mxu0 0.0
    %596 = vmatpush1.xpose.msra.mxu0 0.0
    %597 = vmatprep.subr.mxu0 0.0
    %598 = vmatpush1.xpose.msra.mxu0 0.0
    %599 = vmatprep.subr.mxu0 0.0
    %600 = vmatpush1.xpose.msra.mxu0 0.0
    %601 = vmatprep.subr.mxu0 0.0
    %602 = vmatpush1.xpose.msra.mxu0 0.0
    %603 = vmatprep.subr.mxu0 0.0
    %604 = vmatpush1.xpose.msra.mxu0 0.0
    %605 = vmatprep.subr.mxu0 0.0
    %606 = vmatpush1.xpose.msra.mxu0 0.0
    %607 = vmatprep.subr.mxu0 0.0
    %608 = vmatpush1.xpose.msra.mxu0 0.0
    %609 = vmatprep.subr.mxu0 0.0
    %610 = vmatpush1.xpose.msra.mxu0 0.0
    %611 = vmatprep.subr.mxu0 0.0
    %612 = vmatpush1.xpose.msra.mxu0 0.0
    %613 = vmatprep.mubr.f32.mxu0 0.0
    %614 = vmatmul.mubr.f32.gmra.mrb[0].mxu0 %v540
    %v615 = vpop.f32.mrb[0].mxu0
    %v616 = vadd.f32 0.0, %v615
    %v617 = vpop.f32.mrb[0].mxu0
    %618 = vmatprep.mubr.f32.mxu0 0.0
    %619 = vmatmul.mubr.f32.gmra.mrb[0].mxu0 %v543
    %v620 = vpop.f32.mrb[0].mxu0
    %v621 = vadd.f32 0.0, %v620
    %v622 = vpop.f32.mrb[0].mxu0
    %623 = vdwg.mxu0
    %v624 = vmul.f32 %v616, 0.25
    %v625 = vmul.f32 %v621, 0.25
    %v626 = vsel %vm80, %v624, -1e+30
    %v627 = vsel %vm81, %v625, -1e+30
    %v628 = vsel %vm115, %v626, -inf
    %629 = vmax.xlane.f32.xlu0 %v628
    %v630 = vpop.xlane.xlu0 %629
    %v631 = vsel %vm115, %v627, -inf
    %632 = vmax.xlane.f32.xlu0 %v631
    %v633 = vpop.xlane.xlu0 %632
    %v634 = vsub.f32 %v626, %v630
    %v635 = vsub.f32 %v627, %v633
    %v636 = vmul.f32 %v634, 1.442695
    %v637 = vpow.pop %v636
    %v638 = vmul.f32 %v635, 1.442695
    %v639 = vpow.pop %v638
    %v640 = vsel %vm115, %v637, 0.0
    %641 = vadd.xlane.f32.xlu0 %v640
    %v642 = vpop.xlane.xlu0 %641
    %v643 = vsel %vm115, %v639, 0.0
    %644 = vadd.xlane.f32.xlu0 %v643
    %v645 = vpop.xlane.xlu0 %644
    %v646 = vrcp.pop %v642
    %v647 = vmul.f32 %v637, %v646
    %v648 = vrcp.pop %v645
    %v649 = vmul.f32 %v639, %v648
    %v650 = vmul.f32 %v525, %v86
    %v651 = vmul.f32 %v529, %v86
    %v652 = vmul.f32 %v523, %v91
    %v653 = vmul.f32 %v527, %v91
    %v655 = vsel %vm484, %v652, 0
    %v658 = vsel %vm484, %v653, 0
    %660 = vmatprep.subr.mxu0 0.0
    %661 = vmatpush1.xpose.msra.mxu0 %v545
    %662 = vmatprep.subr.mxu0 0.0
    %663 = vmatpush1.xpose.msra.mxu0 %v547
    %664 = vmatprep.subr.mxu0 0.0
    %665 = vmatpush1.xpose.msra.mxu0 0.0
    %666 = vmatprep.subr.mxu0 0.0
    %667 = vmatpush1.xpose.msra.mxu0 0.0
    %668 = vmatprep.subr.mxu0 0.0
    %669 = vmatpush1.xpose.msra.mxu0 0.0
    %670 = vmatprep.subr.mxu0 0.0
    %671 = vmatpush1.xpose.msra.mxu0 0.0
    %672 = vmatprep.subr.mxu0 0.0
    %673 = vmatpush1.xpose.msra.mxu0 0.0
    %674 = vmatprep.subr.mxu0 0.0
    %675 = vmatpush1.xpose.msra.mxu0 0.0
    %676 = vmatprep.subr.mxu0 0.0
    %677 = vmatpush1.xpose.msra.mxu0 0.0
    %678 = vmatprep.subr.mxu0 0.0
    %679 = vmatpush1.xpose.msra.mxu0 0.0
    %680 = vmatprep.subr.mxu0 0.0
    %681 = vmatpush1.xpose.msra.mxu0 0.0
    %682 = vmatprep.subr.mxu0 0.0
    %683 = vmatpush1.xpose.msra.mxu0 0.0
    %684 = vmatprep.subr.mxu0 0.0
    %685 = vmatpush1.xpose.msra.mxu0 0.0
    %686 = vmatprep.subr.mxu0 0.0
    %687 = vmatpush1.xpose.msra.mxu0 0.0
    %688 = vmatprep.subr.mxu0 0.0
    %689 = vmatpush1.xpose.msra.mxu0 0.0
    %690 = vmatprep.subr.mxu0 0.0
    %691 = vmatpush1.xpose.msra.mxu0 0.0
    %692 = vmatprep.subr.mxu0 0.0
    %693 = vmatpush1.xpose.msra.mxu0 0.0
    %694 = vmatprep.subr.mxu0 0.0
    %695 = vmatpush1.xpose.msra.mxu0 0.0
    %696 = vmatprep.subr.mxu0 0.0
    %697 = vmatpush1.xpose.msra.mxu0 0.0
    %698 = vmatprep.subr.mxu0 0.0
    %699 = vmatpush1.xpose.msra.mxu0 0.0
    %700 = vmatprep.subr.mxu0 0.0
    %701 = vmatpush1.xpose.msra.mxu0 0.0
    %702 = vmatprep.subr.mxu0 0.0
    %703 = vmatpush1.xpose.msra.mxu0 0.0
    %704 = vmatprep.subr.mxu0 0.0
    %705 = vmatpush1.xpose.msra.mxu0 0.0
    %706 = vmatprep.subr.mxu0 0.0
    %707 = vmatpush1.xpose.msra.mxu0 0.0
    %708 = vmatprep.subr.mxu0 0.0
    %709 = vmatpush1.xpose.msra.mxu0 0.0
    %710 = vmatprep.subr.mxu0 0.0
    %711 = vmatpush1.xpose.msra.mxu0 0.0
    %712 = vmatprep.subr.mxu0 0.0
    %713 = vmatpush1.xpose.msra.mxu0 0.0
    %714 = vmatprep.subr.mxu0 0.0
    %715 = vmatpush1.xpose.msra.mxu0 0.0
    %716 = vmatprep.subr.mxu0 0.0
    %717 = vmatpush1.xpose.msra.mxu0 0.0
    %718 = vmatprep.subr.mxu0 0.0
    %719 = vmatpush1.xpose.msra.mxu0 0.0
    %720 = vmatprep.subr.mxu0 0.0
    %721 = vmatpush1.xpose.msra.mxu0 0.0
    %722 = vmatprep.subr.mxu0 0.0
    %723 = vmatpush1.xpose.msra.mxu0 0.0
    %724 = vmatprep.mubr.f32.mxu0 0.0
    %725 = vmatmul.mubr.f32.gmra.mrb[0].mxu0 %v655
    %v726 = vpop.f32.mrb[0].mxu0
    %v727 = vadd.f32 0.0, %v726
    %v728 = vpop.f32.mrb[0].mxu0
    %729 = vmatprep.mubr.f32.mxu0 0.0
    %730 = vmatmul.mubr.f32.gmra.mrb[0].mxu0 %v658
    %v731 = vpop.f32.mrb[0].mxu0
    %v732 = vadd.f32 0.0, %v731
    %v733 = vpop.f32.mrb[0].mxu0
    %734 = vdwg.mxu0
    %v735 = vmul.f32 %v727, 0.25
    %v736 = vmul.f32 %v732, 0.25
    %v737 = vsel %vm80, %v735, -1e+30
    %v738 = vsel %vm81, %v736, -1e+30
    %v739 = vsel %vm115, %v737, -inf
    %740 = vmax.xlane.f32.xlu0 %v739
    %v741 = vpop.xlane.xlu0 %740
    %v742 = vsel %vm115, %v738, -inf
    %743 = vmax.xlane.f32.xlu0 %v742
    %v744 = vpop.xlane.xlu0 %743
    %v745 = vsub.f32 %v737, %v741
    %v746 = vsub.f32 %v738, %v744
    %v747 = vmul.f32 %v745, 1.442695
    %v748 = vpow.pop %v747
    %v749 = vmul.f32 %v746, 1.442695
    %v750 = vpow.pop %v749
    %v751 = vsel %vm115, %v748, 0.0
    %752 = vadd.xlane.f32.xlu0 %v751
    %v753 = vpop.xlane.xlu0 %752
    %v754 = vsel %vm115, %v750, 0.0
    %755 = vadd.xlane.f32.xlu0 %v754
    %v756 = vpop.xlane.xlu0 %755
    %v757 = vrcp.pop %v753
    %v758 = vmul.f32 %v748, %v757
    %v759 = vrcp.pop %v756
    %v760 = vmul.f32 %v750, %v759
    %v761 = vmul.f32 %v525, %v91
    %v762 = vmul.f32 %v529, %v91
    %v764 = vsel %vm115, %v758, 0
    %v767 = vsel %vm115, %v760, 0
    %769 = vmatprep.subr.mxu0 0.0
    %770 = vmatpush1.msra.mxu0 %v761
    %771 = vmatprep.subr.mxu0 0.0
    %772 = vmatpush1.msra.mxu0 %v762
    %773 = vmatprep.subr.mxu0 0.0
    %774 = vmatpush1.msra.mxu0 0.0
    %775 = vmatprep.subr.mxu0 0.0
    %776 = vmatpush1.msra.mxu0 0.0
    %777 = vmatprep.subr.mxu0 0.0
    %778 = vmatpush1.msra.mxu0 0.0
    %779 = vmatprep.subr.mxu0 0.0
    %780 = vmatpush1.msra.mxu0 0.0
    %781 = vmatprep.subr.mxu0 0.0
    %782 = vmatpush1.msra.mxu0 0.0
    %783 = vmatprep.subr.mxu0 0.0
    %784 = vmatpush1.msra.mxu0 0.0
    %785 = vmatprep.subr.mxu0 0.0
    %786 = vmatpush1.msra.mxu0 0.0
    %787 = vmatprep.subr.mxu0 0.0
    %788 = vmatpush1.msra.mxu0 0.0
    %789 = vmatprep.subr.mxu0 0.0
    %790 = vmatpush1.msra.mxu0 0.0
    %791 = vmatprep.subr.mxu0 0.0
    %792 = vmatpush1.msra.mxu0 0.0
    %793 = vmatprep.subr.mxu0 0.0
    %794 = vmatpush1.msra.mxu0 0.0
    %795 = vmatprep.subr.mxu0 0.0
    %796 = vmatpush1.msra.mxu0 0.0
    %797 = vmatprep.subr.mxu0 0.0
    %798 = vmatpush1.msra.mxu0 0.0
    %799 = vmatprep.subr.mxu0 0.0
    %800 = vmatpush1.msra.mxu0 0.0
    %801 = vmatprep.subr.mxu0 0.0
    %802 = vmatpush1.msra.mxu0 0.0
    %803 = vmatprep.subr.mxu0 0.0
    %804 = vmatpush1.msra.mxu0 0.0
    %805 = vmatprep.subr.mxu0 0.0
    %806 = vmatpush1.msra.mxu0 0.0
    %807 = vmatprep.subr.mxu0 0.0
    %808 = vmatpush1.msra.mxu0 0.0
    %809 = vmatprep.subr.mxu0 0.0
    %810 = vmatpush1.msra.mxu0 0.0
    %811 = vmatprep.subr.mxu0 0.0
    %812 = vmatpush1.msra.mxu0 0.0
    %813 = vmatprep.subr.mxu0 0.0
    %814 = vmatpush1.msra.mxu0 0.0
    %815 = vmatprep.subr.mxu0 0.0
    %816 = vmatpush1.msra.mxu0 0.0
    %817 = vmatprep.subr.mxu0 0.0
    %818 = vmatpush1.msra.mxu0 0.0
    %819 = vmatprep.subr.mxu0 0.0
    %820 = vmatpush1.msra.mxu0 0.0
    %821 = vmatprep.subr.mxu0 0.0
    %822 = vmatpush1.msra.mxu0 0.0
    %823 = vmatprep.subr.mxu0 0.0
    %824 = vmatpush1.msra.mxu0 0.0
    %825 = vmatprep.subr.mxu0 0.0
    %826 = vmatpush1.msra.mxu0 0.0
    %827 = vmatprep.subr.mxu0 0.0
    %828 = vmatpush1.msra.mxu0 0.0
    %829 = vmatprep.subr.mxu0 0.0
    %830 = vmatpush1.msra.mxu0 0.0
    %831 = vmatprep.subr.mxu0 0.0
    %832 = vmatpush1.msra.mxu0 0.0
    %833 = vmatprep.mubr.f32.mxu0 0.0
    %834 = vmatmul.mubr.f32.gmra.mrb[0].mxu0 %v764
    %v835 = vpop.f32.mrb[0].mxu0
    %v836 = vadd.f32 0.0, %v835
    %v837 = vpop.f32.mrb[0].mxu0
    %838 = vmatprep.mubr.f32.mxu0 0.0
    %839 = vmatmul.mubr.f32.gmra.mrb[0].mxu0 %v767
    %v840 = vpop.f32.mrb[0].mxu0
    %v841 = vadd.f32 0.0, %v840
    %v842 = vpop.f32.mrb[0].mxu0
    %843 = vdwg.mxu0
    %v845 = vsel %vm115, %v647, 0
    %v848 = vsel %vm115, %v649, 0
    %850 = vmatprep.subr.mxu0 0.0
    %851 = vmatpush1.msra.mxu0 %v650
    %852 = vmatprep.subr.mxu0 0.0
    %853 = vmatpush1.msra.mxu0 %v651
    %854 = vmatprep.subr.mxu0 0.0
    %855 = vmatpush1.msra.mxu0 0.0
    %856 = vmatprep.subr.mxu0 0.0
    %857 = vmatpush1.msra.mxu0 0.0
    %858 = vmatprep.subr.mxu0 0.0
    %859 = vmatpush1.msra.mxu0 0.0
    %860 = vmatprep.subr.mxu0 0.0
    %861 = vmatpush1.msra.mxu0 0.0
    %862 = vmatprep.subr.mxu0 0.0
    %863 = vmatpush1.msra.mxu0 0.0
    %864 = vmatprep.subr.mxu0 0.0
    %865 = vmatpush1.msra.mxu0 0.0
    %866 = vmatprep.subr.mxu0 0.0
    %867 = vmatpush1.msra.mxu0 0.0
    %868 = vmatprep.subr.mxu0 0.0
    %869 = vmatpush1.msra.mxu0 0.0
    %870 = vmatprep.subr.mxu0 0.0
    %871 = vmatpush1.msra.mxu0 0.0
    %872 = vmatprep.subr.mxu0 0.0
    %873 = vmatpush1.msra.mxu0 0.0
    %874 = vmatprep.subr.mxu0 0.0
    %875 = vmatpush1.msra.mxu0 0.0
    %876 = vmatprep.subr.mxu0 0.0
    %877 = vmatpush1.msra.mxu0 0.0
    %878 = vmatprep.subr.mxu0 0.0
    %879 = vmatpush1.msra.mxu0 0.0
    %880 = vmatprep.subr.mxu0 0.0
    %881 = vmatpush1.msra.mxu0 0.0
    %882 = vmatprep.subr.mxu0 0.0
    %883 = vmatpush1.msra.mxu0 0.0
    %884 = vmatprep.subr.mxu0 0.0
    %885 = vmatpush1.msra.mxu0 0.0
    %886 = vmatprep.subr.mxu0 0.0
    %887 = vmatpush1.msra.mxu0 0.0
    %888 = vmatprep.subr.mxu0 0.0
    %889 = vmatpush1.msra.mxu0 0.0
    %890 = vmatprep.subr.mxu0 0.0
    %891 = vmatpush1.msra.mxu0 0.0
    %892 = vmatprep.subr.mxu0 0.0
    %893 = vmatpush1.msra.mxu0 0.0
    %894 = vmatprep.subr.mxu0 0.0
    %895 = vmatpush1.msra.mxu0 0.0
    %896 = vmatprep.subr.mxu0 0.0
    %897 = vmatpush1.msra.mxu0 0.0
    %898 = vmatprep.subr.mxu0 0.0
    %899 = vmatpush1.msra.mxu0 0.0
    %900 = vmatprep.subr.mxu0 0.0
    %901 = vmatpush1.msra.mxu0 0.0
    %902 = vmatprep.subr.mxu0 0.0
    %903 = vmatpush1.msra.mxu0 0.0
    %904 = vmatprep.subr.mxu0 0.0
    %905 = vmatpush1.msra.mxu0 0.0
    %906 = vmatprep.subr.mxu0 0.0
    %907 = vmatpush1.msra.mxu0 0.0
    %908 = vmatprep.subr.mxu0 0.0
    %909 = vmatpush1.msra.mxu0 0.0
    %910 = vmatprep.subr.mxu0 0.0
    %911 = vmatpush1.msra.mxu0 0.0
    %912 = vmatprep.subr.mxu0 0.0
    %913 = vmatpush1.msra.mxu0 0.0
    %914 = vmatprep.mubr.f32.mxu0 0.0
    %915 = vmatmul.mubr.f32.gmra.mrb[0].mxu0 %v845
    %v916 = vpop.f32.mrb[0].mxu0
    %v917 = vadd.f32 %v836, %v916
    %v918 = vpop.f32.mrb[0].mxu0
    %919 = vmatprep.mubr.f32.mxu0 0.0
    %920 = vmatmul.mubr.f32.gmra.mrb[0].mxu0 %v848
    %v921 = vpop.f32.mrb[0].mxu0
    %v922 = vadd.f32 %v841, %v921
    %v923 = vpop.f32.mrb[0].mxu0
    %924 = vdwg.mxu0
    %v925 = vmul.f32 %v523, %v96
    %v926 = vmul.f32 %v527, %v96
    %v928 = vsel %vm484, %v925, 0
    %v931 = vsel %vm484, %v926, 0
    %933 = vmatprep.subr.mxu0 0.0
    %934 = vmatpush1.xpose.msra.mxu0 %v545
    %935 = vmatprep.subr.mxu0 0.0
    %936 = vmatpush1.xpose.msra.mxu0 %v547
    %937 = vmatprep.subr.mxu0 0.0
    %938 = vmatpush1.xpose.msra.mxu0 0.0
    %939 = vmatprep.subr.mxu0 0.0
    %940 = vmatpush1.xpose.msra.mxu0 0.0
    %941 = vmatprep.subr.mxu0 0.0
    %942 = vmatpush1.xpose.msra.mxu0 0.0
    %943 = vmatprep.subr.mxu0 0.0
    %944 = vmatpush1.xpose.msra.mxu0 0.0
    %945 = vmatprep.subr.mxu0 0.0
    %946 = vmatpush1.xpose.msra.mxu0 0.0
    %947 = vmatprep.subr.mxu0 0.0
    %948 = vmatpush1.xpose.msra.mxu0 0.0
    %949 = vmatprep.subr.mxu0 0.0
    %950 = vmatpush1.xpose.msra.mxu0 0.0
    %951 = vmatprep.subr.mxu0 0.0
    %952 = vmatpush1.xpose.msra.mxu0 0.0
    %953 = vmatprep.subr.mxu0 0.0
    %954 = vmatpush1.xpose.msra.mxu0 0.0
    %955 = vmatprep.subr.mxu0 0.0
    %956 = vmatpush1.xpose.msra.mxu0 0.0
    %957 = vmatprep.subr.mxu0 0.0
    %958 = vmatpush1.xpose.msra.mxu0 0.0
    %959 = vmatprep.subr.mxu0 0.0
    %960 = vmatpush1.xpose.msra.mxu0 0.0
    %961 = vmatprep.subr.mxu0 0.0
    %962 = vmatpush1.xpose.msra.mxu0 0.0
    %963 = vmatprep.subr.mxu0 0.0
    %964 = vmatpush1.xpose.msra.mxu0 0.0
    %965 = vmatprep.subr.mxu0 0.0
    %966 = vmatpush1.xpose.msra.mxu0 0.0
    %967 = vmatprep.subr.mxu0 0.0
    %968 = vmatpush1.xpose.msra.mxu0 0.0
    %969 = vmatprep.subr.mxu0 0.0
    %970 = vmatpush1.xpose.msra.mxu0 0.0
    %971 = vmatprep.subr.mxu0 0.0
    %972 = vmatpush1.xpose.msra.mxu0 0.0
    %973 = vmatprep.subr.mxu0 0.0
    %974 = vmatpush1.xpose.msra.mxu0 0.0
    %975 = vmatprep.subr.mxu0 0.0
    %976 = vmatpush1.xpose.msra.mxu0 0.0
    %977 = vmatprep.subr.mxu0 0.0
    %978 = vmatpush1.xpose.msra.mxu0 0.0
    %979 = vmatprep.subr.mxu0 0.0
    %980 = vmatpush1.xpose.msra.mxu0 0.0
    %981 = vmatprep.subr.mxu0 0.0
    %982 = vmatpush1.xpose.msra.mxu0 0.0
    %983 = vmatprep.subr.mxu0 0.0
    %984 = vmatpush1.xpose.msra.mxu0 0.0
    %985 = vmatprep.subr.mxu0 0.0
    %986 = vmatpush1.xpose.msra.mxu0 0.0
    %987 = vmatprep.subr.mxu0 0.0
    %988 = vmatpush1.xpose.msra.mxu0 0.0
    %989 = vmatprep.subr.mxu0 0.0
    %990 = vmatpush1.xpose.msra.mxu0 0.0
    %991 = vmatprep.subr.mxu0 0.0
    %992 = vmatpush1.xpose.msra.mxu0 0.0
    %993 = vmatprep.subr.mxu0 0.0
    %994 = vmatpush1.xpose.msra.mxu0 0.0
    %995 = vmatprep.subr.mxu0 0.0
    %996 = vmatpush1.xpose.msra.mxu0 0.0
    %997 = vmatprep.mubr.f32.mxu0 0.0
    %998 = vmatmul.mubr.f32.gmra.mrb[0].mxu0 %v928
    %v999 = vpop.f32.mrb[0].mxu0
    %v1000 = vadd.f32 0.0, %v999
    %v1001 = vpop.f32.mrb[0].mxu0
    %1002 = vmatprep.mubr.f32.mxu0 0.0
    %1003 = vmatmul.mubr.f32.gmra.mrb[0].mxu0 %v931
    %v1004 = vpop.f32.mrb[0].mxu0
    %v1005 = vadd.f32 0.0, %v1004
    %v1006 = vpop.f32.mrb[0].mxu0
    %1007 = vdwg.mxu0
    %v1008 = vmul.f32 %v1000, 0.25
    %v1009 = vmul.f32 %v1005, 0.25
    %v1010 = vsel %vm80, %v1008, -1e+30
    %v1011 = vsel %vm81, %v1009, -1e+30
    %v1012 = vsel %vm115, %v1010, -inf
    %1013 = vmax.xlane.f32.xlu0 %v1012
    %v1014 = vpop.xlane.xlu0 %1013
    %v1015 = vsel %vm115, %v1011, -inf
    %1016 = vmax.xlane.f32.xlu0 %v1015
    %v1017 = vpop.xlane.xlu0 %1016
    %v1018 = vsub.f32 %v1010, %v1014
    %v1019 = vsub.f32 %v1011, %v1017
    %v1020 = vmul.f32 %v1018, 1.442695
    %v1021 = vpow.pop %v1020
    %v1022 = vmul.f32 %v1019, 1.442695
    %v1023 = vpow.pop %v1022
    %v1024 = vsel %vm115, %v1021, 0.0
    %1025 = vadd.xlane.f32.xlu0 %v1024
    %v1026 = vpop.xlane.xlu0 %1025
    %v1027 = vsel %vm115, %v1023, 0.0
    %1028 = vadd.xlane.f32.xlu0 %v1027
    %v1029 = vpop.xlane.xlu0 %1028
    %v1030 = vrcp.pop %v1026
    %v1031 = vmul.f32 %v1021, %v1030
    %v1032 = vrcp.pop %v1029
    %v1033 = vmul.f32 %v1023, %v1032
    %v1034 = vmul.f32 %v525, %v96
    %v1035 = vmul.f32 %v529, %v96
    %v1037 = vsel %vm115, %v1031, 0
    %v1040 = vsel %vm115, %v1033, 0
    %1042 = vmatprep.subr.mxu0 0.0
    %1043 = vmatpush1.msra.mxu0 %v1034
    %1044 = vmatprep.subr.mxu0 0.0
    %1045 = vmatpush1.msra.mxu0 %v1035
    %1046 = vmatprep.subr.mxu0 0.0
    %1047 = vmatpush1.msra.mxu0 0.0
    %1048 = vmatprep.subr.mxu0 0.0
    %1049 = vmatpush1.msra.mxu0 0.0
    %1050 = vmatprep.subr.mxu0 0.0
    %1051 = vmatpush1.msra.mxu0 0.0
    %1052 = vmatprep.subr.mxu0 0.0
    %1053 = vmatpush1.msra.mxu0 0.0
    %1054 = vmatprep.subr.mxu0 0.0
    %1055 = vmatpush1.msra.mxu0 0.0
    %1056 = vmatprep.subr.mxu0 0.0
    %1057 = vmatpush1.msra.mxu0 0.0
    %1058 = vmatprep.subr.mxu0 0.0
    %1059 = vmatpush1.msra.mxu0 0.0
    %1060 = vmatprep.subr.mxu0 0.0
    %1061 = vmatpush1.msra.mxu0 0.0
    %1062 = vmatprep.subr.mxu0 0.0
    %1063 = vmatpush1.msra.mxu0 0.0
    %1064 = vmatprep.subr.mxu0 0.0
    %1065 = vmatpush1.msra.mxu0 0.0
    %1066 = vmatprep.subr.mxu0 0.0
    %1067 = vmatpush1.msra.mxu0 0.0
    %1068 = vmatprep.subr.mxu0 0.0
    %1069 = vmatpush1.msra.mxu0 0.0
    %1070 = vmatprep.subr.mxu0 0.0
    %1071 = vmatpush1.msra.mxu0 0.0
    %1072 = vmatprep.subr.mxu0 0.0
    %1073 = vmatpush1.msra.mxu0 0.0
    %1074 = vmatprep.subr.mxu0 0.0
    %1075 = vmatpush1.msra.mxu0 0.0
    %1076 = vmatprep.subr.mxu0 0.0
    %1077 = vmatpush1.msra.mxu0 0.0
    %1078 = vmatprep.subr.mxu0 0.0
    %1079 = vmatpush1.msra.mxu0 0.0
    %1080 = vmatprep.subr.mxu0 0.0
    %1081 = vmatpush1.msra.mxu0 0.0
    %1082 = vmatprep.subr.mxu0 0.0
    %1083 = vmatpush1.msra.mxu0 0.0
    %1084 = vmatprep.subr.mxu0 0.0
    %1085 = vmatpush1.msra.mxu0 0.0
    %1086 = vmatprep.subr.mxu0 0.0
    %1087 = vmatpush1.msra.mxu0 0.0
    %1088 = vmatprep.subr.mxu0 0.0
    %1089 = vmatpush1.msra.mxu0 0.0
    %1090 = vmatprep.subr.mxu0 0.0
    %1091 = vmatpush1.msra.mxu0 0.0
    %1092 = vmatprep.subr.mxu0 0.0
    %1093 = vmatpush1.msra.mxu0 0.0
    %1094 = vmatprep.subr.mxu0 0.0
    %1095 = vmatpush1.msra.mxu0 0.0
    %1096 = vmatprep.subr.mxu0 0.0
    %1097 = vmatpush1.msra.mxu0 0.0
    %1098 = vmatprep.subr.mxu0 0.0
    %1099 = vmatpush1.msra.mxu0 0.0
    %1100 = vmatprep.subr.mxu0 0.0
    %1101 = vmatpush1.msra.mxu0 0.0
    %1102 = vmatprep.subr.mxu0 0.0
    %1103 = vmatpush1.msra.mxu0 0.0
    %1104 = vmatprep.subr.mxu0 0.0
    %1105 = vmatpush1.msra.mxu0 0.0
    %1106 = vmatprep.mubr.f32.mxu0 0.0
    %1107 = vmatmul.mubr.f32.gmra.mrb[0].mxu0 %v1037
    %v1108 = vpop.f32.mrb[0].mxu0
    %v1109 = vadd.f32 0.0, %v1108
    %v1110 = vpop.f32.mrb[0].mxu0
    %1111 = vmatprep.mubr.f32.mxu0 0.0
    %1112 = vmatmul.mubr.f32.gmra.mrb[0].mxu0 %v1040
    %v1113 = vpop.f32.mrb[0].mxu0
    %v1114 = vadd.f32 0.0, %v1113
    %v1115 = vpop.f32.mrb[0].mxu0
    %1116 = vdwg.mxu0
    %v1117 = vadd.f32 %v917, %v1109
    %v1118 = vadd.f32 %v922, %v1114
    %v1119 = vmul.f32 %v523, %v101
    %v1120 = vmul.f32 %v527, %v101
    %v1122 = vsel %vm484, %v1119, 0
    %v1125 = vsel %vm484, %v1120, 0
    %1127 = vmatprep.subr.mxu0 0.0
    %1128 = vmatpush1.xpose.msra.mxu0 %v545
    %1129 = vmatprep.subr.mxu0 0.0
    %1130 = vmatpush1.xpose.msra.mxu0 %v547
    %1131 = vmatprep.subr.mxu0 0.0
    %1132 = vmatpush1.xpose.msra.mxu0 0.0
    %1133 = vmatprep.subr.mxu0 0.0
    %1134 = vmatpush1.xpose.msra.mxu0 0.0
    %1135 = vmatprep.subr.mxu0 0.0
    %1136 = vmatpush1.xpose.msra.mxu0 0.0
    %1137 = vmatprep.subr.mxu0 0.0
    %1138 = vmatpush1.xpose.msra.mxu0 0.0
    %1139 = vmatprep.subr.mxu0 0.0
    %1140 = vmatpush1.xpose.msra.mxu0 0.0
    %1141 = vmatprep.subr.mxu0 0.0
    %1142 = vmatpush1.xpose.msra.mxu0 0.0
    %1143 = vmatprep.subr.mxu0 0.0
    %1144 = vmatpush1.xpose.msra.mxu0 0.0
    %1145 = vmatprep.subr.mxu0 0.0
    %1146 = vmatpush1.xpose.msra.mxu0 0.0
    %1147 = vmatprep.subr.mxu0 0.0
    %1148 = vmatpush1.xpose.msra.mxu0 0.0
    %1149 = vmatprep.subr.mxu0 0.0
    %1150 = vmatpush1.xpose.msra.mxu0 0.0
    %1151 = vmatprep.subr.mxu0 0.0
    %1152 = vmatpush1.xpose.msra.mxu0 0.0
    %1153 = vmatprep.subr.mxu0 0.0
    %1154 = vmatpush1.xpose.msra.mxu0 0.0
    %1155 = vmatprep.subr.mxu0 0.0
    %1156 = vmatpush1.xpose.msra.mxu0 0.0
    %1157 = vmatprep.subr.mxu0 0.0
    %1158 = vmatpush1.xpose.msra.mxu0 0.0
    %1159 = vmatprep.subr.mxu0 0.0
    %1160 = vmatpush1.xpose.msra.mxu0 0.0
    %1161 = vmatprep.subr.mxu0 0.0
    %1162 = vmatpush1.xpose.msra.mxu0 0.0
    %1163 = vmatprep.subr.mxu0 0.0
    %1164 = vmatpush1.xpose.msra.mxu0 0.0
    %1165 = vmatprep.subr.mxu0 0.0
    %1166 = vmatpush1.xpose.msra.mxu0 0.0
    %1167 = vmatprep.subr.mxu0 0.0
    %1168 = vmatpush1.xpose.msra.mxu0 0.0
    %1169 = vmatprep.subr.mxu0 0.0
    %1170 = vmatpush1.xpose.msra.mxu0 0.0
    %1171 = vmatprep.subr.mxu0 0.0
    %1172 = vmatpush1.xpose.msra.mxu0 0.0
    %1173 = vmatprep.subr.mxu0 0.0
    %1174 = vmatpush1.xpose.msra.mxu0 0.0
    %1175 = vmatprep.subr.mxu0 0.0
    %1176 = vmatpush1.xpose.msra.mxu0 0.0
    %1177 = vmatprep.subr.mxu0 0.0
    %1178 = vmatpush1.xpose.msra.mxu0 0.0
    %1179 = vmatprep.subr.mxu0 0.0
    %1180 = vmatpush1.xpose.msra.mxu0 0.0
    %1181 = vmatprep.subr.mxu0 0.0
    %1182 = vmatpush1.xpose.msra.mxu0 0.0
    %1183 = vmatprep.subr.mxu0 0.0
    %1184 = vmatpush1.xpose.msra.mxu0 0.0
    %1185 = vmatprep.subr.mxu0 0.0
    %1186 = vmatpush1.xpose.msra.mxu0 0.0
    %1187 = vmatprep.subr.mxu0 0.0
    %1188 = vmatpush1.xpose.msra.mxu0 0.0
    %1189 = vmatprep.subr.mxu0 0.0
    %1190 = vmatpush1.xpose.msra.mxu0 0.0
    %1191 = vmatprep.mubr.f32.mxu0 0.0
    %1192 = vmatmul.mubr.f32.gmra.mrb[0].mxu0 %v1122
    %v1193 = vpop.f32.mrb[0].mxu0
    %v1194 = vadd.f32 0.0, %v1193
    %v1195 = vpop.f32.mrb[0].mxu0
    %1196 = vmatprep.mubr.f32.mxu0 0.0
    %1197 = vmatmul.mubr.f32.gmra.mrb[0].mxu0 %v1125
    %v1198 = vpop.f32.mrb[0].mxu0
    %v1199 = vadd.f32 0.0, %v1198
    %v1200 = vpop.f32.mrb[0].mxu0
    %1201 = vdwg.mxu0
    %v1202 = vmul.f32 %v1194, 0.25
    %v1203 = vmul.f32 %v1199, 0.25
    %v1204 = vsel %vm80, %v1202, -1e+30
    %v1205 = vsel %vm81, %v1203, -1e+30
    %v1206 = vsel %vm115, %v1204, -inf
    %1207 = vmax.xlane.f32.xlu0 %v1206
    %v1208 = vpop.xlane.xlu0 %1207
    %v1209 = vsel %vm115, %v1205, -inf
    %1210 = vmax.xlane.f32.xlu0 %v1209
    %v1211 = vpop.xlane.xlu0 %1210
    %v1212 = vsub.f32 %v1204, %v1208
    %v1213 = vsub.f32 %v1205, %v1211
    %v1214 = vmul.f32 %v1212, 1.442695
    %v1215 = vpow.pop %v1214
    %v1216 = vmul.f32 %v1213, 1.442695
    %v1217 = vpow.pop %v1216
    %v1218 = vsel %vm115, %v1215, 0.0
    %1219 = vadd.xlane.f32.xlu0 %v1218
    %v1220 = vpop.xlane.xlu0 %1219
    %v1221 = vsel %vm115, %v1217, 0.0
    %1222 = vadd.xlane.f32.xlu0 %v1221
    %v1223 = vpop.xlane.xlu0 %1222
    %v1224 = vrcp.pop %v1220
    %v1225 = vmul.f32 %v1215, %v1224
    %v1226 = vrcp.pop %v1223
    %v1227 = vmul.f32 %v1217, %v1226
    %v1228 = vmul.f32 %v525, %v101
    %v1229 = vmul.f32 %v529, %v101
    %v1231 = vsel %vm115, %v1225, 0
    %v1234 = vsel %vm115, %v1227, 0
    %1236 = vmatprep.subr.mxu0 0.0
    %1237 = vmatpush1.msra.mxu0 %v1228
    %1238 = vmatprep.subr.mxu0 0.0
    %1239 = vmatpush1.msra.mxu0 %v1229
    %1240 = vmatprep.subr.mxu0 0.0
    %1241 = vmatpush1.msra.mxu0 0.0
    %1242 = vmatprep.subr.mxu0 0.0
    %1243 = vmatpush1.msra.mxu0 0.0
    %1244 = vmatprep.subr.mxu0 0.0
    %1245 = vmatpush1.msra.mxu0 0.0
    %1246 = vmatprep.subr.mxu0 0.0
    %1247 = vmatpush1.msra.mxu0 0.0
    %1248 = vmatprep.subr.mxu0 0.0
    %1249 = vmatpush1.msra.mxu0 0.0
    %1250 = vmatprep.subr.mxu0 0.0
    %1251 = vmatpush1.msra.mxu0 0.0
    %1252 = vmatprep.subr.mxu0 0.0
    %1253 = vmatpush1.msra.mxu0 0.0
    %1254 = vmatprep.subr.mxu0 0.0
    %1255 = vmatpush1.msra.mxu0 0.0
    %1256 = vmatprep.subr.mxu0 0.0
    %1257 = vmatpush1.msra.mxu0 0.0
    %1258 = vmatprep.subr.mxu0 0.0
    %1259 = vmatpush1.msra.mxu0 0.0
    %1260 = vmatprep.subr.mxu0 0.0
    %1261 = vmatpush1.msra.mxu0 0.0
    %1262 = vmatprep.subr.mxu0 0.0
    %1263 = vmatpush1.msra.mxu0 0.0
    %1264 = vmatprep.subr.mxu0 0.0
    %1265 = vmatpush1.msra.mxu0 0.0
    %1266 = vmatprep.subr.mxu0 0.0
    %1267 = vmatpush1.msra.mxu0 0.0
    %1268 = vmatprep.subr.mxu0 0.0
    %1269 = vmatpush1.msra.mxu0 0.0
    %1270 = vmatprep.subr.mxu0 0.0
    %1271 = vmatpush1.msra.mxu0 0.0
    %1272 = vmatprep.subr.mxu0 0.0
    %1273 = vmatpush1.msra.mxu0 0.0
    %1274 = vmatprep.subr.mxu0 0.0
    %1275 = vmatpush1.msra.mxu0 0.0
    %1276 = vmatprep.subr.mxu0 0.0
    %1277 = vmatpush1.msra.mxu0 0.0
    %1278 = vmatprep.subr.mxu0 0.0
    %1279 = vmatpush1.msra.mxu0 0.0
    %1280 = vmatprep.subr.mxu0 0.0
    %1281 = vmatpush1.msra.mxu0 0.0
    %1282 = vmatprep.subr.mxu0 0.0
    %1283 = vmatpush1.msra.mxu0 0.0
    %1284 = vmatprep.subr.mxu0 0.0
    %1285 = vmatpush1.msra.mxu0 0.0
    %1286 = vmatprep.subr.mxu0 0.0
    %1287 = vmatpush1.msra.mxu0 0.0
    %1288 = vmatprep.subr.mxu0 0.0
    %1289 = vmatpush1.msra.mxu0 0.0
    %1290 = vmatprep.subr.mxu0 0.0
    %1291 = vmatpush1.msra.mxu0 0.0
    %1292 = vmatprep.subr.mxu0 0.0
    %1293 = vmatpush1.msra.mxu0 0.0
    %1294 = vmatprep.subr.mxu0 0.0
    %1295 = vmatpush1.msra.mxu0 0.0
    %1296 = vmatprep.subr.mxu0 0.0
    %1297 = vmatpush1.msra.mxu0 0.0
    %1298 = vmatprep.subr.mxu0 0.0
    %1299 = vmatpush1.msra.mxu0 0.0
    %1300 = vmatprep.mubr.f32.mxu0 0.0
    %1301 = vmatmul.mubr.f32.gmra.mrb[0].mxu0 %v1231
    %v1302 = vpop.f32.mrb[0].mxu0
    %v1303 = vadd.f32 0.0, %v1302
    %v1304 = vpop.f32.mrb[0].mxu0
    %1305 = vmatprep.mubr.f32.mxu0 0.0
    %1306 = vmatmul.mubr.f32.gmra.mrb[0].mxu0 %v1234
    %v1307 = vpop.f32.mrb[0].mxu0
    %v1308 = vadd.f32 0.0, %v1307
    %v1309 = vpop.f32.mrb[0].mxu0
    %1310 = vdwg.mxu0
    %v1311 = vadd.f32 %v1117, %v1303
    %v1312 = vadd.f32 %v1118, %v1308
    %v1313 = vpack.c.bf16 %v1312, %v1311
    %v1322 = vunpack.c.l.b16 %v160
    %v1323 = vunpack.c.l.b16 %v161
    %v1324 = vunpack.c.l.b16 %v162
    %v1325 = vunpack.c.l.b16 %v163
    %v1326 = vunpack.c.l.b16 %v164
    %v1327 = vunpack.c.l.b16 %v165
    %v1328 = vunpack.c.l.b16 %v166
    %v1329 = vunpack.c.l.b16 %v167
    %v1330 = vpack.c.b16 %v1323, %v1322
    %v1331 = vpack.c.b16 %v1325, %v1324
    %v1332 = vpack.c.b16 %v1327, %v1326
    %v1333 = vpack.c.b16 %v1329, %v1328
    %v1339 = vsel %vm484, %v1313, 0
    %1341 = vmatprep.subr.bf16.mxu0 0
    %1342 = vmatpush1.bf16.msra.mxu0 %v1330
    %1343 = vmatprep.subr.bf16.mxu0 0
    %1344 = vmatpush1.bf16.msra.mxu0 %v1331
    %1345 = vmatprep.subr.bf16.mxu0 0
    %1346 = vmatpush1.bf16.msra.mxu0 %v1332
    %1347 = vmatprep.subr.bf16.mxu0 0
    %1348 = vmatpush1.bf16.msra.mxu0 %v1333
    %1349 = vmatprep.subr.bf16.mxu0 0
    %1350 = vmatpush1.bf16.msra.mxu0 0
    %1351 = vmatprep.subr.bf16.mxu0 0
    %1352 = vmatpush1.bf16.msra.mxu0 0
    %1353 = vmatprep.subr.bf16.mxu0 0
    %1354 = vmatpush1.bf16.msra.mxu0 0
    %1355 = vmatprep.subr.bf16.mxu0 0
    %1356 = vmatpush1.bf16.msra.mxu0 0
    %1357 = vmatprep.subr.bf16.mxu0 0
    %1358 = vmatpush1.bf16.msra.mxu0 0
    %1359 = vmatprep.subr.bf16.mxu0 0
    %1360 = vmatpush1.bf16.msra.mxu0 0
    %1361 = vmatprep.subr.bf16.mxu0 0
    %1362 = vmatpush1.bf16.msra.mxu0 0
    %1363 = vmatprep.subr.bf16.mxu0 0
    %1364 = vmatpush1.bf16.msra.mxu0 0
    %1365 = vmatprep.subr.bf16.mxu0 0
    %1366 = vmatpush1.bf16.msra.mxu0 0
    %1367 = vmatprep.subr.bf16.mxu0 0
    %1368 = vmatpush1.bf16.msra.mxu0 0
    %1369 = vmatprep.subr.bf16.mxu0 0
    %1370 = vmatpush1.bf16.msra.mxu0 0
    %1371 = vmatprep.subr.bf16.mxu0 0
    %1372 = vmatpush1.bf16.msra.mxu0 0
    %1373 = vmatprep.mubr.bf16.mxu0 0
    %1374 = vmatmul.mubr.bf16.gmra.mrb[0].mxu0 %v1339
    %v1375 = vpop.f32.mrb[0].mxu0
    %v1376 = vadd.f32 0.0, %v1375
    %v1377 = vpop.f32.mrb[0].mxu0
    %v1378 = vpop.f32.mrb[0].mxu0
    %v1379 = vadd.f32 0.0, %v1378
    %v1380 = vpop.f32.mrb[0].mxu0
    %1381 = vdwg.mxu0
    %v1382 = vlaneseq
    %v1383 = vshrl.u32 %v1382, 7
    %v1384 = vsub.s32 2, %v1383
    %v1385 = vrot.slane %v67, %v1384
    %v1386 = vadd.f32 %v1376, %v1385
    %v1387 = vadd.f32 %v1379, %v1385
    %v1388 = vadd.f32 %v154, %v1386
    %v1389 = vadd.f32 %v157, %v1387
    %v1390 = vsel %vm484, %v1388, 0.0
    %1391 = vadd.xlane.f32.xlu0 %v1390
    %v1392 = vpop.xlane.xlu0 %1391
    %v1393 = vsel %vm484, %v1389, 0.0
    %1394 = vadd.xlane.f32.xlu0 %v1393
    %v1395 = vpop.xlane.xlu0 %1394
    %v1396 = vrcp.pop 64.0
    %v1397 = vmul.f32 %v1392, %v1396
    %v1398 = vmul.f32 %v1395, %v1396
    %v1399 = vsub.f32 %v1388, %v1397
    %v1400 = vsub.f32 %v1389, %v1398
    %v1401 = vmul.f32 %v1399, %v1399
    %v1402 = vmul.f32 %v1400, %v1400
    %v1403 = vsel %vm484, %v1401, 0.0
    %1404 = vadd.xlane.f32.xlu0 %v1403
    %v1405 = vpop.xlane.xlu0 %1404
    %v1406 = vsel %vm484, %v1402, 0.0
    %1407 = vadd.xlane.f32.xlu0 %v1406
    %v1408 = vpop.xlane.xlu0 %1407
    %v1409 = vmul.f32 %v1405, %v1396
    %v1410 = vmul.f32 %v1408, %v1396
    %v1411 = vadd.f32 %v1409, 1e-05
    %v1412 = vadd.f32 %v1410, 1e-05
    %v1413 = vrsqrt.pop %v1411
    %v1414 = vrsqrt.pop %v1412
    %v1415 = vmul.f32 %v1399, %v1413
    %v1416 = vmul.f32 %v1400, %v1414
    %v1417 = vlaneseq
    %v1418 = vshrl.u32 %v1417, 7
    %v1419 = vsub.s32 3, %v1418
    %v1420 = vrot.slane %v67, %v1419
    %v1421 = vmul.f32 %v1415, %v1420
    %v1422 = vmul.f32 %v1416, %v1420
    %v1423 = vlaneseq
    %v1424 = vshrl.u32 %v1423, 7
    %v1425 = vsub.s32 4, %v1424
    %v1426 = vrot.slane %v67, %v1425
    %v1427 = vadd.f32 %v1421, %v1426
    %v1428 = vadd.f32 %v1422, %v1426
    %v1429 = vpack.c.bf16 %v1428, %v1427
    %v1430 = vld [vmem:[#allocation6] sm:$0xff]
    %v1431 = vld [vmem:[#allocation6 + $0x8] sm:$0xff]
    %v1432 = vld [vmem:[#allocation6 + $0x10] sm:$0xff]
    %v1433 = vld [vmem:[#allocation6 + $0x18] sm:$0xff]
    %v1434 = vld [vmem:[#allocation6 + $0x20] sm:$0xff]
    %v1435 = vld [vmem:[#allocation6 + $0x28] sm:$0xff]
    %v1436 = vld [vmem:[#allocation6 + $0x30] sm:$0xff]
    %v1437 = vld [vmem:[#allocation6 + $0x38] sm:$0xff]
    %v1438 = vld [vmem:[#allocation6 + $0x40] sm:$0xff]
    %v1439 = vld [vmem:[#allocation6 + $0x48] sm:$0xff]
    %v1440 = vld [vmem:[#allocation6 + $0x50] sm:$0xff]
    %v1441 = vld [vmem:[#allocation6 + $0x58] sm:$0xff]
    %v1442 = vld [vmem:[#allocation6 + $0x60] sm:$0xff]
    %v1443 = vld [vmem:[#allocation6 + $0x68] sm:$0xff]
    %v1444 = vld [vmem:[#allocation6 + $0x70] sm:$0xff]
    %v1445 = vld [vmem:[#allocation6 + $0x78] sm:$0xff]
    %v1446 = vld [vmem:[#allocation6 + $0x80] sm:$0xff]
    %v1447 = vld [vmem:[#allocation6 + $0x88] sm:$0xff]
    %v1448 = vld [vmem:[#allocation6 + $0x90] sm:$0xff]
    %v1449 = vld [vmem:[#allocation6 + $0x98] sm:$0xff]
    %v1450 = vld [vmem:[#allocation6 + $0xa0] sm:$0xff]
    %v1451 = vld [vmem:[#allocation6 + $0xa8] sm:$0xff]
    %v1452 = vld [vmem:[#allocation6 + $0xb0] sm:$0xff]
    %v1453 = vld [vmem:[#allocation6 + $0xb8] sm:$0xff]
    %v1454 = vld [vmem:[#allocation6 + $0xc0] sm:$0xff]
    %v1455 = vld [vmem:[#allocation6 + $0xc8] sm:$0xff]
    %v1456 = vld [vmem:[#allocation6 + $0xd0] sm:$0xff]
    %v1457 = vld [vmem:[#allocation6 + $0xd8] sm:$0xff]
    %v1458 = vld [vmem:[#allocation6 + $0xe0] sm:$0xff]
    %v1459 = vld [vmem:[#allocation6 + $0xe8] sm:$0xff]
    %v1460 = vld [vmem:[#allocation6 + $0xf0] sm:$0xff]
    %v1461 = vld [vmem:[#allocation6 + $0xf8] sm:$0xff]
    %v1462 = vld [vmem:[#allocation6 + $0x100] sm:$0xff]
    %v1463 = vld [vmem:[#allocation6 + $0x108] sm:$0xff]
    %v1464 = vld [vmem:[#allocation6 + $0x110] sm:$0xff]
    %v1465 = vld [vmem:[#allocation6 + $0x118] sm:$0xff]
    %v1466 = vld [vmem:[#allocation6 + $0x120] sm:$0xff]
    %v1467 = vld [vmem:[#allocation6 + $0x128] sm:$0xff]
    %v1468 = vld [vmem:[#allocation6 + $0x130] sm:$0xff]
    %v1469 = vld [vmem:[#allocation6 + $0x138] sm:$0xff]
    %v1470 = vld [vmem:[#allocation6 + $0x140] sm:$0xff]
    %v1471 = vld [vmem:[#allocation6 + $0x148] sm:$0xff]
    %v1472 = vld [vmem:[#allocation6 + $0x150] sm:$0xff]
    %v1473 = vld [vmem:[#allocation6 + $0x158] sm:$0xff]
    %v1474 = vld [vmem:[#allocation6 + $0x160] sm:$0xff]
    %v1475 = vld [vmem:[#allocation6 + $0x168] sm:$0xff]
    %v1476 = vld [vmem:[#allocation6 + $0x170] sm:$0xff]
    %v1477 = vld [vmem:[#allocation6 + $0x178] sm:$0xff]
    %v1478 = vld [vmem:[#allocation6 + $0x180] sm:$0xff]
    %v1479 = vld [vmem:[#allocation6 + $0x188] sm:$0xff]
    %v1480 = vld [vmem:[#allocation6 + $0x190] sm:$0xff]
    %v1481 = vld [vmem:[#allocation6 + $0x198] sm:$0xff]
    %v1482 = vld [vmem:[#allocation6 + $0x1a0] sm:$0xff]
    %v1483 = vld [vmem:[#allocation6 + $0x1a8] sm:$0xff]
    %v1484 = vld [vmem:[#allocation6 + $0x1b0] sm:$0xff]
    %v1485 = vld [vmem:[#allocation6 + $0x1b8] sm:$0xff]
    %v1486 = vld [vmem:[#allocation6 + $0x1c0] sm:$0xff]
    %v1487 = vld [vmem:[#allocation6 + $0x1c8] sm:$0xff]
    %v1488 = vld [vmem:[#allocation6 + $0x1d0] sm:$0xff]
    %v1489 = vld [vmem:[#allocation6 + $0x1d8] sm:$0xff]
    %v1490 = vld [vmem:[#allocation6 + $0x1e0] sm:$0xff]
    %v1491 = vld [vmem:[#allocation6 + $0x1e8] sm:$0xff]
    %v1492 = vld [vmem:[#allocation6 + $0x1f0] sm:$0xff]
    %v1493 = vld [vmem:[#allocation6 + $0x1f8] sm:$0xff]
    %v1496 = vlaneseq
    %v1497 = vshrl.u32 %v1496, 7
    %v1498 = vsub.s32 0, %v1497
    %v1499 = vrot.slane %v424, %v1498
    %v1500 = vlaneseq
    %v1501 = vshrl.u32 %v1500, 7
    %v1502 = vsub.s32 1, %v1501
    %v1503 = vrot.slane %v424, %v1502
    %v1504 = vlaneseq
    %v1505 = vshrl.u32 %v1504, 7
    %v1506 = vsub.s32 2, %v1505
    %v1507 = vrot.slane %v424, %v1506
    %v1508 = vlaneseq
    %v1509 = vshrl.u32 %v1508, 7
    %v1510 = vsub.s32 3, %v1509
    %v1511 = vrot.slane %v424, %v1510
    %v1512 = vlaneseq
    %v1513 = vshrl.u32 %v1512, 7
    %v1514 = vsub.s32 4, %v1513
    %v1515 = vrot.slane %v424, %v1514
    %v1516 = vlaneseq
    %v1517 = vshrl.u32 %v1516, 7
    %v1518 = vsub.s32 5, %v1517
    %v1519 = vrot.slane %v424, %v1518
    %v1520 = vlaneseq
    %v1521 = vshrl.u32 %v1520, 7
    %v1522 = vsub.s32 6, %v1521
    %v1523 = vrot.slane %v424, %v1522
    %v1524 = vlaneseq
    %v1525 = vshrl.u32 %v1524, 7
    %v1526 = vsub.s32 7, %v1525
    %v1527 = vrot.slane %v424, %v1526
    %v1528 = vlaneseq
    %v1529 = vshrl.u32 %v1528, 7
    %v1530 = vsub.s32 0, %v1529
    %v1531 = vrot.slane %v426, %v1530
    %v1532 = vlaneseq
    %v1533 = vshrl.u32 %v1532, 7
    %v1534 = vsub.s32 1, %v1533
    %v1535 = vrot.slane %v426, %v1534
    %v1536 = vlaneseq
    %v1537 = vshrl.u32 %v1536, 7
    %v1538 = vsub.s32 2, %v1537
    %v1539 = vrot.slane %v426, %v1538
    %v1540 = vlaneseq
    %v1541 = vshrl.u32 %v1540, 7
    %v1542 = vsub.s32 3, %v1541
    %v1543 = vrot.slane %v426, %v1542
    %v1544 = vlaneseq
    %v1545 = vshrl.u32 %v1544, 7
    %v1546 = vsub.s32 4, %v1545
    %v1547 = vrot.slane %v426, %v1546
    %v1548 = vlaneseq
    %v1549 = vshrl.u32 %v1548, 7
    %v1550 = vsub.s32 5, %v1549
    %v1551 = vrot.slane %v426, %v1550
    %v1552 = vlaneseq
    %v1553 = vshrl.u32 %v1552, 7
    %v1554 = vsub.s32 6, %v1553
    %v1555 = vrot.slane %v426, %v1554
    %v1556 = vlaneseq
    %v1557 = vshrl.u32 %v1556, 7
    %v1558 = vsub.s32 7, %v1557
    %v1559 = vrot.slane %v426, %v1558
    %v1640 = vunpack.c.l.b16 %v1430
    %v1641 = vunpack.c.h.b16 %v1430
    %v1642 = vunpack.c.l.b16 %v1431
    %v1643 = vunpack.c.h.b16 %v1431
    %v1644 = vunpack.c.l.b16 %v1432
    %v1645 = vunpack.c.h.b16 %v1432
    %v1646 = vunpack.c.l.b16 %v1433
    %v1647 = vunpack.c.h.b16 %v1433
    %v1648 = vunpack.c.l.b16 %v1434
    %v1649 = vunpack.c.h.b16 %v1434
    %v1650 = vunpack.c.l.b16 %v1435
    %v1651 = vunpack.c.h.b16 %v1435
    %v1652 = vunpack.c.l.b16 %v1436
    %v1653 = vunpack.c.h.b16 %v1436
    %v1654 = vunpack.c.l.b16 %v1437
    %v1655 = vunpack.c.h.b16 %v1437
    %v1656 = vunpack.c.l.b16 %v1438
    %v1657 = vunpack.c.h.b16 %v1438
    %v1658 = vunpack.c.l.b16 %v1439
    %v1659 = vunpack.c.h.b16 %v1439
    %v1660 = vunpack.c.l.b16 %v1440
    %v1661 = vunpack.c.h.b16 %v1440
    %v1662 = vunpack.c.l.b16 %v1441
    %v1663 = vunpack.c.h.b16 %v1441
    %v1664 = vunpack.c.l.b16 %v1442
    %v1665 = vunpack.c.h.b16 %v1442
    %v1666 = vunpack.c.l.b16 %v1443
    %v1667 = vunpack.c.h.b16 %v1443
    %v1668 = vunpack.c.l.b16 %v1444
    %v1669 = vunpack.c.h.b16 %v1444
    %v1670 = vunpack.c.l.b16 %v1445
    %v1671 = vunpack.c.h.b16 %v1445
    %v1672 = vunpack.c.l.b16 %v1446
    %v1673 = vunpack.c.h.b16 %v1446
    %v1674 = vunpack.c.l.b16 %v1447
    %v1675 = vunpack.c.h.b16 %v1447
    %v1676 = vunpack.c.l.b16 %v1448
    %v1677 = vunpack.c.h.b16 %v1448
    %v1678 = vunpack.c.l.b16 %v1449
    %v1679 = vunpack.c.h.b16 %v1449
    %v1680 = vunpack.c.l.b16 %v1450
    %v1681 = vunpack.c.h.b16 %v1450
    %v1682 = vunpack.c.l.b16 %v1451
    %v1683 = vunpack.c.h.b16 %v1451
    %v1684 = vunpack.c.l.b16 %v1452
    %v1685 = vunpack.c.h.b16 %v1452
    %v1686 = vunpack.c.l.b16 %v1453
    %v1687 = vunpack.c.h.b16 %v1453
    %v1688 = vunpack.c.l.b16 %v1454
    %v1689 = vunpack.c.h.b16 %v1454
    %v1690 = vunpack.c.l.b16 %v1455
    %v1691 = vunpack.c.h.b16 %v1455
    %v1692 = vunpack.c.l.b16 %v1456
    %v1693 = vunpack.c.h.b16 %v1456
    %v1694 = vunpack.c.l.b16 %v1457
    %v1695 = vunpack.c.h.b16 %v1457
    %v1696 = vunpack.c.l.b16 %v1458
    %v1697 = vunpack.c.h.b16 %v1458
    %v1698 = vunpack.c.l.b16 %v1459
    %v1699 = vunpack.c.h.b16 %v1459
    %v1700 = vunpack.c.l.b16 %v1460
    %v1701 = vunpack.c.h.b16 %v1460
    %v1702 = vunpack.c.l.b16 %v1461
    %v1703 = vunpack.c.h.b16 %v1461
    %v1704 = vunpack.c.l.b16 %v1462
    %v1705 = vunpack.c.h.b16 %v1462
    %v1706 = vunpack.c.l.b16 %v1463
    %v1707 = vunpack.c.h.b16 %v1463
    %v1708 = vunpack.c.l.b16 %v1464
    %v1709 = vunpack.c.h.b16 %v1464
    %v1710 = vunpack.c.l.b16 %v1465
    %v1711 = vunpack.c.h.b16 %v1465
    %v1712 = vunpack.c.l.b16 %v1466
    %v1713 = vunpack.c.h.b16 %v1466
    %v1714 = vunpack.c.l.b16 %v1467
    %v1715 = vunpack.c.h.b16 %v1467
    %v1716 = vunpack.c.l.b16 %v1468
    %v1717 = vunpack.c.h.b16 %v1468
    %v1718 = vunpack.c.l.b16 %v1469
    %v1719 = vunpack.c.h.b16 %v1469
    %v1720 = vunpack.c.l.b16 %v1470
    %v1721 = vunpack.c.h.b16 %v1470
    %v1722 = vunpack.c.l.b16 %v1471
    %v1723 = vunpack.c.h.b16 %v1471
    %v1724 = vunpack.c.l.b16 %v1472
    %v1725 = vunpack.c.h.b16 %v1472
    %v1726 = vunpack.c.l.b16 %v1473
    %v1727 = vunpack.c.h.b16 %v1473
    %v1728 = vunpack.c.l.b16 %v1474
    %v1729 = vunpack.c.h.b16 %v1474
    %v1730 = vunpack.c.l.b16 %v1475
    %v1731 = vunpack.c.h.b16 %v1475
    %v1732 = vunpack.c.l.b16 %v1476
    %v1733 = vunpack.c.h.b16 %v1476
    %v1734 = vunpack.c.l.b16 %v1477
    %v1735 = vunpack.c.h.b16 %v1477
    %v1736 = vunpack.c.l.b16 %v1478
    %v1737 = vunpack.c.h.b16 %v1478
    %v1738 = vunpack.c.l.b16 %v1479
    %v1739 = vunpack.c.h.b16 %v1479
    %v1740 = vunpack.c.l.b16 %v1480
    %v1741 = vunpack.c.h.b16 %v1480
    %v1742 = vunpack.c.l.b16 %v1481
    %v1743 = vunpack.c.h.b16 %v1481
    %v1744 = vunpack.c.l.b16 %v1482
    %v1745 = vunpack.c.h.b16 %v1482
    %v1746 = vunpack.c.l.b16 %v1483
    %v1747 = vunpack.c.h.b16 %v1483
    %v1748 = vunpack.c.l.b16 %v1484
    %v1749 = vunpack.c.h.b16 %v1484
    %v1750 = vunpack.c.l.b16 %v1485
    %v1751 = vunpack.c.h.b16 %v1485
    %v1752 = vunpack.c.l.b16 %v1486
    %v1753 = vunpack.c.h.b16 %v1486
    %v1754 = vunpack.c.l.b16 %v1487
    %v1755 = vunpack.c.h.b16 %v1487
    %v1756 = vunpack.c.l.b16 %v1488
    %v1757 = vunpack.c.h.b16 %v1488
    %v1758 = vunpack.c.l.b16 %v1489
    %v1759 = vunpack.c.h.b16 %v1489
    %v1760 = vunpack.c.l.b16 %v1490
    %v1761 = vunpack.c.h.b16 %v1490
    %v1762 = vunpack.c.l.b16 %v1491
    %v1763 = vunpack.c.h.b16 %v1491
    %v1764 = vunpack.c.l.b16 %v1492
    %v1765 = vunpack.c.h.b16 %v1492
    %v1766 = vunpack.c.l.b16 %v1493
    %v1767 = vunpack.c.h.b16 %v1493
    %v1768 = vpack.c.b16 %v1656, %v1640
    %v1769 = vpack.c.b16 %v1657, %v1641
    %v1770 = vpack.c.b16 %v1658, %v1642
    %v1771 = vpack.c.b16 %v1659, %v1643
    %v1772 = vpack.c.b16 %v1660, %v1644
    %v1773 = vpack.c.b16 %v1661, %v1645
    %v1774 = vpack.c.b16 %v1662, %v1646
    %v1775 = vpack.c.b16 %v1663, %v1647
    %v1776 = vpack.c.b16 %v1664, %v1648
    %v1777 = vpack.c.b16 %v1665, %v1649
    %v1778 = vpack.c.b16 %v1666, %v1650
    %v1779 = vpack.c.b16 %v1667, %v1651
    %v1780 = vpack.c.b16 %v1668, %v1652
    %v1781 = vpack.c.b16 %v1669, %v1653
    %v1782 = vpack.c.b16 %v1670, %v1654
    %v1783 = vpack.c.b16 %v1671, %v1655
    %v1784 = vpack.c.b16 %v1688, %v1672
    %v1785 = vpack.c.b16 %v1689, %v1673
    %v1786 = vpack.c.b16 %v1690, %v1674
    %v1787 = vpack.c.b16 %v1691, %v1675
    %v1788 = vpack.c.b16 %v1692, %v1676
    %v1789 = vpack.c.b16 %v1693, %v1677
    %v1790 = vpack.c.b16 %v1694, %v1678
    %v1791 = vpack.c.b16 %v1695, %v1679
    %v1792 = vpack.c.b16 %v1696, %v1680
    %v1793 = vpack.c.b16 %v1697, %v1681
    %v1794 = vpack.c.b16 %v1698, %v1682
    %v1795 = vpack.c.b16 %v1699, %v1683
    %v1796 = vpack.c.b16 %v1700, %v1684
    %v1797 = vpack.c.b16 %v1701, %v1685
    %v1798 = vpack.c.b16 %v1702, %v1686
    %v1799 = vpack.c.b16 %v1703, %v1687
    %v1800 = vpack.c.b16 %v1720, %v1704
    %v1801 = vpack.c.b16 %v1721, %v1705
    %v1802 = vpack.c.b16 %v1722, %v1706
    %v1803 = vpack.c.b16 %v1723, %v1707
    %v1804 = vpack.c.b16 %v1724, %v1708
    %v1805 = vpack.c.b16 %v1725, %v1709
    %v1806 = vpack.c.b16 %v1726, %v1710
    %v1807 = vpack.c.b16 %v1727, %v1711
    %v1808 = vpack.c.b16 %v1728, %v1712
    %v1809 = vpack.c.b16 %v1729, %v1713
    %v1810 = vpack.c.b16 %v1730, %v1714
    %v1811 = vpack.c.b16 %v1731, %v1715
    %v1812 = vpack.c.b16 %v1732, %v1716
    %v1813 = vpack.c.b16 %v1733, %v1717
    %v1814 = vpack.c.b16 %v1734, %v1718
    %v1815 = vpack.c.b16 %v1735, %v1719
    %v1816 = vpack.c.b16 %v1752, %v1736
    %v1817 = vpack.c.b16 %v1753, %v1737
    %v1818 = vpack.c.b16 %v1754, %v1738
    %v1819 = vpack.c.b16 %v1755, %v1739
    %v1820 = vpack.c.b16 %v1756, %v1740
    %v1821 = vpack.c.b16 %v1757, %v1741
    %v1822 = vpack.c.b16 %v1758, %v1742
    %v1823 = vpack.c.b16 %v1759, %v1743
    %v1824 = vpack.c.b16 %v1760, %v1744
    %v1825 = vpack.c.b16 %v1761, %v1745
    %v1826 = vpack.c.b16 %v1762, %v1746
    %v1827 = vpack.c.b16 %v1763, %v1747
    %v1828 = vpack.c.b16 %v1764, %v1748
    %v1829 = vpack.c.b16 %v1765, %v1749
    %v1830 = vpack.c.b16 %v1766, %v1750
    %v1831 = vpack.c.b16 %v1767, %v1751
    %v1897 = vsel %vm484, %v1429, 0
    %1899 = vmatprep.subr.bf16.mxu0 %v1769
    %1900 = vmatpush1.bf16.msra.mxu0 %v1768
    %1901 = vmatprep.subr.bf16.mxu0 %v1785
    %1902 = vmatpush1.bf16.msra.mxu0 %v1784
    %1903 = vmatprep.subr.bf16.mxu0 %v1801
    %1904 = vmatpush1.bf16.msra.mxu0 %v1800
    %1905 = vmatprep.subr.bf16.mxu0 %v1817
    %1906 = vmatpush1.bf16.msra.mxu0 %v1816
    %1907 = vmatprep.subr.bf16.mxu0 0
    %1908 = vmatpush1.bf16.msra.mxu0 0
    %1909 = vmatprep.subr.bf16.mxu0 0
    %1910 = vmatpush1.bf16.msra.mxu0 0
    %1911 = vmatprep.subr.bf16.mxu0 0
    %1912 = vmatpush1.bf16.msra.mxu0 0
    %1913 = vmatprep.subr.bf16.mxu0 0
    %1914 = vmatpush1.bf16.msra.mxu0 0
    %1915 = vmatprep.subr.bf16.mxu0 0
    %1916 = vmatpush1.bf16.msra.mxu0 0
    %1917 = vmatprep.subr.bf16.mxu0 0
    %1918 = vmatpush1.bf16.msra.mxu0 0
    %1919 = vmatprep.subr.bf16.mxu0 0
    %1920 = vmatpush1.bf16.msra.mxu0 0
    %1921 = vmatprep.subr.bf16.mxu0 0
    %1922 = vmatpush1.bf16.msra.mxu0 0
    %1923 = vmatprep.subr.bf16.mxu0 0
    %1924 = vmatpush1.bf16.msra.mxu0 0
    %1925 = vmatprep.subr.bf16.mxu0 0
    %1926 = vmatpush1.bf16.msra.mxu0 0
    %1927 = vmatprep.subr.bf16.mxu0 0
    %1928 = vmatpush1.bf16.msra.mxu0 0
    %1929 = vmatprep.subr.bf16.mxu0 0
    %1930 = vmatpush1.bf16.msra.mxu0 0
    %1931 = vmatprep.mubr.bf16.mxu0 0
    %1932 = vmatmul.mubr.bf16.gmra.mrb[0].mxu0 %v1897
    %v1933 = vpop.f32.mrb[0].mxu0
    %v1934 = vadd.f32 %v1499, %v1933
    %v1935 = vpop.f32.mrb[0].mxu0
    %v1936 = vadd.f32 %v1503, %v1935
    %v1937 = vpop.f32.mrb[0].mxu0
    %v1938 = vadd.f32 %v1499, %v1937
    %v1939 = vpop.f32.mrb[0].mxu0
    %v1940 = vadd.f32 %v1503, %v1939
    %1941 = vdwg.mxu0
    %1942 = vmatprep.subr.bf16.mxu0 %v1771
    %1943 = vmatpush1.bf16.msra.mxu0 %v1770
    %1944 = vmatprep.subr.bf16.mxu0 %v1787
    %1945 = vmatpush1.bf16.msra.mxu0 %v1786
    %1946 = vmatprep.subr.bf16.mxu0 %v1803
    %1947 = vmatpush1.bf16.msra.mxu0 %v1802
    %1948 = vmatprep.subr.bf16.mxu0 %v1819
    %1949 = vmatpush1.bf16.msra.mxu0 %v1818
    %1950 = vmatprep.subr.bf16.mxu0 0
    %1951 = vmatpush1.bf16.msra.mxu0 0
    %1952 = vmatprep.subr.bf16.mxu0 0
    %1953 = vmatpush1.bf16.msra.mxu0 0
    %1954 = vmatprep.subr.bf16.mxu0 0
    %1955 = vmatpush1.bf16.msra.mxu0 0
    %1956 = vmatprep.subr.bf16.mxu0 0
    %1957 = vmatpush1.bf16.msra.mxu0 0
    %1958 = vmatprep.subr.bf16.mxu0 0
    %1959 = vmatpush1.bf16.msra.mxu0 0
    %1960 = vmatprep.subr.bf16.mxu0 0
    %1961 = vmatpush1.bf16.msra.mxu0 0
    %1962 = vmatprep.subr.bf16.mxu0 0
    %1963 = vmatpush1.bf16.msra.mxu0 0
    %1964 = vmatprep.subr.bf16.mxu0 0
    %1965 = vmatpush1.bf16.msra.mxu0 0
    %1966 = vmatprep.subr.bf16.mxu0 0
    %1967 = vmatpush1.bf16.msra.mxu0 0
    %1968 = vmatprep.subr.bf16.mxu0 0
    %1969 = vmatpush1.bf16.msra.mxu0 0
    %1970 = vmatprep.subr.bf16.mxu0 0
    %1971 = vmatpush1.bf16.msra.mxu0 0
    %1972 = vmatprep.subr.bf16.mxu0 0
    %1973 = vmatpush1.bf16.msra.mxu0 0
    %1974 = vmatprep.mubr.bf16.mxu0 0
    %1975 = vmatmul.mubr.bf16.gmra.mrb[0].mxu0 %v1897
    %v1976 = vpop.f32.mrb[0].mxu0
    %v1977 = vadd.f32 %v1507, %v1976
    %v1978 = vpop.f32.mrb[0].mxu0
    %v1979 = vadd.f32 %v1511, %v1978
    %v1980 = vpop.f32.mrb[0].mxu0
    %v1981 = vadd.f32 %v1507, %v1980
    %v1982 = vpop.f32.mrb[0].mxu0
    %v1983 = vadd.f32 %v1511, %v1982
    %1984 = vdwg.mxu0
    %1985 = vmatprep.subr.bf16.mxu0 %v1773
    %1986 = vmatpush1.bf16.msra.mxu0 %v1772
    %1987 = vmatprep.subr.bf16.mxu0 %v1789
    %1988 = vmatpush1.bf16.msra.mxu0 %v1788
    %1989 = vmatprep.subr.bf16.mxu0 %v1805
    %1990 = vmatpush1.bf16.msra.mxu0 %v1804
    %1991 = vmatprep.subr.bf16.mxu0 %v1821
    %1992 = vmatpush1.bf16.msra.mxu0 %v1820
    %1993 = vmatprep.subr.bf16.mxu0 0
    %1994 = vmatpush1.bf16.msra.mxu0 0
    %1995 = vmatprep.subr.bf16.mxu0 0
    %1996 = vmatpush1.bf16.msra.mxu0 0
    %1997 = vmatprep.subr.bf16.mxu0 0
    %1998 = vmatpush1.bf16.msra.mxu0 0
    %1999 = vmatprep.subr.bf16.mxu0 0
    %2000 = vmatpush1.bf16.msra.mxu0 0
    %2001 = vmatprep.subr.bf16.mxu0 0
    %2002 = vmatpush1.bf16.msra.mxu0 0
    %2003 = vmatprep.subr.bf16.mxu0 0
    %2004 = vmatpush1.bf16.msra.mxu0 0
    %2005 = vmatprep.subr.bf16.mxu0 0
    %2006 = vmatpush1.bf16.msra.mxu0 0
    %2007 = vmatprep.subr.bf16.mxu0 0
    %2008 = vmatpush1.bf16.msra.mxu0 0
    %2009 = vmatprep.subr.bf16.mxu0 0
    %2010 = vmatpush1.bf16.msra.mxu0 0
    %2011 = vmatprep.subr.bf16.mxu0 0
    %2012 = vmatpush1.bf16.msra.mxu0 0
    %2013 = vmatprep.subr.bf16.mxu0 0
    %2014 = vmatpush1.bf16.msra.mxu0 0
    %2015 = vmatprep.subr.bf16.mxu0 0
    %2016 = vmatpush1.bf16.msra.mxu0 0
    %2017 = vmatprep.mubr.bf16.mxu0 0
    %2018 = vmatmul.mubr.bf16.gmra.mrb[0].mxu0 %v1897
    %v2019 = vpop.f32.mrb[0].mxu0
    %v2020 = vadd.f32 %v1515, %v2019
    %v2021 = vpop.f32.mrb[0].mxu0
    %v2022 = vadd.f32 %v1519, %v2021
    %v2023 = vpop.f32.mrb[0].mxu0
    %v2024 = vadd.f32 %v1515, %v2023
    %v2025 = vpop.f32.mrb[0].mxu0
    %v2026 = vadd.f32 %v1519, %v2025
    %2027 = vdwg.mxu0
    %2028 = vmatprep.subr.bf16.mxu0 %v1775
    %2029 = vmatpush1.bf16.msra.mxu0 %v1774
    %2030 = vmatprep.subr.bf16.mxu0 %v1791
    %2031 = vmatpush1.bf16.msra.mxu0 %v1790
    %2032 = vmatprep.subr.bf16.mxu0 %v1807
    %2033 = vmatpush1.bf16.msra.mxu0 %v1806
    %2034 = vmatprep.subr.bf16.mxu0 %v1823
    %2035 = vmatpush1.bf16.msra.mxu0 %v1822
    %2036 = vmatprep.subr.bf16.mxu0 0
    %2037 = vmatpush1.bf16.msra.mxu0 0
    %2038 = vmatprep.subr.bf16.mxu0 0
    %2039 = vmatpush1.bf16.msra.mxu0 0
    %2040 = vmatprep.subr.bf16.mxu0 0
    %2041 = vmatpush1.bf16.msra.mxu0 0
    %2042 = vmatprep.subr.bf16.mxu0 0
    %2043 = vmatpush1.bf16.msra.mxu0 0
    %2044 = vmatprep.subr.bf16.mxu0 0
    %2045 = vmatpush1.bf16.msra.mxu0 0
    %2046 = vmatprep.subr.bf16.mxu0 0
    %2047 = vmatpush1.bf16.msra.mxu0 0
    %2048 = vmatprep.subr.bf16.mxu0 0
    %2049 = vmatpush1.bf16.msra.mxu0 0
    %2050 = vmatprep.subr.bf16.mxu0 0
    %2051 = vmatpush1.bf16.msra.mxu0 0
    %2052 = vmatprep.subr.bf16.mxu0 0
    %2053 = vmatpush1.bf16.msra.mxu0 0
    %2054 = vmatprep.subr.bf16.mxu0 0
    %2055 = vmatpush1.bf16.msra.mxu0 0
    %2056 = vmatprep.subr.bf16.mxu0 0
    %2057 = vmatpush1.bf16.msra.mxu0 0
    %2058 = vmatprep.subr.bf16.mxu0 0
    %2059 = vmatpush1.bf16.msra.mxu0 0
    %2060 = vmatprep.mubr.bf16.mxu0 0
    %2061 = vmatmul.mubr.bf16.gmra.mrb[0].mxu0 %v1897
    %v2062 = vpop.f32.mrb[0].mxu0
    %v2063 = vadd.f32 %v1523, %v2062
    %v2064 = vpop.f32.mrb[0].mxu0
    %v2065 = vadd.f32 %v1527, %v2064
    %v2066 = vpop.f32.mrb[0].mxu0
    %v2067 = vadd.f32 %v1523, %v2066
    %v2068 = vpop.f32.mrb[0].mxu0
    %v2069 = vadd.f32 %v1527, %v2068
    %2070 = vdwg.mxu0
    %2071 = vmatprep.subr.bf16.mxu0 %v1777
    %2072 = vmatpush1.bf16.msra.mxu0 %v1776
    %2073 = vmatprep.subr.bf16.mxu0 %v1793
    %2074 = vmatpush1.bf16.msra.mxu0 %v1792
    %2075 = vmatprep.subr.bf16.mxu0 %v1809
    %2076 = vmatpush1.bf16.msra.mxu0 %v1808
    %2077 = vmatprep.subr.bf16.mxu0 %v1825
    %2078 = vmatpush1.bf16.msra.mxu0 %v1824
    %2079 = vmatprep.subr.bf16.mxu0 0
    %2080 = vmatpush1.bf16.msra.mxu0 0
    %2081 = vmatprep.subr.bf16.mxu0 0
    %2082 = vmatpush1.bf16.msra.mxu0 0
    %2083 = vmatprep.subr.bf16.mxu0 0
    %2084 = vmatpush1.bf16.msra.mxu0 0
    %2085 = vmatprep.subr.bf16.mxu0 0
    %2086 = vmatpush1.bf16.msra.mxu0 0
    %2087 = vmatprep.subr.bf16.mxu0 0
    %2088 = vmatpush1.bf16.msra.mxu0 0
    %2089 = vmatprep.subr.bf16.mxu0 0
    %2090 = vmatpush1.bf16.msra.mxu0 0
    %2091 = vmatprep.subr.bf16.mxu0 0
    %2092 = vmatpush1.bf16.msra.mxu0 0
    %2093 = vmatprep.subr.bf16.mxu0 0
    %2094 = vmatpush1.bf16.msra.mxu0 0
    %2095 = vmatprep.subr.bf16.mxu0 0
    %2096 = vmatpush1.bf16.msra.mxu0 0
    %2097 = vmatprep.subr.bf16.mxu0 0
    %2098 = vmatpush1.bf16.msra.mxu0 0
    %2099 = vmatprep.subr.bf16.mxu0 0
    %2100 = vmatpush1.bf16.msra.mxu0 0
    %2101 = vmatprep.subr.bf16.mxu0 0
    %2102 = vmatpush1.bf16.msra.mxu0 0
    %2103 = vmatprep.mubr.bf16.mxu0 0
    %2104 = vmatmul.mubr.bf16.gmra.mrb[0].mxu0 %v1897
    %v2105 = vpop.f32.mrb[0].mxu0
    %v2106 = vadd.f32 %v1531, %v2105
    %v2107 = vpop.f32.mrb[0].mxu0
    %v2108 = vadd.f32 %v1535, %v2107
    %v2109 = vpop.f32.mrb[0].mxu0
    %v2110 = vadd.f32 %v1531, %v2109
    %v2111 = vpop.f32.mrb[0].mxu0
    %v2112 = vadd.f32 %v1535, %v2111
    %2113 = vdwg.mxu0
    %2114 = vmatprep.subr.bf16.mxu0 %v1779
    %2115 = vmatpush1.bf16.msra.mxu0 %v1778
    %2116 = vmatprep.subr.bf16.mxu0 %v1795
    %2117 = vmatpush1.bf16.msra.mxu0 %v1794
    %2118 = vmatprep.subr.bf16.mxu0 %v1811
    %2119 = vmatpush1.bf16.msra.mxu0 %v1810
    %2120 = vmatprep.subr.bf16.mxu0 %v1827
    %2121 = vmatpush1.bf16.msra.mxu0 %v1826
    %2122 = vmatprep.subr.bf16.mxu0 0
    %2123 = vmatpush1.bf16.msra.mxu0 0
    %2124 = vmatprep.subr.bf16.mxu0 0
    %2125 = vmatpush1.bf16.msra.mxu0 0
    %2126 = vmatprep.subr.bf16.mxu0 0
    %2127 = vmatpush1.bf16.msra.mxu0 0
    %2128 = vmatprep.subr.bf16.mxu0 0
    %2129 = vmatpush1.bf16.msra.mxu0 0
    %2130 = vmatprep.subr.bf16.mxu0 0
    %2131 = vmatpush1.bf16.msra.mxu0 0
    %2132 = vmatprep.subr.bf16.mxu0 0
    %2133 = vmatpush1.bf16.msra.mxu0 0
    %2134 = vmatprep.subr.bf16.mxu0 0
    %2135 = vmatpush1.bf16.msra.mxu0 0
    %2136 = vmatprep.subr.bf16.mxu0 0
    %2137 = vmatpush1.bf16.msra.mxu0 0
    %2138 = vmatprep.subr.bf16.mxu0 0
    %2139 = vmatpush1.bf16.msra.mxu0 0
    %2140 = vmatprep.subr.bf16.mxu0 0
    %2141 = vmatpush1.bf16.msra.mxu0 0
    %2142 = vmatprep.subr.bf16.mxu0 0
    %2143 = vmatpush1.bf16.msra.mxu0 0
    %2144 = vmatprep.subr.bf16.mxu0 0
    %2145 = vmatpush1.bf16.msra.mxu0 0
    %2146 = vmatprep.mubr.bf16.mxu0 0
    %2147 = vmatmul.mubr.bf16.gmra.mrb[0].mxu0 %v1897
    %v2148 = vpop.f32.mrb[0].mxu0
    %v2149 = vadd.f32 %v1539, %v2148
    %v2150 = vpop.f32.mrb[0].mxu0
    %v2151 = vadd.f32 %v1543, %v2150
    %v2152 = vpop.f32.mrb[0].mxu0
    %v2153 = vadd.f32 %v1539, %v2152
    %v2154 = vpop.f32.mrb[0].mxu0
    %v2155 = vadd.f32 %v1543, %v2154
    %2156 = vdwg.mxu0
    %2157 = vmatprep.subr.bf16.mxu0 %v1781
    %2158 = vmatpush1.bf16.msra.mxu0 %v1780
    %2159 = vmatprep.subr.bf16.mxu0 %v1797
    %2160 = vmatpush1.bf16.msra.mxu0 %v1796
    %2161 = vmatprep.subr.bf16.mxu0 %v1813
    %2162 = vmatpush1.bf16.msra.mxu0 %v1812
    %2163 = vmatprep.subr.bf16.mxu0 %v1829
    %2164 = vmatpush1.bf16.msra.mxu0 %v1828
    %2165 = vmatprep.subr.bf16.mxu0 0
    %2166 = vmatpush1.bf16.msra.mxu0 0
    %2167 = vmatprep.subr.bf16.mxu0 0
    %2168 = vmatpush1.bf16.msra.mxu0 0
    %2169 = vmatprep.subr.bf16.mxu0 0
    %2170 = vmatpush1.bf16.msra.mxu0 0
    %2171 = vmatprep.subr.bf16.mxu0 0
    %2172 = vmatpush1.bf16.msra.mxu0 0
    %2173 = vmatprep.subr.bf16.mxu0 0
    %2174 = vmatpush1.bf16.msra.mxu0 0
    %2175 = vmatprep.subr.bf16.mxu0 0
    %2176 = vmatpush1.bf16.msra.mxu0 0
    %2177 = vmatprep.subr.bf16.mxu0 0
    %2178 = vmatpush1.bf16.msra.mxu0 0
    %2179 = vmatprep.subr.bf16.mxu0 0
    %2180 = vmatpush1.bf16.msra.mxu0 0
    %2181 = vmatprep.subr.bf16.mxu0 0
    %2182 = vmatpush1.bf16.msra.mxu0 0
    %2183 = vmatprep.subr.bf16.mxu0 0
    %2184 = vmatpush1.bf16.msra.mxu0 0
    %2185 = vmatprep.subr.bf16.mxu0 0
    %2186 = vmatpush1.bf16.msra.mxu0 0
    %2187 = vmatprep.subr.bf16.mxu0 0
    %2188 = vmatpush1.bf16.msra.mxu0 0
    %2189 = vmatprep.mubr.bf16.mxu0 0
    %2190 = vmatmul.mubr.bf16.gmra.mrb[0].mxu0 %v1897
    %v2191 = vpop.f32.mrb[0].mxu0
    %v2192 = vadd.f32 %v1547, %v2191
    %v2193 = vpop.f32.mrb[0].mxu0
    %v2194 = vadd.f32 %v1551, %v2193
    %v2195 = vpop.f32.mrb[0].mxu0
    %v2196 = vadd.f32 %v1547, %v2195
    %v2197 = vpop.f32.mrb[0].mxu0
    %v2198 = vadd.f32 %v1551, %v2197
    %2199 = vdwg.mxu0
    %2200 = vmatprep.subr.bf16.mxu0 %v1783
    %2201 = vmatpush1.bf16.msra.mxu0 %v1782
    %2202 = vmatprep.subr.bf16.mxu0 %v1799
    %2203 = vmatpush1.bf16.msra.mxu0 %v1798
    %2204 = vmatprep.subr.bf16.mxu0 %v1815
    %2205 = vmatpush1.bf16.msra.mxu0 %v1814
    %2206 = vmatprep.subr.bf16.mxu0 %v1831
    %2207 = vmatpush1.bf16.msra.mxu0 %v1830
    %2208 = vmatprep.subr.bf16.mxu0 0
    %2209 = vmatpush1.bf16.msra.mxu0 0
    %2210 = vmatprep.subr.bf16.mxu0 0
    %2211 = vmatpush1.bf16.msra.mxu0 0
    %2212 = vmatprep.subr.bf16.mxu0 0
    %2213 = vmatpush1.bf16.msra.mxu0 0
    %2214 = vmatprep.subr.bf16.mxu0 0
    %2215 = vmatpush1.bf16.msra.mxu0 0
    %2216 = vmatprep.subr.bf16.mxu0 0
    %2217 = vmatpush1.bf16.msra.mxu0 0
    %2218 = vmatprep.subr.bf16.mxu0 0
    %2219 = vmatpush1.bf16.msra.mxu0 0
    %2220 = vmatprep.subr.bf16.mxu0 0
    %2221 = vmatpush1.bf16.msra.mxu0 0
    %2222 = vmatprep.subr.bf16.mxu0 0
    %2223 = vmatpush1.bf16.msra.mxu0 0
    %2224 = vmatprep.subr.bf16.mxu0 0
    %2225 = vmatpush1.bf16.msra.mxu0 0
    %2226 = vmatprep.subr.bf16.mxu0 0
    %2227 = vmatpush1.bf16.msra.mxu0 0
    %2228 = vmatprep.subr.bf16.mxu0 0
    %2229 = vmatpush1.bf16.msra.mxu0 0
    %2230 = vmatprep.subr.bf16.mxu0 0
    %2231 = vmatpush1.bf16.msra.mxu0 0
    %2232 = vmatprep.mubr.bf16.mxu0 0
    %2233 = vmatmul.mubr.bf16.gmra.mrb[0].mxu0 %v1897
    %v2234 = vpop.f32.mrb[0].mxu0
    %v2235 = vadd.f32 %v1555, %v2234
    %v2236 = vpop.f32.mrb[0].mxu0
    %v2237 = vadd.f32 %v1559, %v2236
    %v2238 = vpop.f32.mrb[0].mxu0
    %v2239 = vadd.f32 %v1555, %v2238
    %v2240 = vpop.f32.mrb[0].mxu0
    %v2241 = vadd.f32 %v1559, %v2240
    %2242 = vdwg.mxu0
    %v2243 = vmax.f32 %v1934, 0.0
    %v2244 = vmax.f32 %v1936, 0.0
    %v2245 = vmax.f32 %v1977, 0.0
    %v2246 = vmax.f32 %v1979, 0.0
    %v2247 = vmax.f32 %v2020, 0.0
    %v2248 = vmax.f32 %v2022, 0.0
    %v2249 = vmax.f32 %v2063, 0.0
    %v2250 = vmax.f32 %v2065, 0.0
    %v2251 = vmax.f32 %v2106, 0.0
    %v2252 = vmax.f32 %v2108, 0.0
    %v2253 = vmax.f32 %v2149, 0.0
    %v2254 = vmax.f32 %v2151, 0.0
    %v2255 = vmax.f32 %v2192, 0.0
    %v2256 = vmax.f32 %v2194, 0.0
    %v2257 = vmax.f32 %v2235, 0.0
    %v2258 = vmax.f32 %v2237, 0.0
    %v2259 = vmax.f32 %v1938, 0.0
    %v2260 = vmax.f32 %v1940, 0.0
    %v2261 = vmax.f32 %v1981, 0.0
    %v2262 = vmax.f32 %v1983, 0.0
    %v2263 = vmax.f32 %v2024, 0.0
    %v2264 = vmax.f32 %v2026, 0.0
    %v2265 = vmax.f32 %v2067, 0.0
    %v2266 = vmax.f32 %v2069, 0.0
    %v2267 = vmax.f32 %v2110, 0.0
    %v2268 = vmax.f32 %v2112, 0.0
    %v2269 = vmax.f32 %v2153, 0.0
    %v2270 = vmax.f32 %v2155, 0.0
    %v2271 = vmax.f32 %v2196, 0.0
    %v2272 = vmax.f32 %v2198, 0.0
    %v2273 = vmax.f32 %v2239, 0.0
    %v2274 = vmax.f32 %v2241, 0.0
    %v2275 = vpack.c.bf16 %v2259, %v2243
    %v2276 = vpack.c.bf16 %v2260, %v2244
    %v2277 = vpack.c.bf16 %v2261, %v2245
    %v2278 = vpack.c.bf16 %v2262, %v2246
    %v2279 = vpack.c.bf16 %v2263, %v2247
    %v2280 = vpack.c.bf16 %v2264, %v2248
    %v2281 = vpack.c.bf16 %v2265, %v2249
    %v2282 = vpack.c.bf16 %v2266, %v2250
    %v2283 = vpack.c.bf16 %v2267, %v2251
    %v2284 = vpack.c.bf16 %v2268, %v2252
    %v2285 = vpack.c.bf16 %v2269, %v2253
    %v2286 = vpack.c.bf16 %v2270, %v2254
    %v2287 = vpack.c.bf16 %v2271, %v2255
    %v2288 = vpack.c.bf16 %v2272, %v2256
    %v2289 = vpack.c.bf16 %v2273, %v2257
    %v2290 = vpack.c.bf16 %v2274, %v2258
    %v2547 = vunpack.c.l.b16 %v168
    %v2548 = vunpack.c.l.b16 %v169
    %v2549 = vunpack.c.l.b16 %v170
    %v2550 = vunpack.c.l.b16 %v171
    %v2551 = vunpack.c.l.b16 %v172
    %v2552 = vunpack.c.l.b16 %v173
    %v2553 = vunpack.c.l.b16 %v174
    %v2554 = vunpack.c.l.b16 %v175
    %v2555 = vunpack.c.l.b16 %v176
    %v2556 = vunpack.c.l.b16 %v177
    %v2557 = vunpack.c.l.b16 %v178
    %v2558 = vunpack.c.l.b16 %v179
    %v2559 = vunpack.c.l.b16 %v180
    %v2560 = vunpack.c.l.b16 %v181
    %v2561 = vunpack.c.l.b16 %v182
    %v2562 = vunpack.c.l.b16 %v183
    %v2563 = vunpack.c.l.b16 %v184
    %v2564 = vunpack.c.l.b16 %v185
    %v2565 = vunpack.c.l.b16 %v186
    %v2566 = vunpack.c.l.b16 %v187
    %v2567 = vunpack.c.l.b16 %v188
    %v2568 = vunpack.c.l.b16 %v189
    %v2569 = vunpack.c.l.b16 %v190
    %v2570 = vunpack.c.l.b16 %v191
    %v2571 = vunpack.c.l.b16 %v192
    %v2572 = vunpack.c.l.b16 %v193
    %v2573 = vunpack.c.l.b16 %v194
    %v2574 = vunpack.c.l.b16 %v195
    %v2575 = vunpack.c.l.b16 %v196
    %v2576 = vunpack.c.l.b16 %v197
    %v2577 = vunpack.c.l.b16 %v198
    %v2578 = vunpack.c.l.b16 %v199
    %v2579 = vunpack.c.l.b16 %v200
    %v2580 = vunpack.c.l.b16 %v201
    %v2581 = vunpack.c.l.b16 %v202
    %v2582 = vunpack.c.l.b16 %v203
    %v2583 = vunpack.c.l.b16 %v204
    %v2584 = vunpack.c.l.b16 %v205
    %v2585 = vunpack.c.l.b16 %v206
    %v2586 = vunpack.c.l.b16 %v207
    %v2587 = vunpack.c.l.b16 %v208
    %v2588 = vunpack.c.l.b16 %v209
    %v2589 = vunpack.c.l.b16 %v210
    %v2590 = vunpack.c.l.b16 %v211
    %v2591 = vunpack.c.l.b16 %v212
    %v2592 = vunpack.c.l.b16 %v213
    %v2593 = vunpack.c.l.b16 %v214
    %v2594 = vunpack.c.l.b16 %v215
    %v2595 = vunpack.c.l.b16 %v216
    %v2596 = vunpack.c.l.b16 %v217
    %v2597 = vunpack.c.l.b16 %v218
    %v2598 = vunpack.c.l.b16 %v219
    %v2599 = vunpack.c.l.b16 %v220
    %v2600 = vunpack.c.l.b16 %v221
    %v2601 = vunpack.c.l.b16 %v222
    %v2602 = vunpack.c.l.b16 %v223
    %v2603 = vunpack.c.l.b16 %v224
    %v2604 = vunpack.c.l.b16 %v225
    %v2605 = vunpack.c.l.b16 %v226
    %v2606 = vunpack.c.l.b16 %v227
    %v2607 = vunpack.c.l.b16 %v228
    %v2608 = vunpack.c.l.b16 %v229
    %v2609 = vunpack.c.l.b16 %v230
    %v2610 = vunpack.c.l.b16 %v231
    %v2611 = vunpack.c.l.b16 %v232
    %v2612 = vunpack.c.l.b16 %v233
    %v2613 = vunpack.c.l.b16 %v234
    %v2614 = vunpack.c.l.b16 %v235
    %v2615 = vunpack.c.l.b16 %v236
    %v2616 = vunpack.c.l.b16 %v237
    %v2617 = vunpack.c.l.b16 %v238
    %v2618 = vunpack.c.l.b16 %v239
    %v2619 = vunpack.c.l.b16 %v240
    %v2620 = vunpack.c.l.b16 %v241
    %v2621 = vunpack.c.l.b16 %v242
    %v2622 = vunpack.c.l.b16 %v243
    %v2623 = vunpack.c.l.b16 %v244
    %v2624 = vunpack.c.l.b16 %v245
    %v2625 = vunpack.c.l.b16 %v246
    %v2626 = vunpack.c.l.b16 %v247
    %v2627 = vunpack.c.l.b16 %v248
    %v2628 = vunpack.c.l.b16 %v249
    %v2629 = vunpack.c.l.b16 %v250
    %v2630 = vunpack.c.l.b16 %v251
    %v2631 = vunpack.c.l.b16 %v252
    %v2632 = vunpack.c.l.b16 %v253
    %v2633 = vunpack.c.l.b16 %v254
    %v2634 = vunpack.c.l.b16 %v255
    %v2635 = vunpack.c.l.b16 %v256
    %v2636 = vunpack.c.l.b16 %v257
    %v2637 = vunpack.c.l.b16 %v258
    %v2638 = vunpack.c.l.b16 %v259
    %v2639 = vunpack.c.l.b16 %v260
    %v2640 = vunpack.c.l.b16 %v261
    %v2641 = vunpack.c.l.b16 %v262
    %v2642 = vunpack.c.l.b16 %v263
    %v2643 = vunpack.c.l.b16 %v264
    %v2644 = vunpack.c.l.b16 %v265
    %v2645 = vunpack.c.l.b16 %v266
    %v2646 = vunpack.c.l.b16 %v267
    %v2647 = vunpack.c.l.b16 %v268
    %v2648 = vunpack.c.l.b16 %v269
    %v2649 = vunpack.c.l.b16 %v270
    %v2650 = vunpack.c.l.b16 %v271
    %v2651 = vunpack.c.l.b16 %v272
    %v2652 = vunpack.c.l.b16 %v273
    %v2653 = vunpack.c.l.b16 %v274
    %v2654 = vunpack.c.l.b16 %v275
    %v2655 = vunpack.c.l.b16 %v276
    %v2656 = vunpack.c.l.b16 %v277
    %v2657 = vunpack.c.l.b16 %v278
    %v2658 = vunpack.c.l.b16 %v279
    %v2659 = vunpack.c.l.b16 %v280
    %v2660 = vunpack.c.l.b16 %v281
    %v2661 = vunpack.c.l.b16 %v282
    %v2662 = vunpack.c.l.b16 %v283
    %v2663 = vunpack.c.l.b16 %v284
    %v2664 = vunpack.c.l.b16 %v285
    %v2665 = vunpack.c.l.b16 %v286
    %v2666 = vunpack.c.l.b16 %v287
    %v2667 = vunpack.c.l.b16 %v288
    %v2668 = vunpack.c.l.b16 %v289
    %v2669 = vunpack.c.l.b16 %v290
    %v2670 = vunpack.c.l.b16 %v291
    %v2671 = vunpack.c.l.b16 %v292
    %v2672 = vunpack.c.l.b16 %v293
    %v2673 = vunpack.c.l.b16 %v294
    %v2674 = vunpack.c.l.b16 %v295
    %v2675 = vunpack.c.l.b16 %v296
    %v2676 = vunpack.c.l.b16 %v297
    %v2677 = vunpack.c.l.b16 %v298
    %v2678 = vunpack.c.l.b16 %v299
    %v2679 = vunpack.c.l.b16 %v300
    %v2680 = vunpack.c.l.b16 %v301
    %v2681 = vunpack.c.l.b16 %v302
    %v2682 = vunpack.c.l.b16 %v303
    %v2683 = vunpack.c.l.b16 %v304
    %v2684 = vunpack.c.l.b16 %v305
    %v2685 = vunpack.c.l.b16 %v306
    %v2686 = vunpack.c.l.b16 %v307
    %v2687 = vunpack.c.l.b16 %v308
    %v2688 = vunpack.c.l.b16 %v309
    %v2689 = vunpack.c.l.b16 %v310
    %v2690 = vunpack.c.l.b16 %v311
    %v2691 = vunpack.c.l.b16 %v312
    %v2692 = vunpack.c.l.b16 %v313
    %v2693 = vunpack.c.l.b16 %v314
    %v2694 = vunpack.c.l.b16 %v315
    %v2695 = vunpack.c.l.b16 %v316
    %v2696 = vunpack.c.l.b16 %v317
    %v2697 = vunpack.c.l.b16 %v318
    %v2698 = vunpack.c.l.b16 %v319
    %v2699 = vunpack.c.l.b16 %v320
    %v2700 = vunpack.c.l.b16 %v321
    %v2701 = vunpack.c.l.b16 %v322
    %v2702 = vunpack.c.l.b16 %v323
    %v2703 = vunpack.c.l.b16 %v324
    %v2704 = vunpack.c.l.b16 %v325
    %v2705 = vunpack.c.l.b16 %v326
    %v2706 = vunpack.c.l.b16 %v327
    %v2707 = vunpack.c.l.b16 %v328
    %v2708 = vunpack.c.l.b16 %v329
    %v2709 = vunpack.c.l.b16 %v330
    %v2710 = vunpack.c.l.b16 %v331
    %v2711 = vunpack.c.l.b16 %v332
    %v2712 = vunpack.c.l.b16 %v333
    %v2713 = vunpack.c.l.b16 %v334
    %v2714 = vunpack.c.l.b16 %v335
    %v2715 = vunpack.c.l.b16 %v336
    %v2716 = vunpack.c.l.b16 %v337
    %v2717 = vunpack.c.l.b16 %v338
    %v2718 = vunpack.c.l.b16 %v339
    %v2719 = vunpack.c.l.b16 %v340
    %v2720 = vunpack.c.l.b16 %v341
    %v2721 = vunpack.c.l.b16 %v342
    %v2722 = vunpack.c.l.b16 %v343
    %v2723 = vunpack.c.l.b16 %v344
    %v2724 = vunpack.c.l.b16 %v345
    %v2725 = vunpack.c.l.b16 %v346
    %v2726 = vunpack.c.l.b16 %v347
    %v2727 = vunpack.c.l.b16 %v348
    %v2728 = vunpack.c.l.b16 %v349
    %v2729 = vunpack.c.l.b16 %v350
    %v2730 = vunpack.c.l.b16 %v351
    %v2731 = vunpack.c.l.b16 %v352
    %v2732 = vunpack.c.l.b16 %v353
    %v2733 = vunpack.c.l.b16 %v354
    %v2734 = vunpack.c.l.b16 %v355
    %v2735 = vunpack.c.l.b16 %v356
    %v2736 = vunpack.c.l.b16 %v357
    %v2737 = vunpack.c.l.b16 %v358
    %v2738 = vunpack.c.l.b16 %v359
    %v2739 = vunpack.c.l.b16 %v360
    %v2740 = vunpack.c.l.b16 %v361
    %v2741 = vunpack.c.l.b16 %v362
    %v2742 = vunpack.c.l.b16 %v363
    %v2743 = vunpack.c.l.b16 %v364
    %v2744 = vunpack.c.l.b16 %v365
    %v2745 = vunpack.c.l.b16 %v366
    %v2746 = vunpack.c.l.b16 %v367
    %v2747 = vunpack.c.l.b16 %v368
    %v2748 = vunpack.c.l.b16 %v369
    %v2749 = vunpack.c.l.b16 %v370
    %v2750 = vunpack.c.l.b16 %v371
    %v2751 = vunpack.c.l.b16 %v372
    %v2752 = vunpack.c.l.b16 %v373
    %v2753 = vunpack.c.l.b16 %v374
    %v2754 = vunpack.c.l.b16 %v375
    %v2755 = vunpack.c.l.b16 %v376
    %v2756 = vunpack.c.l.b16 %v377
    %v2757 = vunpack.c.l.b16 %v378
    %v2758 = vunpack.c.l.b16 %v379
    %v2759 = vunpack.c.l.b16 %v380
    %v2760 = vunpack.c.l.b16 %v381
    %v2761 = vunpack.c.l.b16 %v382
    %v2762 = vunpack.c.l.b16 %v383
    %v2763 = vunpack.c.l.b16 %v384
    %v2764 = vunpack.c.l.b16 %v385
    %v2765 = vunpack.c.l.b16 %v386
    %v2766 = vunpack.c.l.b16 %v387
    %v2767 = vunpack.c.l.b16 %v388
    %v2768 = vunpack.c.l.b16 %v389
    %v2769 = vunpack.c.l.b16 %v390
    %v2770 = vunpack.c.l.b16 %v391
    %v2771 = vunpack.c.l.b16 %v392
    %v2772 = vunpack.c.l.b16 %v393
    %v2773 = vunpack.c.l.b16 %v394
    %v2774 = vunpack.c.l.b16 %v395
    %v2775 = vunpack.c.l.b16 %v396
    %v2776 = vunpack.c.l.b16 %v397
    %v2777 = vunpack.c.l.b16 %v398
    %v2778 = vunpack.c.l.b16 %v399
    %v2779 = vunpack.c.l.b16 %v400
    %v2780 = vunpack.c.l.b16 %v401
    %v2781 = vunpack.c.l.b16 %v402
    %v2782 = vunpack.c.l.b16 %v403
    %v2783 = vunpack.c.l.b16 %v404
    %v2784 = vunpack.c.l.b16 %v405
    %v2785 = vunpack.c.l.b16 %v406
    %v2786 = vunpack.c.l.b16 %v407
    %v2787 = vunpack.c.l.b16 %v408
    %v2788 = vunpack.c.l.b16 %v409
    %v2789 = vunpack.c.l.b16 %v410
    %v2790 = vunpack.c.l.b16 %v411
    %v2791 = vunpack.c.l.b16 %v412
    %v2792 = vunpack.c.l.b16 %v413
    %v2793 = vunpack.c.l.b16 %v414
    %v2794 = vunpack.c.l.b16 %v415
    %v2795 = vunpack.c.l.b16 %v416
    %v2796 = vunpack.c.l.b16 %v417
    %v2797 = vunpack.c.l.b16 %v418
    %v2798 = vunpack.c.l.b16 %v419
    %v2799 = vunpack.c.l.b16 %v420
    %v2800 = vunpack.c.l.b16 %v421
    %v2801 = vunpack.c.l.b16 %v422
    %v2802 = vunpack.c.l.b16 %v423
    %v2803 = vpack.c.b16 %v2548, %v2547
    %v2804 = vpack.c.b16 %v2550, %v2549
    %v2805 = vpack.c.b16 %v2552, %v2551
    %v2806 = vpack.c.b16 %v2554, %v2553
    %v2807 = vpack.c.b16 %v2556, %v2555
    %v2808 = vpack.c.b16 %v2558, %v2557
    %v2809 = vpack.c.b16 %v2560, %v2559
    %v2810 = vpack.c.b16 %v2562, %v2561
    %v2811 = vpack.c.b16 %v2564, %v2563
    %v2812 = vpack.c.b16 %v2566, %v2565
    %v2813 = vpack.c.b16 %v2568, %v2567
    %v2814 = vpack.c.b16 %v2570, %v2569
    %v2815 = vpack.c.b16 %v2572, %v2571
    %v2816 = vpack.c.b16 %v2574, %v2573
    %v2817 = vpack.c.b16 %v2576, %v2575
    %v2818 = vpack.c.b16 %v2578, %v2577
    %v2819 = vpack.c.b16 %v2580, %v2579
    %v2820 = vpack.c.b16 %v2582, %v2581
    %v2821 = vpack.c.b16 %v2584, %v2583
    %v2822 = vpack.c.b16 %v2586, %v2585
    %v2823 = vpack.c.b16 %v2588, %v2587
    %v2824 = vpack.c.b16 %v2590, %v2589
    %v2825 = vpack.c.b16 %v2592, %v2591
    %v2826 = vpack.c.b16 %v2594, %v2593
    %v2827 = vpack.c.b16 %v2596, %v2595
    %v2828 = vpack.c.b16 %v2598, %v2597
    %v2829 = vpack.c.b16 %v2600, %v2599
    %v2830 = vpack.c.b16 %v2602, %v2601
    %v2831 = vpack.c.b16 %v2604, %v2603
    %v2832 = vpack.c.b16 %v2606, %v2605
    %v2833 = vpack.c.b16 %v2608, %v2607
    %v2834 = vpack.c.b16 %v2610, %v2609
    %v2835 = vpack.c.b16 %v2612, %v2611
    %v2836 = vpack.c.b16 %v2614, %v2613
    %v2837 = vpack.c.b16 %v2616, %v2615
    %v2838 = vpack.c.b16 %v2618, %v2617
    %v2839 = vpack.c.b16 %v2620, %v2619
    %v2840 = vpack.c.b16 %v2622, %v2621
    %v2841 = vpack.c.b16 %v2624, %v2623
    %v2842 = vpack.c.b16 %v2626, %v2625
    %v2843 = vpack.c.b16 %v2628, %v2627
    %v2844 = vpack.c.b16 %v2630, %v2629
    %v2845 = vpack.c.b16 %v2632, %v2631
    %v2846 = vpack.c.b16 %v2634, %v2633
    %v2847 = vpack.c.b16 %v2636, %v2635
    %v2848 = vpack.c.b16 %v2638, %v2637
    %v2849 = vpack.c.b16 %v2640, %v2639
    %v2850 = vpack.c.b16 %v2642, %v2641
    %v2851 = vpack.c.b16 %v2644, %v2643
    %v2852 = vpack.c.b16 %v2646, %v2645
    %v2853 = vpack.c.b16 %v2648, %v2647
    %v2854 = vpack.c.b16 %v2650, %v2649
    %v2855 = vpack.c.b16 %v2652, %v2651
    %v2856 = vpack.c.b16 %v2654, %v2653
    %v2857 = vpack.c.b16 %v2656, %v2655
    %v2858 = vpack.c.b16 %v2658, %v2657
    %v2859 = vpack.c.b16 %v2660, %v2659
    %v2860 = vpack.c.b16 %v2662, %v2661
    %v2861 = vpack.c.b16 %v2664, %v2663
    %v2862 = vpack.c.b16 %v2666, %v2665
    %v2863 = vpack.c.b16 %v2668, %v2667
    %v2864 = vpack.c.b16 %v2670, %v2669
    %v2865 = vpack.c.b16 %v2672, %v2671
    %v2866 = vpack.c.b16 %v2674, %v2673
    %v2867 = vpack.c.b16 %v2676, %v2675
    %v2868 = vpack.c.b16 %v2678, %v2677
    %v2869 = vpack.c.b16 %v2680, %v2679
    %v2870 = vpack.c.b16 %v2682, %v2681
    %v2871 = vpack.c.b16 %v2684, %v2683
    %v2872 = vpack.c.b16 %v2686, %v2685
    %v2873 = vpack.c.b16 %v2688, %v2687
    %v2874 = vpack.c.b16 %v2690, %v2689
    %v2875 = vpack.c.b16 %v2692, %v2691
    %v2876 = vpack.c.b16 %v2694, %v2693
    %v2877 = vpack.c.b16 %v2696, %v2695
    %v2878 = vpack.c.b16 %v2698, %v2697
    %v2879 = vpack.c.b16 %v2700, %v2699
    %v2880 = vpack.c.b16 %v2702, %v2701
    %v2881 = vpack.c.b16 %v2704, %v2703
    %v2882 = vpack.c.b16 %v2706, %v2705
    %v2883 = vpack.c.b16 %v2708, %v2707
    %v2884 = vpack.c.b16 %v2710, %v2709
    %v2885 = vpack.c.b16 %v2712, %v2711
    %v2886 = vpack.c.b16 %v2714, %v2713
    %v2887 = vpack.c.b16 %v2716, %v2715
    %v2888 = vpack.c.b16 %v2718, %v2717
    %v2889 = vpack.c.b16 %v2720, %v2719
    %v2890 = vpack.c.b16 %v2722, %v2721
    %v2891 = vpack.c.b16 %v2724, %v2723
    %v2892 = vpack.c.b16 %v2726, %v2725
    %v2893 = vpack.c.b16 %v2728, %v2727
    %v2894 = vpack.c.b16 %v2730, %v2729
    %v2895 = vpack.c.b16 %v2732, %v2731
    %v2896 = vpack.c.b16 %v2734, %v2733
    %v2897 = vpack.c.b16 %v2736, %v2735
    %v2898 = vpack.c.b16 %v2738, %v2737
    %v2899 = vpack.c.b16 %v2740, %v2739
    %v2900 = vpack.c.b16 %v2742, %v2741
    %v2901 = vpack.c.b16 %v2744, %v2743
    %v2902 = vpack.c.b16 %v2746, %v2745
    %v2903 = vpack.c.b16 %v2748, %v2747
    %v2904 = vpack.c.b16 %v2750, %v2749
    %v2905 = vpack.c.b16 %v2752, %v2751
    %v2906 = vpack.c.b16 %v2754, %v2753
    %v2907 = vpack.c.b16 %v2756, %v2755
    %v2908 = vpack.c.b16 %v2758, %v2757
    %v2909 = vpack.c.b16 %v2760, %v2759
    %v2910 = vpack.c.b16 %v2762, %v2761
    %v2911 = vpack.c.b16 %v2764, %v2763
    %v2912 = vpack.c.b16 %v2766, %v2765
    %v2913 = vpack.c.b16 %v2768, %v2767
    %v2914 = vpack.c.b16 %v2770, %v2769
    %v2915 = vpack.c.b16 %v2772, %v2771
    %v2916 = vpack.c.b16 %v2774, %v2773
    %v2917 = vpack.c.b16 %v2776, %v2775
    %v2918 = vpack.c.b16 %v2778, %v2777
    %v2919 = vpack.c.b16 %v2780, %v2779
    %v2920 = vpack.c.b16 %v2782, %v2781
    %v2921 = vpack.c.b16 %v2784, %v2783
    %v2922 = vpack.c.b16 %v2786, %v2785
    %v2923 = vpack.c.b16 %v2788, %v2787
    %v2924 = vpack.c.b16 %v2790, %v2789
    %v2925 = vpack.c.b16 %v2792, %v2791
    %v2926 = vpack.c.b16 %v2794, %v2793
    %v2927 = vpack.c.b16 %v2796, %v2795
    %v2928 = vpack.c.b16 %v2798, %v2797
    %v2929 = vpack.c.b16 %v2800, %v2799
    %v2930 = vpack.c.b16 %v2802, %v2801
    %3059 = vmatprep.subr.bf16.mxu0 0
    %3060 = vmatpush1.bf16.msra.mxu0 %v2803
    %3061 = vmatprep.subr.bf16.mxu0 0
    %3062 = vmatpush1.bf16.msra.mxu0 %v2804
    %3063 = vmatprep.subr.bf16.mxu0 0
    %3064 = vmatpush1.bf16.msra.mxu0 %v2805
    %3065 = vmatprep.subr.bf16.mxu0 0
    %3066 = vmatpush1.bf16.msra.mxu0 %v2806
    %3067 = vmatprep.subr.bf16.mxu0 0
    %3068 = vmatpush1.bf16.msra.mxu0 %v2807
    %3069 = vmatprep.subr.bf16.mxu0 0
    %3070 = vmatpush1.bf16.msra.mxu0 %v2808
    %3071 = vmatprep.subr.bf16.mxu0 0
    %3072 = vmatpush1.bf16.msra.mxu0 %v2809
    %3073 = vmatprep.subr.bf16.mxu0 0
    %3074 = vmatpush1.bf16.msra.mxu0 %v2810
    %3075 = vmatprep.subr.bf16.mxu0 0
    %3076 = vmatpush1.bf16.msra.mxu0 %v2811
    %3077 = vmatprep.subr.bf16.mxu0 0
    %3078 = vmatpush1.bf16.msra.mxu0 %v2812
    %3079 = vmatprep.subr.bf16.mxu0 0
    %3080 = vmatpush1.bf16.msra.mxu0 %v2813
    %3081 = vmatprep.subr.bf16.mxu0 0
    %3082 = vmatpush1.bf16.msra.mxu0 %v2814
    %3083 = vmatprep.subr.bf16.mxu0 0
    %3084 = vmatpush1.bf16.msra.mxu0 %v2815
    %3085 = vmatprep.subr.bf16.mxu0 0
    %3086 = vmatpush1.bf16.msra.mxu0 %v2816
    %3087 = vmatprep.subr.bf16.mxu0 0
    %3088 = vmatpush1.bf16.msra.mxu0 %v2817
    %3089 = vmatprep.subr.bf16.mxu0 0
    %3090 = vmatpush1.bf16.msra.mxu0 %v2818
    %3091 = vmatprep.mubr.bf16.mxu0 %v2276
    %3092 = vmatmul.mubr.bf16.gmra.mrb[0].mxu0 %v2275
    %v3093 = vpop.f32.mrb[0].mxu0
    %v3094 = vadd.f32 0.0, %v3093
    %v3095 = vpop.f32.mrb[0].mxu0
    %v3096 = vpop.f32.mrb[0].mxu0
    %v3097 = vadd.f32 0.0, %v3096
    %v3098 = vpop.f32.mrb[0].mxu0
    %3099 = vdwg.mxu0
    %3100 = vmatprep.subr.bf16.mxu0 0
    %3101 = vmatpush1.bf16.msra.mxu0 %v2819
    %3102 = vmatprep.subr.bf16.mxu0 0
    %3103 = vmatpush1.bf16.msra.mxu0 %v2820
    %3104 = vmatprep.subr.bf16.mxu0 0
    %3105 = vmatpush1.bf16.msra.mxu0 %v2821
    %3106 = vmatprep.subr.bf16.mxu0 0
    %3107 = vmatpush1.bf16.msra.mxu0 %v2822
    %3108 = vmatprep.subr.bf16.mxu0 0
    %3109 = vmatpush1.bf16.msra.mxu0 %v2823
    %3110 = vmatprep.subr.bf16.mxu0 0
    %3111 = vmatpush1.bf16.msra.mxu0 %v2824
    %3112 = vmatprep.subr.bf16.mxu0 0
    %3113 = vmatpush1.bf16.msra.mxu0 %v2825
    %3114 = vmatprep.subr.bf16.mxu0 0
    %3115 = vmatpush1.bf16.msra.mxu0 %v2826
    %3116 = vmatprep.subr.bf16.mxu0 0
    %3117 = vmatpush1.bf16.msra.mxu0 %v2827
    %3118 = vmatprep.subr.bf16.mxu0 0
    %3119 = vmatpush1.bf16.msra.mxu0 %v2828
    %3120 = vmatprep.subr.bf16.mxu0 0
    %3121 = vmatpush1.bf16.msra.mxu0 %v2829
    %3122 = vmatprep.subr.bf16.mxu0 0
    %3123 = vmatpush1.bf16.msra.mxu0 %v2830
    %3124 = vmatprep.subr.bf16.mxu0 0
    %3125 = vmatpush1.bf16.msra.mxu0 %v2831
    %3126 = vmatprep.subr.bf16.mxu0 0
    %3127 = vmatpush1.bf16.msra.mxu0 %v2832
    %3128 = vmatprep.subr.bf16.mxu0 0
    %3129 = vmatpush1.bf16.msra.mxu0 %v2833
    %3130 = vmatprep.subr.bf16.mxu0 0
    %3131 = vmatpush1.bf16.msra.mxu0 %v2834
    %3132 = vmatprep.mubr.bf16.mxu0 %v2278
    %3133 = vmatmul.mubr.bf16.gmra.mrb[0].mxu0 %v2277
    %v3134 = vpop.f32.mrb[0].mxu0
    %v3135 = vadd.f32 %v3094, %v3134
    %v3136 = vpop.f32.mrb[0].mxu0
    %v3137 = vpop.f32.mrb[0].mxu0
    %v3138 = vadd.f32 %v3097, %v3137
    %v3139 = vpop.f32.mrb[0].mxu0
    %3140 = vdwg.mxu0
    %3141 = vmatprep.subr.bf16.mxu0 0
    %3142 = vmatpush1.bf16.msra.mxu0 %v2835
    %3143 = vmatprep.subr.bf16.mxu0 0
    %3144 = vmatpush1.bf16.msra.mxu0 %v2836
    %3145 = vmatprep.subr.bf16.mxu0 0
    %3146 = vmatpush1.bf16.msra.mxu0 %v2837
    %3147 = vmatprep.subr.bf16.mxu0 0
    %3148 = vmatpush1.bf16.msra.mxu0 %v2838
    %3149 = vmatprep.subr.bf16.mxu0 0
    %3150 = vmatpush1.bf16.msra.mxu0 %v2839
    %3151 = vmatprep.subr.bf16.mxu0 0
    %3152 = vmatpush1.bf16.msra.mxu0 %v2840
    %3153 = vmatprep.subr.bf16.mxu0 0
    %3154 = vmatpush1.bf16.msra.mxu0 %v2841
    %3155 = vmatprep.subr.bf16.mxu0 0
    %3156 = vmatpush1.bf16.msra.mxu0 %v2842
    %3157 = vmatprep.subr.bf16.mxu0 0
    %3158 = vmatpush1.bf16.msra.mxu0 %v2843
    %3159 = vmatprep.subr.bf16.mxu0 0
    %3160 = vmatpush1.bf16.msra.mxu0 %v2844
    %3161 = vmatprep.subr.bf16.mxu0 0
    %3162 = vmatpush1.bf16.msra.mxu0 %v2845
    %3163 = vmatprep.subr.bf16.mxu0 0
    %3164 = vmatpush1.bf16.msra.mxu0 %v2846
    %3165 = vmatprep.subr.bf16.mxu0 0
    %3166 = vmatpush1.bf16.msra.mxu0 %v2847
    %3167 = vmatprep.subr.bf16.mxu0 0
    %3168 = vmatpush1.bf16.msra.mxu0 %v2848
    %3169 = vmatprep.subr.bf16.mxu0 0
    %3170 = vmatpush1.bf16.msra.mxu0 %v2849
    %3171 = vmatprep.subr.bf16.mxu0 0
    %3172 = vmatpush1.bf16.msra.mxu0 %v2850
    %3173 = vmatprep.mubr.bf16.mxu0 %v2280
    %3174 = vmatmul.mubr.bf16.gmra.mrb[0].mxu0 %v2279
    %v3175 = vpop.f32.mrb[0].mxu0
    %v3176 = vadd.f32 %v3135, %v3175
    %v3177 = vpop.f32.mrb[0].mxu0
    %v3178 = vpop.f32.mrb[0].mxu0
    %v3179 = vadd.f32 %v3138, %v3178
    %v3180 = vpop.f32.mrb[0].mxu0
    %3181 = vdwg.mxu0
    %3182 = vmatprep.subr.bf16.mxu0 0
    %3183 = vmatpush1.bf16.msra.mxu0 %v2851
    %3184 = vmatprep.subr.bf16.mxu0 0
    %3185 = vmatpush1.bf16.msra.mxu0 %v2852
    %3186 = vmatprep.subr.bf16.mxu0 0
    %3187 = vmatpush1.bf16.msra.mxu0 %v2853
    %3188 = vmatprep.subr.bf16.mxu0 0
    %3189 = vmatpush1.bf16.msra.mxu0 %v2854
    %3190 = vmatprep.subr.bf16.mxu0 0
    %3191 = vmatpush1.bf16.msra.mxu0 %v2855
    %3192 = vmatprep.subr.bf16.mxu0 0
    %3193 = vmatpush1.bf16.msra.mxu0 %v2856
    %3194 = vmatprep.subr.bf16.mxu0 0
    %3195 = vmatpush1.bf16.msra.mxu0 %v2857
    %3196 = vmatprep.subr.bf16.mxu0 0
    %3197 = vmatpush1.bf16.msra.mxu0 %v2858
    %3198 = vmatprep.subr.bf16.mxu0 0
    %3199 = vmatpush1.bf16.msra.mxu0 %v2859
    %3200 = vmatprep.subr.bf16.mxu0 0
    %3201 = vmatpush1.bf16.msra.mxu0 %v2860
    %3202 = vmatprep.subr.bf16.mxu0 0
    %3203 = vmatpush1.bf16.msra.mxu0 %v2861
    %3204 = vmatprep.subr.bf16.mxu0 0
    %3205 = vmatpush1.bf16.msra.mxu0 %v2862
    %3206 = vmatprep.subr.bf16.mxu0 0
    %3207 = vmatpush1.bf16.msra.mxu0 %v2863
    %3208 = vmatprep.subr.bf16.mxu0 0
    %3209 = vmatpush1.bf16.msra.mxu0 %v2864
    %3210 = vmatprep.subr.bf16.mxu0 0
    %3211 = vmatpush1.bf16.msra.mxu0 %v2865
    %3212 = vmatprep.subr.bf16.mxu0 0
    %3213 = vmatpush1.bf16.msra.mxu0 %v2866
    %3214 = vmatprep.mubr.bf16.mxu0 %v2282
    %3215 = vmatmul.mubr.bf16.gmra.mrb[0].mxu0 %v2281
    %v3216 = vpop.f32.mrb[0].mxu0
    %v3217 = vadd.f32 %v3176, %v3216
    %v3218 = vpop.f32.mrb[0].mxu0
    %v3219 = vpop.f32.mrb[0].mxu0
    %v3220 = vadd.f32 %v3179, %v3219
    %v3221 = vpop.f32.mrb[0].mxu0
    %3222 = vdwg.mxu0
    %3223 = vmatprep.subr.bf16.mxu0 0
    %3224 = vmatpush1.bf16.msra.mxu0 %v2867
    %3225 = vmatprep.subr.bf16.mxu0 0
    %3226 = vmatpush1.bf16.msra.mxu0 %v2868
    %3227 = vmatprep.subr.bf16.mxu0 0
    %3228 = vmatpush1.bf16.msra.mxu0 %v2869
    %3229 = vmatprep.subr.bf16.mxu0 0
    %3230 = vmatpush1.bf16.msra.mxu0 %v2870
    %3231 = vmatprep.subr.bf16.mxu0 0
    %3232 = vmatpush1.bf16.msra.mxu0 %v2871
    %3233 = vmatprep.subr.bf16.mxu0 0
    %3234 = vmatpush1.bf16.msra.mxu0 %v2872
    %3235 = vmatprep.subr.bf16.mxu0 0
    %3236 = vmatpush1.bf16.msra.mxu0 %v2873
    %3237 = vmatprep.subr.bf16.mxu0 0
    %3238 = vmatpush1.bf16.msra.mxu0 %v2874
    %3239 = vmatprep.subr.bf16.mxu0 0
    %3240 = vmatpush1.bf16.msra.mxu0 %v2875
    %3241 = vmatprep.subr.bf16.mxu0 0
    %3242 = vmatpush1.bf16.msra.mxu0 %v2876
    %3243 = vmatprep.subr.bf16.mxu0 0
    %3244 = vmatpush1.bf16.msra.mxu0 %v2877
    %3245 = vmatprep.subr.bf16.mxu0 0
    %3246 = vmatpush1.bf16.msra.mxu0 %v2878
    %3247 = vmatprep.subr.bf16.mxu0 0
    %3248 = vmatpush1.bf16.msra.mxu0 %v2879
    %3249 = vmatprep.subr.bf16.mxu0 0
    %3250 = vmatpush1.bf16.msra.mxu0 %v2880
    %3251 = vmatprep.subr.bf16.mxu0 0
    %3252 = vmatpush1.bf16.msra.mxu0 %v2881
    %3253 = vmatprep.subr.bf16.mxu0 0
    %3254 = vmatpush1.bf16.msra.mxu0 %v2882
    %3255 = vmatprep.mubr.bf16.mxu0 %v2284
    %3256 = vmatmul.mubr.bf16.gmra.mrb[0].mxu0 %v2283
    %v3257 = vpop.f32.mrb[0].mxu0
    %v3258 = vadd.f32 %v3217, %v3257
    %v3259 = vpop.f32.mrb[0].mxu0
    %v3260 = vpop.f32.mrb[0].mxu0
    %v3261 = vadd.f32 %v3220, %v3260
    %v3262 = vpop.f32.mrb[0].mxu0
    %3263 = vdwg.mxu0
    %3264 = vmatprep.subr.bf16.mxu0 0
    %3265 = vmatpush1.bf16.msra.mxu0 %v2883
    %3266 = vmatprep.subr.bf16.mxu0 0
    %3267 = vmatpush1.bf16.msra.mxu0 %v2884
    %3268 = vmatprep.subr.bf16.mxu0 0
    %3269 = vmatpush1.bf16.msra.mxu0 %v2885
    %3270 = vmatprep.subr.bf16.mxu0 0
    %3271 = vmatpush1.bf16.msra.mxu0 %v2886
    %3272 = vmatprep.subr.bf16.mxu0 0
    %3273 = vmatpush1.bf16.msra.mxu0 %v2887
    %3274 = vmatprep.subr.bf16.mxu0 0
    %3275 = vmatpush1.bf16.msra.mxu0 %v2888
    %3276 = vmatprep.subr.bf16.mxu0 0
    %3277 = vmatpush1.bf16.msra.mxu0 %v2889
    %3278 = vmatprep.subr.bf16.mxu0 0
    %3279 = vmatpush1.bf16.msra.mxu0 %v2890
    %3280 = vmatprep.subr.bf16.mxu0 0
    %3281 = vmatpush1.bf16.msra.mxu0 %v2891
    %3282 = vmatprep.subr.bf16.mxu0 0
    %3283 = vmatpush1.bf16.msra.mxu0 %v2892
    %3284 = vmatprep.subr.bf16.mxu0 0
    %3285 = vmatpush1.bf16.msra.mxu0 %v2893
    %3286 = vmatprep.subr.bf16.mxu0 0
    %3287 = vmatpush1.bf16.msra.mxu0 %v2894
    %3288 = vmatprep.subr.bf16.mxu0 0
    %3289 = vmatpush1.bf16.msra.mxu0 %v2895
    %3290 = vmatprep.subr.bf16.mxu0 0
    %3291 = vmatpush1.bf16.msra.mxu0 %v2896
    %3292 = vmatprep.subr.bf16.mxu0 0
    %3293 = vmatpush1.bf16.msra.mxu0 %v2897
    %3294 = vmatprep.subr.bf16.mxu0 0
    %3295 = vmatpush1.bf16.msra.mxu0 %v2898
    %3296 = vmatprep.mubr.bf16.mxu0 %v2286
    %3297 = vmatmul.mubr.bf16.gmra.mrb[0].mxu0 %v2285
    %v3298 = vpop.f32.mrb[0].mxu0
    %v3299 = vadd.f32 %v3258, %v3298
    %v3300 = vpop.f32.mrb[0].mxu0
    %v3301 = vpop.f32.mrb[0].mxu0
    %v3302 = vadd.f32 %v3261, %v3301
    %v3303 = vpop.f32.mrb[0].mxu0
    %3304 = vdwg.mxu0
    %3305 = vmatprep.subr.bf16.mxu0 0
    %3306 = vmatpush1.bf16.msra.mxu0 %v2899
    %3307 = vmatprep.subr.bf16.mxu0 0
    %3308 = vmatpush1.bf16.msra.mxu0 %v2900
    %3309 = vmatprep.subr.bf16.mxu0 0
    %3310 = vmatpush1.bf16.msra.mxu0 %v2901
    %3311 = vmatprep.subr.bf16.mxu0 0
    %3312 = vmatpush1.bf16.msra.mxu0 %v2902
    %3313 = vmatprep.subr.bf16.mxu0 0
    %3314 = vmatpush1.bf16.msra.mxu0 %v2903
    %3315 = vmatprep.subr.bf16.mxu0 0
    %3316 = vmatpush1.bf16.msra.mxu0 %v2904
    %3317 = vmatprep.subr.bf16.mxu0 0
    %3318 = vmatpush1.bf16.msra.mxu0 %v2905
    %3319 = vmatprep.subr.bf16.mxu0 0
    %3320 = vmatpush1.bf16.msra.mxu0 %v2906
    %3321 = vmatprep.subr.bf16.mxu0 0
    %3322 = vmatpush1.bf16.msra.mxu0 %v2907
    %3323 = vmatprep.subr.bf16.mxu0 0
    %3324 = vmatpush1.bf16.msra.mxu0 %v2908
    %3325 = vmatprep.subr.bf16.mxu0 0
    %3326 = vmatpush1.bf16.msra.mxu0 %v2909
    %3327 = vmatprep.subr.bf16.mxu0 0
    %3328 = vmatpush1.bf16.msra.mxu0 %v2910
    %3329 = vmatprep.subr.bf16.mxu0 0
    %3330 = vmatpush1.bf16.msra.mxu0 %v2911
    %3331 = vmatprep.subr.bf16.mxu0 0
    %3332 = vmatpush1.bf16.msra.mxu0 %v2912
    %3333 = vmatprep.subr.bf16.mxu0 0
    %3334 = vmatpush1.bf16.msra.mxu0 %v2913
    %3335 = vmatprep.subr.bf16.mxu0 0
    %3336 = vmatpush1.bf16.msra.mxu0 %v2914
    %3337 = vmatprep.mubr.bf16.mxu0 %v2288
    %3338 = vmatmul.mubr.bf16.gmra.mrb[0].mxu0 %v2287
    %v3339 = vpop.f32.mrb[0].mxu0
    %v3340 = vadd.f32 %v3299, %v3339
    %v3341 = vpop.f32.mrb[0].mxu0
    %v3342 = vpop.f32.mrb[0].mxu0
    %v3343 = vadd.f32 %v3302, %v3342
    %v3344 = vpop.f32.mrb[0].mxu0
    %3345 = vdwg.mxu0
    %3346 = vmatprep.subr.bf16.mxu0 0
    %3347 = vmatpush1.bf16.msra.mxu0 %v2915
    %3348 = vmatprep.subr.bf16.mxu0 0
    %3349 = vmatpush1.bf16.msra.mxu0 %v2916
    %3350 = vmatprep.subr.bf16.mxu0 0
    %3351 = vmatpush1.bf16.msra.mxu0 %v2917
    %3352 = vmatprep.subr.bf16.mxu0 0
    %3353 = vmatpush1.bf16.msra.mxu0 %v2918
    %3354 = vmatprep.subr.bf16.mxu0 0
    %3355 = vmatpush1.bf16.msra.mxu0 %v2919
    %3356 = vmatprep.subr.bf16.mxu0 0
    %3357 = vmatpush1.bf16.msra.mxu0 %v2920
    %3358 = vmatprep.subr.bf16.mxu0 0
    %3359 = vmatpush1.bf16.msra.mxu0 %v2921
    %3360 = vmatprep.subr.bf16.mxu0 0
    %3361 = vmatpush1.bf16.msra.mxu0 %v2922
    %3362 = vmatprep.subr.bf16.mxu0 0
    %3363 = vmatpush1.bf16.msra.mxu0 %v2923
    %3364 = vmatprep.subr.bf16.mxu0 0
    %3365 = vmatpush1.bf16.msra.mxu0 %v2924
    %3366 = vmatprep.subr.bf16.mxu0 0
    %3367 = vmatpush1.bf16.msra.mxu0 %v2925
    %3368 = vmatprep.subr.bf16.mxu0 0
    %3369 = vmatpush1.bf16.msra.mxu0 %v2926
    %3370 = vmatprep.subr.bf16.mxu0 0
    %3371 = vmatpush1.bf16.msra.mxu0 %v2927
    %3372 = vmatprep.subr.bf16.mxu0 0
    %3373 = vmatpush1.bf16.msra.mxu0 %v2928
    %3374 = vmatprep.subr.bf16.mxu0 0
    %3375 = vmatpush1.bf16.msra.mxu0 %v2929
    %3376 = vmatprep.subr.bf16.mxu0 0
    %3377 = vmatpush1.bf16.msra.mxu0 %v2930
    %3378 = vmatprep.mubr.bf16.mxu0 %v2290
    %3379 = vmatmul.mubr.bf16.gmra.mrb[0].mxu0 %v2289
    %v3380 = vpop.f32.mrb[0].mxu0
    %v3381 = vadd.f32 %v3340, %v3380
    %v3382 = vpop.f32.mrb[0].mxu0
    %v3383 = vpop.f32.mrb[0].mxu0
    %v3384 = vadd.f32 %v3343, %v3383
    %v3385 = vpop.f32.mrb[0].mxu0
    %3386 = vdwg.mxu0
    %v3387 = vlaneseq
    %v3388 = vshrl.u32 %v3387, 7
    %v3389 = vsub.s32 5, %v3388
    %v3390 = vrot.slane %v67, %v3389
    %v3391 = vadd.f32 %v3381, %v3390
    %v3392 = vadd.f32 %v3384, %v3390
    %v3393 = vadd.f32 %v1427, %v3391
    %v3394 = vadd.f32 %v1428, %v3392
    %v3395 = vsel %vm484, %v3393, 0.0
    %3396 = vadd.xlane.f32.xlu0 %v3395
    %v3397 = vpop.xlane.xlu0 %3396
    %v3398 = vsel %vm484, %v3394, 0.0
    %3399 = vadd.xlane.f32.xlu0 %v3398
    %v3400 = vpop.xlane.xlu0 %3399
    %v3401 = vmul.f32 %v3397, %v1396
    %v3402 = vmul.f32 %v3400, %v1396
    %v3403 = vsub.f32 %v3393, %v3401
    %v3404 = vsub.f32 %v3394, %v3402
    %v3405 = vmul.f32 %v3403, %v3403
    %v3406 = vmul.f32 %v3404, %v3404
    %v3407 = vsel %vm484, %v3405, 0.0
    %3408 = vadd.xlane.f32.xlu0 %v3407
    %v3409 = vpop.xlane.xlu0 %3408
    %v3410 = vsel %vm484, %v3406, 0.0
    %3411 = vadd.xlane.f32.xlu0 %v3410
    %v3412 = vpop.xlane.xlu0 %3411
    %v3413 = vmul.f32 %v3409, %v1396
    %v3414 = vmul.f32 %v3412, %v1396
    %v3415 = vadd.f32 %v3413, 1e-05
    %v3416 = vadd.f32 %v3414, 1e-05
    %v3417 = vrsqrt.pop %v3415
    %v3418 = vrsqrt.pop %v3416
    %v3419 = vmul.f32 %v3403, %v3417
    %v3420 = vmul.f32 %v3404, %v3418
    %v3421 = vlaneseq
    %v3422 = vshrl.u32 %v3421, 7
    %v3423 = vsub.s32 6, %v3422
    %v3424 = vrot.slane %v67, %v3423
    %v3425 = vmul.f32 %v3419, %v3424
    %v3426 = vmul.f32 %v3420, %v3424
    %v3427 = vlaneseq
    %v3428 = vshrl.u32 %v3427, 7
    %v3429 = vsub.s32 7, %v3428
    %v3430 = vrot.slane %v67, %v3429
    %v3431 = vadd.f32 %v3425, %v3430
    %v3432 = vadd.f32 %v3426, %v3430
    %s3433 = scalar_lea.vmem %s5, 1
    %v3434 = vld [vmem:[%s3433] ss:$2 sm:$0xff]
    %s3435 = scalar_lea.vmem %s5, 17
    %v3436 = vld [vmem:[%s3435] ss:$2 sm:$0xff]
    %v3437 = vpack.c.bf16 %v3432, %v3431
    %v3438 = vld [vmem:[#allocation2 + $0x50] sm:$0xff]
    %v3439 = vld [vmem:[#allocation2 + $0x58] sm:$0xff]
    %v3440 = vld [vmem:[#allocation2 + $0x60] sm:$0xff]
    %v3441 = vld [vmem:[#allocation2 + $0x68] sm:$0xff]
    %v3442 = vld [vmem:[#allocation2 + $0x70] sm:$0xff]
    %v3443 = vld [vmem:[#allocation2 + $0x78] sm:$0xff]
    %v3444 = vld [vmem:[#allocation2 + $0x80] sm:$0xff]
    %v3445 = vld [vmem:[#allocation2 + $0x88] sm:$0xff]
    %v3446 = vlaneseq
    %v3447 = vshrl.u32 %v3446, 7
    %v3448 = vsub.s32 0, %v3447
    %v3449 = vrot.slane %v69, %v3448
    %v3450 = vlaneseq
    %v3451 = vshrl.u32 %v3450, 7
    %v3452 = vsub.s32 0, %v3451
    %v3453 = vrot.slane %v70, %v3452
    %v3462 = vunpack.c.l.b16 %v3438
    %v3463 = vunpack.c.h.b16 %v3438
    %v3464 = vunpack.c.l.b16 %v3439
    %v3465 = vunpack.c.h.b16 %v3439
    %v3466 = vunpack.c.l.b16 %v3440
    %v3467 = vunpack.c.h.b16 %v3440
    %v3468 = vunpack.c.l.b16 %v3441
    %v3469 = vunpack.c.h.b16 %v3441
    %v3470 = vunpack.c.l.b16 %v3442
    %v3471 = vunpack.c.h.b16 %v3442
    %v3472 = vunpack.c.l.b16 %v3443
    %v3473 = vunpack.c.h.b16 %v3443
    %v3474 = vunpack.c.l.b16 %v3444
    %v3475 = vunpack.c.h.b16 %v3444
    %v3476 = vunpack.c.l.b16 %v3445
    %v3477 = vunpack.c.h.b16 %v3445
    %v3478 = vpack.c.b16 %v3464, %v3462
    %v3479 = vpack.c.b16 %v3465, %v3463
    %v3480 = vpack.c.b16 %v3468, %v3466
    %v3481 = vpack.c.b16 %v3469, %v3467
    %v3482 = vpack.c.b16 %v3472, %v3470
    %v3483 = vpack.c.b16 %v3473, %v3471
    %v3484 = vpack.c.b16 %v3476, %v3474
    %v3485 = vpack.c.b16 %v3477, %v3475
    %v3495 = vsel %vm484, %v3437, 0
    %3497 = vmatprep.subr.bf16.mxu0 %v3479
    %3498 = vmatpush1.bf16.msra.mxu0 %v3478
    %3499 = vmatprep.subr.bf16.mxu0 %v3481
    %3500 = vmatpush1.bf16.msra.mxu0 %v3480
    %3501 = vmatprep.subr.bf16.mxu0 %v3483
    %3502 = vmatpush1.bf16.msra.mxu0 %v3482
    %3503 = vmatprep.subr.bf16.mxu0 %v3485
    %3504 = vmatpush1.bf16.msra.mxu0 %v3484
    %3505 = vmatprep.subr.bf16.mxu0 0
    %3506 = vmatpush1.bf16.msra.mxu0 0
    %3507 = vmatprep.subr.bf16.mxu0 0
    %3508 = vmatpush1.bf16.msra.mxu0 0
    %3509 = vmatprep.subr.bf16.mxu0 0
    %3510 = vmatpush1.bf16.msra.mxu0 0
    %3511 = vmatprep.subr.bf16.mxu0 0
    %3512 = vmatpush1.bf16.msra.mxu0 0
    %3513 = vmatprep.subr.bf16.mxu0 0
    %3514 = vmatpush1.bf16.msra.mxu0 0
    %3515 = vmatprep.subr.bf16.mxu0 0
    %3516 = vmatpush1.bf16.msra.mxu0 0
    %3517 = vmatprep.subr.bf16.mxu0 0
    %3518 = vmatpush1.bf16.msra.mxu0 0
    %3519 = vmatprep.subr.bf16.mxu0 0
    %3520 = vmatpush1.bf16.msra.mxu0 0
    %3521 = vmatprep.subr.bf16.mxu0 0
    %3522 = vmatpush1.bf16.msra.mxu0 0
    %3523 = vmatprep.subr.bf16.mxu0 0
    %3524 = vmatpush1.bf16.msra.mxu0 0
    %3525 = vmatprep.subr.bf16.mxu0 0
    %3526 = vmatpush1.bf16.msra.mxu0 0
    %3527 = vmatprep.subr.bf16.mxu0 0
    %3528 = vmatpush1.bf16.msra.mxu0 0
    %3529 = vmatprep.mubr.bf16.mxu0 0
    %3530 = vmatmul.mubr.bf16.gmra.mrb[0].mxu0 %v3495
    %v3531 = vpop.f32.mrb[0].mxu0
    %v3532 = vadd.f32 %v3449, %v3531
    %v3533 = vpop.f32.mrb[0].mxu0
    %v3534 = vadd.f32 %v3453, %v3533
    %v3535 = vpop.f32.mrb[0].mxu0
    %v3536 = vadd.f32 %v3449, %v3535
    %v3537 = vpop.f32.mrb[0].mxu0
    %v3538 = vadd.f32 %v3453, %v3537
    %3539 = vdwg.mxu0
    %v3540 = vmul.f32 %v3532, %v86
    %v3541 = vmul.f32 %v3536, %v86
    %3544 = vrot.lane.b32.xlu0 %v3532, 64
    %v3545 = vpop.permute.xlu0 %3544
    %3546 = vrot.lane.b32.xlu0 %v3536, 64
    %v3547 = vpop.permute.xlu0 %3546
    %v3549 = vsel %vm484, %v3540, 0
    %v3552 = vsel %vm484, %v3541, 0
    %v3554 = vsel %vm484, %v3545, 0
    %v3556 = vsel %vm484, %v3547, 0
    %3558 = vmatprep.subr.mxu0 0.0
    %3559 = vmatpush1.xpose.msra.mxu0 %v3554
    %3560 = vmatprep.subr.mxu0 0.0
    %3561 = vmatpush1.xpose.msra.mxu0 %v3556
    %3562 = vmatprep.subr.mxu0 0.0
    %3563 = vmatpush1.xpose.msra.mxu0 0.0
    %3564 = vmatprep.subr.mxu0 0.0
    %3565 = vmatpush1.xpose.msra.mxu0 0.0
    %3566 = vmatprep.subr.mxu0 0.0
    %3567 = vmatpush1.xpose.msra.mxu0 0.0
    %3568 = vmatprep.subr.mxu0 0.0
    %3569 = vmatpush1.xpose.msra.mxu0 0.0
    %3570 = vmatprep.subr.mxu0 0.0
    %3571 = vmatpush1.xpose.msra.mxu0 0.0
    %3572 = vmatprep.subr.mxu0 0.0
    %3573 = vmatpush1.xpose.msra.mxu0 0.0
    %3574 = vmatprep.subr.mxu0 0.0
    %3575 = vmatpush1.xpose.msra.mxu0 0.0
    %3576 = vmatprep.subr.mxu0 0.0
    %3577 = vmatpush1.xpose.msra.mxu0 0.0
    %3578 = vmatprep.subr.mxu0 0.0
    %3579 = vmatpush1.xpose.msra.mxu0 0.0
    %3580 = vmatprep.subr.mxu0 0.0
    %3581 = vmatpush1.xpose.msra.mxu0 0.0
    %3582 = vmatprep.subr.mxu0 0.0
    %3583 = vmatpush1.xpose.msra.mxu0 0.0
    %3584 = vmatprep.subr.mxu0 0.0
    %3585 = vmatpush1.xpose.msra.mxu0 0.0
    %3586 = vmatprep.subr.mxu0 0.0
    %3587 = vmatpush1.xpose.msra.mxu0 0.0
    %3588 = vmatprep.subr.mxu0 0.0
    %3589 = vmatpush1.xpose.msra.mxu0 0.0
    %3590 = vmatprep.subr.mxu0 0.0
    %3591 = vmatpush1.xpose.msra.mxu0 0.0
    %3592 = vmatprep.subr.mxu0 0.0
    %3593 = vmatpush1.xpose.msra.mxu0 0.0
    %3594 = vmatprep.subr.mxu0 0.0
    %3595 = vmatpush1.xpose.msra.mxu0 0.0
    %3596 = vmatprep.subr.mxu0 0.0
    %3597 = vmatpush1.xpose.msra.mxu0 0.0
    %3598 = vmatprep.subr.mxu0 0.0
    %3599 = vmatpush1.xpose.msra.mxu0 0.0
    %3600 = vmatprep.subr.mxu0 0.0
    %3601 = vmatpush1.xpose.msra.mxu0 0.0
    %3602 = vmatprep.subr.mxu0 0.0
    %3603 = vmatpush1.xpose.msra.mxu0 0.0
    %3604 = vmatprep.subr.mxu0 0.0
    %3605 = vmatpush1.xpose.msra.mxu0 0.0
    %3606 = vmatprep.subr.mxu0 0.0
    %3607 = vmatpush1.xpose.msra.mxu0 0.0
    %3608 = vmatprep.subr.mxu0 0.0
    %3609 = vmatpush1.xpose.msra.mxu0 0.0
    %3610 = vmatprep.subr.mxu0 0.0
    %3611 = vmatpush1.xpose.msra.mxu0 0.0
    %3612 = vmatprep.subr.mxu0 0.0
    %3613 = vmatpush1.xpose.msra.mxu0 0.0
    %3614 = vmatprep.subr.mxu0 0.0
    %3615 = vmatpush1.xpose.msra.mxu0 0.0
    %3616 = vmatprep.subr.mxu0 0.0
    %3617 = vmatpush1.xpose.msra.mxu0 0.0
    %3618 = vmatprep.subr.mxu0 0.0
    %3619 = vmatpush1.xpose.msra.mxu0 0.0
    %3620 = vmatprep.subr.mxu0 0.0
    %3621 = vmatpush1.xpose.msra.mxu0 0.0
    %3622 = vmatprep.mubr.f32.mxu0 0.0
    %3623 = vmatmul.mubr.f32.gmra.mrb[0].mxu0 %v3549
    %v3624 = vpop.f32.mrb[0].mxu0
    %v3625 = vadd.f32 0.0, %v3624
    %v3626 = vpop.f32.mrb[0].mxu0
    %3627 = vmatprep.mubr.f32.mxu0 0.0
    %3628 = vmatmul.mubr.f32.gmra.mrb[0].mxu0 %v3552
    %v3629 = vpop.f32.mrb[0].mxu0
    %v3630 = vadd.f32 0.0, %v3629
    %v3631 = vpop.f32.mrb[0].mxu0
    %3632 = vdwg.mxu0
    %v3633 = vmul.f32 %v3625, 0.25
    %v3634 = vmul.f32 %v3630, 0.25
    %v3635 = vsel %vm80, %v3633, -1e+30
    %v3636 = vsel %vm81, %v3634, -1e+30
    %v3637 = vsel %vm115, %v3635, -inf
    %3638 = vmax.xlane.f32.xlu0 %v3637
    %v3639 = vpop.xlane.xlu0 %3638
    %v3640 = vsel %vm115, %v3636, -inf
    %3641 = vmax.xlane.f32.xlu0 %v3640
    %v3642 = vpop.xlane.xlu0 %3641
    %v3643 = vsub.f32 %v3635, %v3639
    %v3644 = vsub.f32 %v3636, %v3642
    %v3645 = vmul.f32 %v3643, 1.442695
    %v3646 = vpow.pop %v3645
    %v3647 = vmul.f32 %v3644, 1.442695
    %v3648 = vpow.pop %v3647
    %v3649 = vsel %vm115, %v3646, 0.0
    %3650 = vadd.xlane.f32.xlu0 %v3649
    %v3651 = vpop.xlane.xlu0 %3650
    %v3652 = vsel %vm115, %v3648, 0.0
    %3653 = vadd.xlane.f32.xlu0 %v3652
    %v3654 = vpop.xlane.xlu0 %3653
    %v3655 = vrcp.pop %v3651
    %v3656 = vmul.f32 %v3646, %v3655
    %v3657 = vrcp.pop %v3654
    %v3658 = vmul.f32 %v3648, %v3657
    %v3659 = vmul.f32 %v3534, %v86
    %v3660 = vmul.f32 %v3538, %v86
    %v3661 = vmul.f32 %v3532, %v91
    %v3662 = vmul.f32 %v3536, %v91
    %v3664 = vsel %vm484, %v3661, 0
    %v3667 = vsel %vm484, %v3662, 0
    %3669 = vmatprep.subr.mxu0 0.0
    %3670 = vmatpush1.xpose.msra.mxu0 %v3554
    %3671 = vmatprep.subr.mxu0 0.0
    %3672 = vmatpush1.xpose.msra.mxu0 %v3556
    %3673 = vmatprep.subr.mxu0 0.0
    %3674 = vmatpush1.xpose.msra.mxu0 0.0
    %3675 = vmatprep.subr.mxu0 0.0
    %3676 = vmatpush1.xpose.msra.mxu0 0.0
    %3677 = vmatprep.subr.mxu0 0.0
    %3678 = vmatpush1.xpose.msra.mxu0 0.0
    %3679 = vmatprep.subr.mxu0 0.0
    %3680 = vmatpush1.xpose.msra.mxu0 0.0
    %3681 = vmatprep.subr.mxu0 0.0
    %3682 = vmatpush1.xpose.msra.mxu0 0.0
    %3683 = vmatprep.subr.mxu0 0.0
    %3684 = vmatpush1.xpose.msra.mxu0 0.0
    %3685 = vmatprep.subr.mxu0 0.0
    %3686 = vmatpush1.xpose.msra.mxu0 0.0
    %3687 = vmatprep.subr.mxu0 0.0
    %3688 = vmatpush1.xpose.msra.mxu0 0.0
    %3689 = vmatprep.subr.mxu0 0.0
    %3690 = vmatpush1.xpose.msra.mxu0 0.0
    %3691 = vmatprep.subr.mxu0 0.0
    %3692 = vmatpush1.xpose.msra.mxu0 0.0
    %3693 = vmatprep.subr.mxu0 0.0
    %3694 = vmatpush1.xpose.msra.mxu0 0.0
    %3695 = vmatprep.subr.mxu0 0.0
    %3696 = vmatpush1.xpose.msra.mxu0 0.0
    %3697 = vmatprep.subr.mxu0 0.0
    %3698 = vmatpush1.xpose.msra.mxu0 0.0
    %3699 = vmatprep.subr.mxu0 0.0
    %3700 = vmatpush1.xpose.msra.mxu0 0.0
    %3701 = vmatprep.subr.mxu0 0.0
    %3702 = vmatpush1.xpose.msra.mxu0 0.0
    %3703 = vmatprep.subr.mxu0 0.0
    %3704 = vmatpush1.xpose.msra.mxu0 0.0
    %3705 = vmatprep.subr.mxu0 0.0
    %3706 = vmatpush1.xpose.msra.mxu0 0.0
    %3707 = vmatprep.subr.mxu0 0.0
    %3708 = vmatpush1.xpose.msra.mxu0 0.0
    %3709 = vmatprep.subr.mxu0 0.0
    %3710 = vmatpush1.xpose.msra.mxu0 0.0
    %3711 = vmatprep.subr.mxu0 0.0
    %3712 = vmatpush1.xpose.msra.mxu0 0.0
    %3713 = vmatprep.subr.mxu0 0.0
    %3714 = vmatpush1.xpose.msra.mxu0 0.0
    %3715 = vmatprep.subr.mxu0 0.0
    %3716 = vmatpush1.xpose.msra.mxu0 0.0
    %3717 = vmatprep.subr.mxu0 0.0
    %3718 = vmatpush1.xpose.msra.mxu0 0.0
    %3719 = vmatprep.subr.mxu0 0.0
    %3720 = vmatpush1.xpose.msra.mxu0 0.0
    %3721 = vmatprep.subr.mxu0 0.0
    %3722 = vmatpush1.xpose.msra.mxu0 0.0
    %3723 = vmatprep.subr.mxu0 0.0
    %3724 = vmatpush1.xpose.msra.mxu0 0.0
    %3725 = vmatprep.subr.mxu0 0.0
    %3726 = vmatpush1.xpose.msra.mxu0 0.0
    %3727 = vmatprep.subr.mxu0 0.0
    %3728 = vmatpush1.xpose.msra.mxu0 0.0
    %3729 = vmatprep.subr.mxu0 0.0
    %3730 = vmatpush1.xpose.msra.mxu0 0.0
    %3731 = vmatprep.subr.mxu0 0.0
    %3732 = vmatpush1.xpose.msra.mxu0 0.0
    %3733 = vmatprep.mubr.f32.mxu0 0.0
    %3734 = vmatmul.mubr.f32.gmra.mrb[0].mxu0 %v3664
    %v3735 = vpop.f32.mrb[0].mxu0
    %v3736 = vadd.f32 0.0, %v3735
    %v3737 = vpop.f32.mrb[0].mxu0
    %3738 = vmatprep.mubr.f32.mxu0 0.0
    %3739 = vmatmul.mubr.f32.gmra.mrb[0].mxu0 %v3667
    %v3740 = vpop.f32.mrb[0].mxu0
    %v3741 = vadd.f32 0.0, %v3740
    %v3742 = vpop.f32.mrb[0].mxu0
    %3743 = vdwg.mxu0
    %v3744 = vmul.f32 %v3736, 0.25
    %v3745 = vmul.f32 %v3741, 0.25
    %v3746 = vsel %vm80, %v3744, -1e+30
    %v3747 = vsel %vm81, %v3745, -1e+30
    %v3748 = vsel %vm115, %v3746, -inf
    %3749 = vmax.xlane.f32.xlu0 %v3748
    %v3750 = vpop.xlane.xlu0 %3749
    %v3751 = vsel %vm115, %v3747, -inf
    %3752 = vmax.xlane.f32.xlu0 %v3751
    %v3753 = vpop.xlane.xlu0 %3752
    %v3754 = vsub.f32 %v3746, %v3750
    %v3755 = vsub.f32 %v3747, %v3753
    %v3756 = vmul.f32 %v3754, 1.442695
    %v3757 = vpow.pop %v3756
    %v3758 = vmul.f32 %v3755, 1.442695
    %v3759 = vpow.pop %v3758
    %v3760 = vsel %vm115, %v3757, 0.0
    %3761 = vadd.xlane.f32.xlu0 %v3760
    %v3762 = vpop.xlane.xlu0 %3761
    %v3763 = vsel %vm115, %v3759, 0.0
    %3764 = vadd.xlane.f32.xlu0 %v3763
    %v3765 = vpop.xlane.xlu0 %3764
    %v3766 = vrcp.pop %v3762
    %v3767 = vmul.f32 %v3757, %v3766
    %v3768 = vrcp.pop %v3765
    %v3769 = vmul.f32 %v3759, %v3768
    %v3770 = vmul.f32 %v3534, %v91
    %v3771 = vmul.f32 %v3538, %v91
    %v3773 = vsel %vm115, %v3767, 0
    %v3776 = vsel %vm115, %v3769, 0
    %3778 = vmatprep.subr.mxu0 0.0
    %3779 = vmatpush1.msra.mxu0 %v3770
    %3780 = vmatprep.subr.mxu0 0.0
    %3781 = vmatpush1.msra.mxu0 %v3771
    %3782 = vmatprep.subr.mxu0 0.0
    %3783 = vmatpush1.msra.mxu0 0.0
    %3784 = vmatprep.subr.mxu0 0.0
    %3785 = vmatpush1.msra.mxu0 0.0
    %3786 = vmatprep.subr.mxu0 0.0
    %3787 = vmatpush1.msra.mxu0 0.0
    %3788 = vmatprep.subr.mxu0 0.0
    %3789 = vmatpush1.msra.mxu0 0.0
    %3790 = vmatprep.subr.mxu0 0.0
    %3791 = vmatpush1.msra.mxu0 0.0
    %3792 = vmatprep.subr.mxu0 0.0
    %3793 = vmatpush1.msra.mxu0 0.0
    %3794 = vmatprep.subr.mxu0 0.0
    %3795 = vmatpush1.msra.mxu0 0.0
    %3796 = vmatprep.subr.mxu0 0.0
    %3797 = vmatpush1.msra.mxu0 0.0
    %3798 = vmatprep.subr.mxu0 0.0
    %3799 = vmatpush1.msra.mxu0 0.0
    %3800 = vmatprep.subr.mxu0 0.0
    %3801 = vmatpush1.msra.mxu0 0.0
    %3802 = vmatprep.subr.mxu0 0.0
    %3803 = vmatpush1.msra.mxu0 0.0
    %3804 = vmatprep.subr.mxu0 0.0
    %3805 = vmatpush1.msra.mxu0 0.0
    %3806 = vmatprep.subr.mxu0 0.0
    %3807 = vmatpush1.msra.mxu0 0.0
    %3808 = vmatprep.subr.mxu0 0.0
    %3809 = vmatpush1.msra.mxu0 0.0
    %3810 = vmatprep.subr.mxu0 0.0
    %3811 = vmatpush1.msra.mxu0 0.0
    %3812 = vmatprep.subr.mxu0 0.0
    %3813 = vmatpush1.msra.mxu0 0.0
    %3814 = vmatprep.subr.mxu0 0.0
    %3815 = vmatpush1.msra.mxu0 0.0
    %3816 = vmatprep.subr.mxu0 0.0
    %3817 = vmatpush1.msra.mxu0 0.0
    %3818 = vmatprep.subr.mxu0 0.0
    %3819 = vmatpush1.msra.mxu0 0.0
    %3820 = vmatprep.subr.mxu0 0.0
    %3821 = vmatpush1.msra.mxu0 0.0
    %3822 = vmatprep.subr.mxu0 0.0
    %3823 = vmatpush1.msra.mxu0 0.0
    %3824 = vmatprep.subr.mxu0 0.0
    %3825 = vmatpush1.msra.mxu0 0.0
    %3826 = vmatprep.subr.mxu0 0.0
    %3827 = vmatpush1.msra.mxu0 0.0
    %3828 = vmatprep.subr.mxu0 0.0
    %3829 = vmatpush1.msra.mxu0 0.0
    %3830 = vmatprep.subr.mxu0 0.0
    %3831 = vmatpush1.msra.mxu0 0.0
    %3832 = vmatprep.subr.mxu0 0.0
    %3833 = vmatpush1.msra.mxu0 0.0
    %3834 = vmatprep.subr.mxu0 0.0
    %3835 = vmatpush1.msra.mxu0 0.0
    %3836 = vmatprep.subr.mxu0 0.0
    %3837 = vmatpush1.msra.mxu0 0.0
    %3838 = vmatprep.subr.mxu0 0.0
    %3839 = vmatpush1.msra.mxu0 0.0
    %3840 = vmatprep.subr.mxu0 0.0
    %3841 = vmatpush1.msra.mxu0 0.0
    %3842 = vmatprep.mubr.f32.mxu0 0.0
    %3843 = vmatmul.mubr.f32.gmra.mrb[0].mxu0 %v3773
    %v3844 = vpop.f32.mrb[0].mxu0
    %v3845 = vadd.f32 0.0, %v3844
    %v3846 = vpop.f32.mrb[0].mxu0
    %3847 = vmatprep.mubr.f32.mxu0 0.0
    %3848 = vmatmul.mubr.f32.gmra.mrb[0].mxu0 %v3776
    %v3849 = vpop.f32.mrb[0].mxu0
    %v3850 = vadd.f32 0.0, %v3849
    %v3851 = vpop.f32.mrb[0].mxu0
    %3852 = vdwg.mxu0
    %v3854 = vsel %vm115, %v3656, 0
    %v3857 = vsel %vm115, %v3658, 0
    %3859 = vmatprep.subr.mxu0 0.0
    %3860 = vmatpush1.msra.mxu0 %v3659
    %3861 = vmatprep.subr.mxu0 0.0
    %3862 = vmatpush1.msra.mxu0 %v3660
    %3863 = vmatprep.subr.mxu0 0.0
    %3864 = vmatpush1.msra.mxu0 0.0
    %3865 = vmatprep.subr.mxu0 0.0
    %3866 = vmatpush1.msra.mxu0 0.0
    %3867 = vmatprep.subr.mxu0 0.0
    %3868 = vmatpush1.msra.mxu0 0.0
    %3869 = vmatprep.subr.mxu0 0.0
    %3870 = vmatpush1.msra.mxu0 0.0
    %3871 = vmatprep.subr.mxu0 0.0
    %3872 = vmatpush1.msra.mxu0 0.0
    %3873 = vmatprep.subr.mxu0 0.0
    %3874 = vmatpush1.msra.mxu0 0.0
    %3875 = vmatprep.subr.mxu0 0.0
    %3876 = vmatpush1.msra.mxu0 0.0
    %3877 = vmatprep.subr.mxu0 0.0
    %3878 = vmatpush1.msra.mxu0 0.0
    %3879 = vmatprep.subr.mxu0 0.0
    %3880 = vmatpush1.msra.mxu0 0.0
    %3881 = vmatprep.subr.mxu0 0.0
    %3882 = vmatpush1.msra.mxu0 0.0
    %3883 = vmatprep.subr.mxu0 0.0
    %3884 = vmatpush1.msra.mxu0 0.0
    %3885 = vmatprep.subr.mxu0 0.0
    %3886 = vmatpush1.msra.mxu0 0.0
    %3887 = vmatprep.subr.mxu0 0.0
    %3888 = vmatpush1.msra.mxu0 0.0
    %3889 = vmatprep.subr.mxu0 0.0
    %3890 = vmatpush1.msra.mxu0 0.0
    %3891 = vmatprep.subr.mxu0 0.0
    %3892 = vmatpush1.msra.mxu0 0.0
    %3893 = vmatprep.subr.mxu0 0.0
    %3894 = vmatpush1.msra.mxu0 0.0
    %3895 = vmatprep.subr.mxu0 0.0
    %3896 = vmatpush1.msra.mxu0 0.0
    %3897 = vmatprep.subr.mxu0 0.0
    %3898 = vmatpush1.msra.mxu0 0.0
    %3899 = vmatprep.subr.mxu0 0.0
    %3900 = vmatpush1.msra.mxu0 0.0
    %3901 = vmatprep.subr.mxu0 0.0
    %3902 = vmatpush1.msra.mxu0 0.0
    %3903 = vmatprep.subr.mxu0 0.0
    %3904 = vmatpush1.msra.mxu0 0.0
    %3905 = vmatprep.subr.mxu0 0.0
    %3906 = vmatpush1.msra.mxu0 0.0
    %3907 = vmatprep.subr.mxu0 0.0
    %3908 = vmatpush1.msra.mxu0 0.0
    %3909 = vmatprep.subr.mxu0 0.0
    %3910 = vmatpush1.msra.mxu0 0.0
    %3911 = vmatprep.subr.mxu0 0.0
    %3912 = vmatpush1.msra.mxu0 0.0
    %3913 = vmatprep.subr.mxu0 0.0
    %3914 = vmatpush1.msra.mxu0 0.0
    %3915 = vmatprep.subr.mxu0 0.0
    %3916 = vmatpush1.msra.mxu0 0.0
    %3917 = vmatprep.subr.mxu0 0.0
    %3918 = vmatpush1.msra.mxu0 0.0
    %3919 = vmatprep.subr.mxu0 0.0
    %3920 = vmatpush1.msra.mxu0 0.0
    %3921 = vmatprep.subr.mxu0 0.0
    %3922 = vmatpush1.msra.mxu0 0.0
    %3923 = vmatprep.mubr.f32.mxu0 0.0
    %3924 = vmatmul.mubr.f32.gmra.mrb[0].mxu0 %v3854
    %v3925 = vpop.f32.mrb[0].mxu0
    %v3926 = vadd.f32 %v3845, %v3925
    %v3927 = vpop.f32.mrb[0].mxu0
    %3928 = vmatprep.mubr.f32.mxu0 0.0
    %3929 = vmatmul.mubr.f32.gmra.mrb[0].mxu0 %v3857
    %v3930 = vpop.f32.mrb[0].mxu0
    %v3931 = vadd.f32 %v3850, %v3930
    %v3932 = vpop.f32.mrb[0].mxu0
    %3933 = vdwg.mxu0
    %v3934 = vmul.f32 %v3532, %v96
    %v3935 = vmul.f32 %v3536, %v96
    %v3937 = vsel %vm484, %v3934, 0
    %v3940 = vsel %vm484, %v3935, 0
    %3942 = vmatprep.subr.mxu0 0.0
    %3943 = vmatpush1.xpose.msra.mxu0 %v3554
    %3944 = vmatprep.subr.mxu0 0.0
    %3945 = vmatpush1.xpose.msra.mxu0 %v3556
    %3946 = vmatprep.subr.mxu0 0.0
    %3947 = vmatpush1.xpose.msra.mxu0 0.0
    %3948 = vmatprep.subr.mxu0 0.0
    %3949 = vmatpush1.xpose.msra.mxu0 0.0
    %3950 = vmatprep.subr.mxu0 0.0
    %3951 = vmatpush1.xpose.msra.mxu0 0.0
    %3952 = vmatprep.subr.mxu0 0.0
    %3953 = vmatpush1.xpose.msra.mxu0 0.0
    %3954 = vmatprep.subr.mxu0 0.0
    %3955 = vmatpush1.xpose.msra.mxu0 0.0
    %3956 = vmatprep.subr.mxu0 0.0
    %3957 = vmatpush1.xpose.msra.mxu0 0.0
    %3958 = vmatprep.subr.mxu0 0.0
    %3959 = vmatpush1.xpose.msra.mxu0 0.0
    %3960 = vmatprep.subr.mxu0 0.0
    %3961 = vmatpush1.xpose.msra.mxu0 0.0
    %3962 = vmatprep.subr.mxu0 0.0
    %3963 = vmatpush1.xpose.msra.mxu0 0.0
    %3964 = vmatprep.subr.mxu0 0.0
    %3965 = vmatpush1.xpose.msra.mxu0 0.0
    %3966 = vmatprep.subr.mxu0 0.0
    %3967 = vmatpush1.xpose.msra.mxu0 0.0
    %3968 = vmatprep.subr.mxu0 0.0
    %3969 = vmatpush1.xpose.msra.mxu0 0.0
    %3970 = vmatprep.subr.mxu0 0.0
    %3971 = vmatpush1.xpose.msra.mxu0 0.0
    %3972 = vmatprep.subr.mxu0 0.0
    %3973 = vmatpush1.xpose.msra.mxu0 0.0
    %3974 = vmatprep.subr.mxu0 0.0
    %3975 = vmatpush1.xpose.msra.mxu0 0.0
    %3976 = vmatprep.subr.mxu0 0.0
    %3977 = vmatpush1.xpose.msra.mxu0 0.0
    %3978 = vmatprep.subr.mxu0 0.0
    %3979 = vmatpush1.xpose.msra.mxu0 0.0
    %3980 = vmatprep.subr.mxu0 0.0
    %3981 = vmatpush1.xpose.msra.mxu0 0.0
    %3982 = vmatprep.subr.mxu0 0.0
    %3983 = vmatpush1.xpose.msra.mxu0 0.0
    %3984 = vmatprep.subr.mxu0 0.0
    %3985 = vmatpush1.xpose.msra.mxu0 0.0
    %3986 = vmatprep.subr.mxu0 0.0
    %3987 = vmatpush1.xpose.msra.mxu0 0.0
    %3988 = vmatprep.subr.mxu0 0.0
    %3989 = vmatpush1.xpose.msra.mxu0 0.0
    %3990 = vmatprep.subr.mxu0 0.0
    %3991 = vmatpush1.xpose.msra.mxu0 0.0
    %3992 = vmatprep.subr.mxu0 0.0
    %3993 = vmatpush1.xpose.msra.mxu0 0.0
    %3994 = vmatprep.subr.mxu0 0.0
    %3995 = vmatpush1.xpose.msra.mxu0 0.0
    %3996 = vmatprep.subr.mxu0 0.0
    %3997 = vmatpush1.xpose.msra.mxu0 0.0
    %3998 = vmatprep.subr.mxu0 0.0
    %3999 = vmatpush1.xpose.msra.mxu0 0.0
    %4000 = vmatprep.subr.mxu0 0.0
    %4001 = vmatpush1.xpose.msra.mxu0 0.0
    %4002 = vmatprep.subr.mxu0 0.0
    %4003 = vmatpush1.xpose.msra.mxu0 0.0
    %4004 = vmatprep.subr.mxu0 0.0
    %4005 = vmatpush1.xpose.msra.mxu0 0.0
    %4006 = vmatprep.mubr.f32.mxu0 0.0
    %4007 = vmatmul.mubr.f32.gmra.mrb[0].mxu0 %v3937
    %v4008 = vpop.f32.mrb[0].mxu0
    %v4009 = vadd.f32 0.0, %v4008
    %v4010 = vpop.f32.mrb[0].mxu0
    %4011 = vmatprep.mubr.f32.mxu0 0.0
    %4012 = vmatmul.mubr.f32.gmra.mrb[0].mxu0 %v3940
    %v4013 = vpop.f32.mrb[0].mxu0
    %v4014 = vadd.f32 0.0, %v4013
    %v4015 = vpop.f32.mrb[0].mxu0
    %4016 = vdwg.mxu0
    %v4017 = vmul.f32 %v4009, 0.25
    %v4018 = vmul.f32 %v4014, 0.25
    %v4019 = vsel %vm80, %v4017, -1e+30
    %v4020 = vsel %vm81, %v4018, -1e+30
    %v4021 = vsel %vm115, %v4019, -inf
    %4022 = vmax.xlane.f32.xlu0 %v4021
    %v4023 = vpop.xlane.xlu0 %4022
    %v4024 = vsel %vm115, %v4020, -inf
    %4025 = vmax.xlane.f32.xlu0 %v4024
    %v4026 = vpop.xlane.xlu0 %4025
    %v4027 = vsub.f32 %v4019, %v4023
    %v4028 = vsub.f32 %v4020, %v4026
    %v4029 = vmul.f32 %v4027, 1.442695
    %v4030 = vpow.pop %v4029
    %v4031 = vmul.f32 %v4028, 1.442695
    %v4032 = vpow.pop %v4031
    %v4033 = vsel %vm115, %v4030, 0.0
    %4034 = vadd.xlane.f32.xlu0 %v4033
    %v4035 = vpop.xlane.xlu0 %4034
    %v4036 = vsel %vm115, %v4032, 0.0
    %4037 = vadd.xlane.f32.xlu0 %v4036
    %v4038 = vpop.xlane.xlu0 %4037
    %v4039 = vrcp.pop %v4035
    %v4040 = vmul.f32 %v4030, %v4039
    %v4041 = vrcp.pop %v4038
    %v4042 = vmul.f32 %v4032, %v4041
    %v4043 = vmul.f32 %v3534, %v96
    %v4044 = vmul.f32 %v3538, %v96
    %v4046 = vsel %vm115, %v4040, 0
    %v4049 = vsel %vm115, %v4042, 0
    %4051 = vmatprep.subr.mxu0 0.0
    %4052 = vmatpush1.msra.mxu0 %v4043
    %4053 = vmatprep.subr.mxu0 0.0
    %4054 = vmatpush1.msra.mxu0 %v4044
    %4055 = vmatprep.subr.mxu0 0.0
    %4056 = vmatpush1.msra.mxu0 0.0
    %4057 = vmatprep.subr.mxu0 0.0
    %4058 = vmatpush1.msra.mxu0 0.0
    %4059 = vmatprep.subr.mxu0 0.0
    %4060 = vmatpush1.msra.mxu0 0.0
    %4061 = vmatprep.subr.mxu0 0.0
    %4062 = vmatpush1.msra.mxu0 0.0
    %4063 = vmatprep.subr.mxu0 0.0
    %4064 = vmatpush1.msra.mxu0 0.0
    %4065 = vmatprep.subr.mxu0 0.0
    %4066 = vmatpush1.msra.mxu0 0.0
    %4067 = vmatprep.subr.mxu0 0.0
    %4068 = vmatpush1.msra.mxu0 0.0
    %4069 = vmatprep.subr.mxu0 0.0
    %4070 = vmatpush1.msra.mxu0 0.0
    %4071 = vmatprep.subr.mxu0 0.0
    %4072 = vmatpush1.msra.mxu0 0.0
    %4073 = vmatprep.subr.mxu0 0.0
    %4074 = vmatpush1.msra.mxu0 0.0
    %4075 = vmatprep.subr.mxu0 0.0
    %4076 = vmatpush1.msra.mxu0 0.0
    %4077 = vmatprep.subr.mxu0 0.0
    %4078 = vmatpush1.msra.mxu0 0.0
    %4079 = vmatprep.subr.mxu0 0.0
    %4080 = vmatpush1.msra.mxu0 0.0
    %4081 = vmatprep.subr.mxu0 0.0
    %4082 = vmatpush1.msra.mxu0 0.0
    %4083 = vmatprep.subr.mxu0 0.0
    %4084 = vmatpush1.msra.mxu0 0.0
    %4085 = vmatprep.subr.mxu0 0.0
    %4086 = vmatpush1.msra.mxu0 0.0
    %4087 = vmatprep.subr.mxu0 0.0
    %4088 = vmatpush1.msra.mxu0 0.0
    %4089 = vmatprep.subr.mxu0 0.0
    %4090 = vmatpush1.msra.mxu0 0.0
    %4091 = vmatprep.subr.mxu0 0.0
    %4092 = vmatpush1.msra.mxu0 0.0
    %4093 = vmatprep.subr.mxu0 0.0
    %4094 = vmatpush1.msra.mxu0 0.0
    %4095 = vmatprep.subr.mxu0 0.0
    %4096 = vmatpush1.msra.mxu0 0.0
    %4097 = vmatprep.subr.mxu0 0.0
    %4098 = vmatpush1.msra.mxu0 0.0
    %4099 = vmatprep.subr.mxu0 0.0
    %4100 = vmatpush1.msra.mxu0 0.0
    %4101 = vmatprep.subr.mxu0 0.0
    %4102 = vmatpush1.msra.mxu0 0.0
    %4103 = vmatprep.subr.mxu0 0.0
    %4104 = vmatpush1.msra.mxu0 0.0
    %4105 = vmatprep.subr.mxu0 0.0
    %4106 = vmatpush1.msra.mxu0 0.0
    %4107 = vmatprep.subr.mxu0 0.0
    %4108 = vmatpush1.msra.mxu0 0.0
    %4109 = vmatprep.subr.mxu0 0.0
    %4110 = vmatpush1.msra.mxu0 0.0
    %4111 = vmatprep.subr.mxu0 0.0
    %4112 = vmatpush1.msra.mxu0 0.0
    %4113 = vmatprep.subr.mxu0 0.0
    %4114 = vmatpush1.msra.mxu0 0.0
    %4115 = vmatprep.mubr.f32.mxu0 0.0
    %4116 = vmatmul.mubr.f32.gmra.mrb[0].mxu0 %v4046
    %v4117 = vpop.f32.mrb[0].mxu0
    %v4118 = vadd.f32 0.0, %v4117
    %v4119 = vpop.f32.mrb[0].mxu0
    %4120 = vmatprep.mubr.f32.mxu0 0.0
    %4121 = vmatmul.mubr.f32.gmra.mrb[0].mxu0 %v4049
    %v4122 = vpop.f32.mrb[0].mxu0
    %v4123 = vadd.f32 0.0, %v4122
    %v4124 = vpop.f32.mrb[0].mxu0
    %4125 = vdwg.mxu0
    %v4126 = vadd.f32 %v3926, %v4118
    %v4127 = vadd.f32 %v3931, %v4123
    %v4128 = vmul.f32 %v3532, %v101
    %v4129 = vmul.f32 %v3536, %v101
    %v4131 = vsel %vm484, %v4128, 0
    %v4134 = vsel %vm484, %v4129, 0
    %4136 = vmatprep.subr.mxu0 0.0
    %4137 = vmatpush1.xpose.msra.mxu0 %v3554
    %4138 = vmatprep.subr.mxu0 0.0
    %4139 = vmatpush1.xpose.msra.mxu0 %v3556
    %4140 = vmatprep.subr.mxu0 0.0
    %4141 = vmatpush1.xpose.msra.mxu0 0.0
    %4142 = vmatprep.subr.mxu0 0.0
    %4143 = vmatpush1.xpose.msra.mxu0 0.0
    %4144 = vmatprep.subr.mxu0 0.0
    %4145 = vmatpush1.xpose.msra.mxu0 0.0
    %4146 = vmatprep.subr.mxu0 0.0
    %4147 = vmatpush1.xpose.msra.mxu0 0.0
    %4148 = vmatprep.subr.mxu0 0.0
    %4149 = vmatpush1.xpose.msra.mxu0 0.0
    %4150 = vmatprep.subr.mxu0 0.0
    %4151 = vmatpush1.xpose.msra.mxu0 0.0
    %4152 = vmatprep.subr.mxu0 0.0
    %4153 = vmatpush1.xpose.msra.mxu0 0.0
    %4154 = vmatprep.subr.mxu0 0.0
    %4155 = vmatpush1.xpose.msra.mxu0 0.0
    %4156 = vmatprep.subr.mxu0 0.0
    %4157 = vmatpush1.xpose.msra.mxu0 0.0
    %4158 = vmatprep.subr.mxu0 0.0
    %4159 = vmatpush1.xpose.msra.mxu0 0.0
    %4160 = vmatprep.subr.mxu0 0.0
    %4161 = vmatpush1.xpose.msra.mxu0 0.0
    %4162 = vmatprep.subr.mxu0 0.0
    %4163 = vmatpush1.xpose.msra.mxu0 0.0
    %4164 = vmatprep.subr.mxu0 0.0
    %4165 = vmatpush1.xpose.msra.mxu0 0.0
    %4166 = vmatprep.subr.mxu0 0.0
    %4167 = vmatpush1.xpose.msra.mxu0 0.0
    %4168 = vmatprep.subr.mxu0 0.0
    %4169 = vmatpush1.xpose.msra.mxu0 0.0
    %4170 = vmatprep.subr.mxu0 0.0
    %4171 = vmatpush1.xpose.msra.mxu0 0.0
    %4172 = vmatprep.subr.mxu0 0.0
    %4173 = vmatpush1.xpose.msra.mxu0 0.0
    %4174 = vmatprep.subr.mxu0 0.0
    %4175 = vmatpush1.xpose.msra.mxu0 0.0
    %4176 = vmatprep.subr.mxu0 0.0
    %4177 = vmatpush1.xpose.msra.mxu0 0.0
    %4178 = vmatprep.subr.mxu0 0.0
    %4179 = vmatpush1.xpose.msra.mxu0 0.0
    %4180 = vmatprep.subr.mxu0 0.0
    %4181 = vmatpush1.xpose.msra.mxu0 0.0
    %4182 = vmatprep.subr.mxu0 0.0
    %4183 = vmatpush1.xpose.msra.mxu0 0.0
    %4184 = vmatprep.subr.mxu0 0.0
    %4185 = vmatpush1.xpose.msra.mxu0 0.0
    %4186 = vmatprep.subr.mxu0 0.0
    %4187 = vmatpush1.xpose.msra.mxu0 0.0
    %4188 = vmatprep.subr.mxu0 0.0
    %4189 = vmatpush1.xpose.msra.mxu0 0.0
    %4190 = vmatprep.subr.mxu0 0.0
    %4191 = vmatpush1.xpose.msra.mxu0 0.0
    %4192 = vmatprep.subr.mxu0 0.0
    %4193 = vmatpush1.xpose.msra.mxu0 0.0
    %4194 = vmatprep.subr.mxu0 0.0
    %4195 = vmatpush1.xpose.msra.mxu0 0.0
    %4196 = vmatprep.subr.mxu0 0.0
    %4197 = vmatpush1.xpose.msra.mxu0 0.0
    %4198 = vmatprep.subr.mxu0 0.0
    %4199 = vmatpush1.xpose.msra.mxu0 0.0
    %4200 = vmatprep.mubr.f32.mxu0 0.0
    %4201 = vmatmul.mubr.f32.gmra.mrb[0].mxu0 %v4131
    %v4202 = vpop.f32.mrb[0].mxu0
    %v4203 = vadd.f32 0.0, %v4202
    %v4204 = vpop.f32.mrb[0].mxu0
    %4205 = vmatprep.mubr.f32.mxu0 0.0
    %4206 = vmatmul.mubr.f32.gmra.mrb[0].mxu0 %v4134
    %v4207 = vpop.f32.mrb[0].mxu0
    %v4208 = vadd.f32 0.0, %v4207
    %v4209 = vpop.f32.mrb[0].mxu0
    %4210 = vdwg.mxu0
    %v4211 = vmul.f32 %v4203, 0.25
    %v4212 = vmul.f32 %v4208, 0.25
    %v4213 = vsel %vm80, %v4211, -1e+30
    %v4214 = vsel %vm81, %v4212, -1e+30
    %v4215 = vsel %vm115, %v4213, -inf
    %4216 = vmax.xlane.f32.xlu0 %v4215
    %v4217 = vpop.xlane.xlu0 %4216
    %v4218 = vsel %vm115, %v4214, -inf
    %4219 = vmax.xlane.f32.xlu0 %v4218
    %v4220 = vpop.xlane.xlu0 %4219
    %v4221 = vsub.f32 %v4213, %v4217
    %v4222 = vsub.f32 %v4214, %v4220
    %v4223 = vmul.f32 %v4221, 1.442695
    %v4224 = vpow.pop %v4223
    %v4225 = vmul.f32 %v4222, 1.442695
    %v4226 = vpow.pop %v4225
    %v4227 = vsel %vm115, %v4224, 0.0
    %4228 = vadd.xlane.f32.xlu0 %v4227
    %v4229 = vpop.xlane.xlu0 %4228
    %v4230 = vsel %vm115, %v4226, 0.0
    %4231 = vadd.xlane.f32.xlu0 %v4230
    %v4232 = vpop.xlane.xlu0 %4231
    %v4233 = vrcp.pop %v4229
    %v4234 = vmul.f32 %v4224, %v4233
    %v4235 = vrcp.pop %v4232
    %v4236 = vmul.f32 %v4226, %v4235
    %v4237 = vmul.f32 %v3534, %v101
    %v4238 = vmul.f32 %v3538, %v101
    %v4240 = vsel %vm115, %v4234, 0
    %v4243 = vsel %vm115, %v4236, 0
    %4245 = vmatprep.subr.mxu0 0.0
    %4246 = vmatpush1.msra.mxu0 %v4237
    %4247 = vmatprep.subr.mxu0 0.0
    %4248 = vmatpush1.msra.mxu0 %v4238
    %4249 = vmatprep.subr.mxu0 0.0
    %4250 = vmatpush1.msra.mxu0 0.0
    %4251 = vmatprep.subr.mxu0 0.0
    %4252 = vmatpush1.msra.mxu0 0.0
    %4253 = vmatprep.subr.mxu0 0.0
    %4254 = vmatpush1.msra.mxu0 0.0
    %4255 = vmatprep.subr.mxu0 0.0
    %4256 = vmatpush1.msra.mxu0 0.0
    %4257 = vmatprep.subr.mxu0 0.0
    %4258 = vmatpush1.msra.mxu0 0.0
    %4259 = vmatprep.subr.mxu0 0.0
    %4260 = vmatpush1.msra.mxu0 0.0
    %4261 = vmatprep.subr.mxu0 0.0
    %4262 = vmatpush1.msra.mxu0 0.0
    %4263 = vmatprep.subr.mxu0 0.0
    %4264 = vmatpush1.msra.mxu0 0.0
    %4265 = vmatprep.subr.mxu0 0.0
    %4266 = vmatpush1.msra.mxu0 0.0
    %4267 = vmatprep.subr.mxu0 0.0
    %4268 = vmatpush1.msra.mxu0 0.0
    %4269 = vmatprep.subr.mxu0 0.0
    %4270 = vmatpush1.msra.mxu0 0.0
    %4271 = vmatprep.subr.mxu0 0.0
    %4272 = vmatpush1.msra.mxu0 0.0
    %4273 = vmatprep.subr.mxu0 0.0
    %4274 = vmatpush1.msra.mxu0 0.0
    %4275 = vmatprep.subr.mxu0 0.0
    %4276 = vmatpush1.msra.mxu0 0.0
    %4277 = vmatprep.subr.mxu0 0.0
    %4278 = vmatpush1.msra.mxu0 0.0
    %4279 = vmatprep.subr.mxu0 0.0
    %4280 = vmatpush1.msra.mxu0 0.0
    %4281 = vmatprep.subr.mxu0 0.0
    %4282 = vmatpush1.msra.mxu0 0.0
    %4283 = vmatprep.subr.mxu0 0.0
    %4284 = vmatpush1.msra.mxu0 0.0
    %4285 = vmatprep.subr.mxu0 0.0
    %4286 = vmatpush1.msra.mxu0 0.0
    %4287 = vmatprep.subr.mxu0 0.0
    %4288 = vmatpush1.msra.mxu0 0.0
    %4289 = vmatprep.subr.mxu0 0.0
    %4290 = vmatpush1.msra.mxu0 0.0
    %4291 = vmatprep.subr.mxu0 0.0
    %4292 = vmatpush1.msra.mxu0 0.0
    %4293 = vmatprep.subr.mxu0 0.0
    %4294 = vmatpush1.msra.mxu0 0.0
    %4295 = vmatprep.subr.mxu0 0.0
    %4296 = vmatpush1.msra.mxu0 0.0
    %4297 = vmatprep.subr.mxu0 0.0
    %4298 = vmatpush1.msra.mxu0 0.0
    %4299 = vmatprep.subr.mxu0 0.0
    %4300 = vmatpush1.msra.mxu0 0.0
    %4301 = vmatprep.subr.mxu0 0.0
    %4302 = vmatpush1.msra.mxu0 0.0
    %4303 = vmatprep.subr.mxu0 0.0
    %4304 = vmatpush1.msra.mxu0 0.0
    %4305 = vmatprep.subr.mxu0 0.0
    %4306 = vmatpush1.msra.mxu0 0.0
    %4307 = vmatprep.subr.mxu0 0.0
    %4308 = vmatpush1.msra.mxu0 0.0
    %4309 = vmatprep.mubr.f32.mxu0 0.0
    %4310 = vmatmul.mubr.f32.gmra.mrb[0].mxu0 %v4240
    %v4311 = vpop.f32.mrb[0].mxu0
    %v4312 = vadd.f32 0.0, %v4311
    %v4313 = vpop.f32.mrb[0].mxu0
    %4314 = vmatprep.mubr.f32.mxu0 0.0
    %4315 = vmatmul.mubr.f32.gmra.mrb[0].mxu0 %v4243
    %v4316 = vpop.f32.mrb[0].mxu0
    %v4317 = vadd.f32 0.0, %v4316
    %v4318 = vpop.f32.mrb[0].mxu0
    %4319 = vdwg.mxu0
    %v4320 = vadd.f32 %v4126, %v4312
    %v4321 = vadd.f32 %v4127, %v4317
    %v4322 = vpack.c.bf16 %v4321, %v4320
    %v4324 = vsel %vm484, %v4322, 0
    %4326 = vmatprep.subr.bf16.mxu0 0
    %4327 = vmatpush1.bf16.msra.mxu0 %v1330
    %4328 = vmatprep.subr.bf16.mxu0 0
    %4329 = vmatpush1.bf16.msra.mxu0 %v1331
    %4330 = vmatprep.subr.bf16.mxu0 0
    %4331 = vmatpush1.bf16.msra.mxu0 %v1332
    %4332 = vmatprep.subr.bf16.mxu0 0
    %4333 = vmatpush1.bf16.msra.mxu0 %v1333
    %4334 = vmatprep.subr.bf16.mxu0 0
    %4335 = vmatpush1.bf16.msra.mxu0 0
    %4336 = vmatprep.subr.bf16.mxu0 0
    %4337 = vmatpush1.bf16.msra.mxu0 0
    %4338 = vmatprep.subr.bf16.mxu0 0
    %4339 = vmatpush1.bf16.msra.mxu0 0
    %4340 = vmatprep.subr.bf16.mxu0 0
    %4341 = vmatpush1.bf16.msra.mxu0 0
    %4342 = vmatprep.subr.bf16.mxu0 0
    %4343 = vmatpush1.bf16.msra.mxu0 0
    %4344 = vmatprep.subr.bf16.mxu0 0
    %4345 = vmatpush1.bf16.msra.mxu0 0
    %4346 = vmatprep.subr.bf16.mxu0 0
    %4347 = vmatpush1.bf16.msra.mxu0 0
    %4348 = vmatprep.subr.bf16.mxu0 0
    %4349 = vmatpush1.bf16.msra.mxu0 0
    %4350 = vmatprep.subr.bf16.mxu0 0
    %4351 = vmatpush1.bf16.msra.mxu0 0
    %4352 = vmatprep.subr.bf16.mxu0 0
    %4353 = vmatpush1.bf16.msra.mxu0 0
    %4354 = vmatprep.subr.bf16.mxu0 0
    %4355 = vmatpush1.bf16.msra.mxu0 0
    %4356 = vmatprep.subr.bf16.mxu0 0
    %4357 = vmatpush1.bf16.msra.mxu0 0
    %4358 = vmatprep.mubr.bf16.mxu0 0
    %4359 = vmatmul.mubr.bf16.gmra.mrb[0].mxu0 %v4324
    %v4360 = vpop.f32.mrb[0].mxu0
    %v4361 = vadd.f32 0.0, %v4360
    %v4362 = vpop.f32.mrb[0].mxu0
    %v4363 = vpop.f32.mrb[0].mxu0
    %v4364 = vadd.f32 0.0, %v4363
    %v4365 = vpop.f32.mrb[0].mxu0
    %4366 = vdwg.mxu0
    %v4367 = vlaneseq
    %v4368 = vshrl.u32 %v4367, 7
    %v4369 = vsub.s32 1, %v4368
    %v4370 = vrot.slane %v69, %v4369
    %4372 = vrot.lane.b32.xlu0 %v4370, 64
    %v4373 = vpop.permute.xlu0 %4372
    %v4375 = vadd.f32 %v4361, %v4373
    %v4376 = vadd.f32 %v4364, %v4373
    %4379 = vrot.lane.b32.xlu0 %v4375, 64
    %v4380 = vpop.permute.xlu0 %4379
    %4381 = vrot.lane.b32.xlu0 %v4376, 64
    %v4382 = vpop.permute.xlu0 %4381
    %v4385 = vadd.f32 %v3431, %v4380
    %v4386 = vadd.f32 %v3432, %v4382
    %v4387 = vsel %vm484, %v4385, 0.0
    %4388 = vadd.xlane.f32.xlu0 %v4387
    %v4389 = vpop.xlane.xlu0 %4388
    %v4390 = vsel %vm484, %v4386, 0.0
    %4391 = vadd.xlane.f32.xlu0 %v4390
    %v4392 = vpop.xlane.xlu0 %4391
    %v4393 = vmul.f32 %v4389, %v1396
    %v4394 = vmul.f32 %v4392, %v1396
    %v4395 = vsub.f32 %v4385, %v4393
    %v4396 = vsub.f32 %v4386, %v4394
    %v4397 = vmul.f32 %v4395, %v4395
    %v4398 = vmul.f32 %v4396, %v4396
    %v4399 = vsel %vm484, %v4397, 0.0
    %4400 = vadd.xlane.f32.xlu0 %v4399
    %v4401 = vpop.xlane.xlu0 %4400
    %v4402 = vsel %vm484, %v4398, 0.0
    %4403 = vadd.xlane.f32.xlu0 %v4402
    %v4404 = vpop.xlane.xlu0 %4403
    %v4405 = vmul.f32 %v4401, %v1396
    %v4406 = vmul.f32 %v4404, %v1396
    %v4407 = vadd.f32 %v4405, 1e-05
    %v4408 = vadd.f32 %v4406, 1e-05
    %v4409 = vrsqrt.pop %v4407
    %v4410 = vrsqrt.pop %v4408
    %v4411 = vmul.f32 %v4395, %v4409
    %v4412 = vmul.f32 %v4396, %v4410
    %v4413 = vlaneseq
    %v4414 = vshrl.u32 %v4413, 7
    %v4415 = vsub.s32 2, %v4414
    %v4416 = vrot.slane %v69, %v4415
    %v4417 = vmul.f32 %v4411, %v4416
    %v4418 = vmul.f32 %v4412, %v4416
    %v4419 = vlaneseq
    %v4420 = vshrl.u32 %v4419, 7
    %v4421 = vsub.s32 3, %v4420
    %v4422 = vrot.slane %v69, %v4421
    %v4423 = vadd.f32 %v4417, %v4422
    %v4424 = vadd.f32 %v4418, %v4422
    %v4425 = vpack.c.bf16 %v4424, %v4423
    %v4426 = vld [vmem:[#allocation6 + $0x200] sm:$0xff]
    %v4427 = vld [vmem:[#allocation6 + $0x208] sm:$0xff]
    %v4428 = vld [vmem:[#allocation6 + $0x210] sm:$0xff]
    %v4429 = vld [vmem:[#allocation6 + $0x218] sm:$0xff]
    %v4430 = vld [vmem:[#allocation6 + $0x220] sm:$0xff]
    %v4431 = vld [vmem:[#allocation6 + $0x228] sm:$0xff]
    %v4432 = vld [vmem:[#allocation6 + $0x230] sm:$0xff]
    %v4433 = vld [vmem:[#allocation6 + $0x238] sm:$0xff]
    %v4434 = vld [vmem:[#allocation6 + $0x240] sm:$0xff]
    %v4435 = vld [vmem:[#allocation6 + $0x248] sm:$0xff]
    %v4436 = vld [vmem:[#allocation6 + $0x250] sm:$0xff]
    %v4437 = vld [vmem:[#allocation6 + $0x258] sm:$0xff]
    %v4438 = vld [vmem:[#allocation6 + $0x260] sm:$0xff]
    %v4439 = vld [vmem:[#allocation6 + $0x268] sm:$0xff]
    %v4440 = vld [vmem:[#allocation6 + $0x270] sm:$0xff]
    %v4441 = vld [vmem:[#allocation6 + $0x278] sm:$0xff]
    %v4442 = vld [vmem:[#allocation6 + $0x280] sm:$0xff]
    %v4443 = vld [vmem:[#allocation6 + $0x288] sm:$0xff]
    %v4444 = vld [vmem:[#allocation6 + $0x290] sm:$0xff]
    %v4445 = vld [vmem:[#allocation6 + $0x298] sm:$0xff]
    %v4446 = vld [vmem:[#allocation6 + $0x2a0] sm:$0xff]
    %v4447 = vld [vmem:[#allocation6 + $0x2a8] sm:$0xff]
    %v4448 = vld [vmem:[#allocation6 + $0x2b0] sm:$0xff]
    %v4449 = vld [vmem:[#allocation6 + $0x2b8] sm:$0xff]
    %v4450 = vld [vmem:[#allocation6 + $0x2c0] sm:$0xff]
    %v4451 = vld [vmem:[#allocation6 + $0x2c8] sm:$0xff]
    %v4452 = vld [vmem:[#allocation6 + $0x2d0] sm:$0xff]
    %v4453 = vld [vmem:[#allocation6 + $0x2d8] sm:$0xff]
    %v4454 = vld [vmem:[#allocation6 + $0x2e0] sm:$0xff]
    %v4455 = vld [vmem:[#allocation6 + $0x2e8] sm:$0xff]
    %v4456 = vld [vmem:[#allocation6 + $0x2f0] sm:$0xff]
    %v4457 = vld [vmem:[#allocation6 + $0x2f8] sm:$0xff]
    %v4458 = vld [vmem:[#allocation6 + $0x300] sm:$0xff]
    %v4459 = vld [vmem:[#allocation6 + $0x308] sm:$0xff]
    %v4460 = vld [vmem:[#allocation6 + $0x310] sm:$0xff]
    %v4461 = vld [vmem:[#allocation6 + $0x318] sm:$0xff]
    %v4462 = vld [vmem:[#allocation6 + $0x320] sm:$0xff]
    %v4463 = vld [vmem:[#allocation6 + $0x328] sm:$0xff]
    %v4464 = vld [vmem:[#allocation6 + $0x330] sm:$0xff]
    %v4465 = vld [vmem:[#allocation6 + $0x338] sm:$0xff]
    %v4466 = vld [vmem:[#allocation6 + $0x340] sm:$0xff]
    %v4467 = vld [vmem:[#allocation6 + $0x348] sm:$0xff]
    %v4468 = vld [vmem:[#allocation6 + $0x350] sm:$0xff]
    %v4469 = vld [vmem:[#allocation6 + $0x358] sm:$0xff]
    %v4470 = vld [vmem:[#allocation6 + $0x360] sm:$0xff]
    %v4471 = vld [vmem:[#allocation6 + $0x368] sm:$0xff]
    %v4472 = vld [vmem:[#allocation6 + $0x370] sm:$0xff]
    %v4473 = vld [vmem:[#allocation6 + $0x378] sm:$0xff]
    %v4474 = vld [vmem:[#allocation6 + $0x380] sm:$0xff]
    %v4475 = vld [vmem:[#allocation6 + $0x388] sm:$0xff]
    %v4476 = vld [vmem:[#allocation6 + $0x390] sm:$0xff]
    %v4477 = vld [vmem:[#allocation6 + $0x398] sm:$0xff]
    %v4478 = vld [vmem:[#allocation6 + $0x3a0] sm:$0xff]
    %v4479 = vld [vmem:[#allocation6 + $0x3a8] sm:$0xff]
    %v4480 = vld [vmem:[#allocation6 + $0x3b0] sm:$0xff]
    %v4481 = vld [vmem:[#allocation6 + $0x3b8] sm:$0xff]
    %v4482 = vld [vmem:[#allocation6 + $0x3c0] sm:$0xff]
    %v4483 = vld [vmem:[#allocation6 + $0x3c8] sm:$0xff]
    %v4484 = vld [vmem:[#allocation6 + $0x3d0] sm:$0xff]
    %v4485 = vld [vmem:[#allocation6 + $0x3d8] sm:$0xff]
    %v4486 = vld [vmem:[#allocation6 + $0x3e0] sm:$0xff]
    %v4487 = vld [vmem:[#allocation6 + $0x3e8] sm:$0xff]
    %v4488 = vld [vmem:[#allocation6 + $0x3f0] sm:$0xff]
    %v4489 = vld [vmem:[#allocation6 + $0x3f8] sm:$0xff]
    %v4492 = vlaneseq
    %v4493 = vshrl.u32 %v4492, 7
    %v4494 = vsub.s32 0, %v4493
    %v4495 = vrot.slane %v3434, %v4494
    %v4496 = vlaneseq
    %v4497 = vshrl.u32 %v4496, 7
    %v4498 = vsub.s32 1, %v4497
    %v4499 = vrot.slane %v3434, %v4498
    %v4500 = vlaneseq
    %v4501 = vshrl.u32 %v4500, 7
    %v4502 = vsub.s32 2, %v4501
    %v4503 = vrot.slane %v3434, %v4502
    %v4504 = vlaneseq
    %v4505 = vshrl.u32 %v4504, 7
    %v4506 = vsub.s32 3, %v4505
    %v4507 = vrot.slane %v3434, %v4506
    %v4508 = vlaneseq
    %v4509 = vshrl.u32 %v4508, 7
    %v4510 = vsub.s32 4, %v4509
    %v4511 = vrot.slane %v3434, %v4510
    %v4512 = vlaneseq
    %v4513 = vshrl.u32 %v4512, 7
    %v4514 = vsub.s32 5, %v4513
    %v4515 = vrot.slane %v3434, %v4514
    %v4516 = vlaneseq
    %v4517 = vshrl.u32 %v4516, 7
    %v4518 = vsub.s32 6, %v4517
    %v4519 = vrot.slane %v3434, %v4518
    %v4520 = vlaneseq
    %v4521 = vshrl.u32 %v4520, 7
    %v4522 = vsub.s32 7, %v4521
    %v4523 = vrot.slane %v3434, %v4522
    %v4524 = vlaneseq
    %v4525 = vshrl.u32 %v4524, 7
    %v4526 = vsub.s32 0, %v4525
    %v4527 = vrot.slane %v3436, %v4526
    %v4528 = vlaneseq
    %v4529 = vshrl.u32 %v4528, 7
    %v4530 = vsub.s32 1, %v4529
    %v4531 = vrot.slane %v3436, %v4530
    %v4532 = vlaneseq
    %v4533 = vshrl.u32 %v4532, 7
    %v4534 = vsub.s32 2, %v4533
    %v4535 = vrot.slane %v3436, %v4534
    %v4536 = vlaneseq
    %v4537 = vshrl.u32 %v4536, 7
    %v4538 = vsub.s32 3, %v4537
    %v4539 = vrot.slane %v3436, %v4538
    %v4540 = vlaneseq
    %v4541 = vshrl.u32 %v4540, 7
    %v4542 = vsub.s32 4, %v4541
    %v4543 = vrot.slane %v3436, %v4542
    %v4544 = vlaneseq
    %v4545 = vshrl.u32 %v4544, 7
    %v4546 = vsub.s32 5, %v4545
    %v4547 = vrot.slane %v3436, %v4546
    %v4548 = vlaneseq
    %v4549 = vshrl.u32 %v4548, 7
    %v4550 = vsub.s32 6, %v4549
    %v4551 = vrot.slane %v3436, %v4550
    %v4552 = vlaneseq
    %v4553 = vshrl.u32 %v4552, 7
    %v4554 = vsub.s32 7, %v4553
    %v4555 = vrot.slane %v3436, %v4554
    %v4636 = vunpack.c.l.b16 %v4426
    %v4637 = vunpack.c.h.b16 %v4426
    %v4638 = vunpack.c.l.b16 %v4427
    %v4639 = vunpack.c.h.b16 %v4427
    %v4640 = vunpack.c.l.b16 %v4428
    %v4641 = vunpack.c.h.b16 %v4428
    %v4642 = vunpack.c.l.b16 %v4429
    %v4643 = vunpack.c.h.b16 %v4429
    %v4644 = vunpack.c.l.b16 %v4430
    %v4645 = vunpack.c.h.b16 %v4430
    %v4646 = vunpack.c.l.b16 %v4431
    %v4647 = vunpack.c.h.b16 %v4431
    %v4648 = vunpack.c.l.b16 %v4432
    %v4649 = vunpack.c.h.b16 %v4432
    %v4650 = vunpack.c.l.b16 %v4433
    %v4651 = vunpack.c.h.b16 %v4433
    %v4652 = vunpack.c.l.b16 %v4434
    %v4653 = vunpack.c.h.b16 %v4434
    %v4654 = vunpack.c.l.b16 %v4435
    %v4655 = vunpack.c.h.b16 %v4435
    %v4656 = vunpack.c.l.b16 %v4436
    %v4657 = vunpack.c.h.b16 %v4436
    %v4658 = vunpack.c.l.b16 %v4437
    %v4659 = vunpack.c.h.b16 %v4437
    %v4660 = vunpack.c.l.b16 %v4438
    %v4661 = vunpack.c.h.b16 %v4438
    %v4662 = vunpack.c.l.b16 %v4439
    %v4663 = vunpack.c.h.b16 %v4439
    %v4664 = vunpack.c.l.b16 %v4440
    %v4665 = vunpack.c.h.b16 %v4440
    %v4666 = vunpack.c.l.b16 %v4441
    %v4667 = vunpack.c.h.b16 %v4441
    %v4668 = vunpack.c.l.b16 %v4442
    %v4669 = vunpack.c.h.b16 %v4442
    %v4670 = vunpack.c.l.b16 %v4443
    %v4671 = vunpack.c.h.b16 %v4443
    %v4672 = vunpack.c.l.b16 %v4444
    %v4673 = vunpack.c.h.b16 %v4444
    %v4674 = vunpack.c.l.b16 %v4445
    %v4675 = vunpack.c.h.b16 %v4445
    %v4676 = vunpack.c.l.b16 %v4446
    %v4677 = vunpack.c.h.b16 %v4446
    %v4678 = vunpack.c.l.b16 %v4447
    %v4679 = vunpack.c.h.b16 %v4447
    %v4680 = vunpack.c.l.b16 %v4448
    %v4681 = vunpack.c.h.b16 %v4448
    %v4682 = vunpack.c.l.b16 %v4449
    %v4683 = vunpack.c.h.b16 %v4449
    %v4684 = vunpack.c.l.b16 %v4450
    %v4685 = vunpack.c.h.b16 %v4450
    %v4686 = vunpack.c.l.b16 %v4451
    %v4687 = vunpack.c.h.b16 %v4451
    %v4688 = vunpack.c.l.b16 %v4452
    %v4689 = vunpack.c.h.b16 %v4452
    %v4690 = vunpack.c.l.b16 %v4453
    %v4691 = vunpack.c.h.b16 %v4453
    %v4692 = vunpack.c.l.b16 %v4454
    %v4693 = vunpack.c.h.b16 %v4454
    %v4694 = vunpack.c.l.b16 %v4455
    %v4695 = vunpack.c.h.b16 %v4455
    %v4696 = vunpack.c.l.b16 %v4456
    %v4697 = vunpack.c.h.b16 %v4456
    %v4698 = vunpack.c.l.b16 %v4457
    %v4699 = vunpack.c.h.b16 %v4457
    %v4700 = vunpack.c.l.b16 %v4458
    %v4701 = vunpack.c.h.b16 %v4458
    %v4702 = vunpack.c.l.b16 %v4459
    %v4703 = vunpack.c.h.b16 %v4459
    %v4704 = vunpack.c.l.b16 %v4460
    %v4705 = vunpack.c.h.b16 %v4460
    %v4706 = vunpack.c.l.b16 %v4461
    %v4707 = vunpack.c.h.b16 %v4461
    %v4708 = vunpack.c.l.b16 %v4462
    %v4709 = vunpack.c.h.b16 %v4462
    %v4710 = vunpack.c.l.b16 %v4463
    %v4711 = vunpack.c.h.b16 %v4463
    %v4712 = vunpack.c.l.b16 %v4464
    %v4713 = vunpack.c.h.b16 %v4464
    %v4714 = vunpack.c.l.b16 %v4465
    %v4715 = vunpack.c.h.b16 %v4465
    %v4716 = vunpack.c.l.b16 %v4466
    %v4717 = vunpack.c.h.b16 %v4466
    %v4718 = vunpack.c.l.b16 %v4467
    %v4719 = vunpack.c.h.b16 %v4467
    %v4720 = vunpack.c.l.b16 %v4468
    %v4721 = vunpack.c.h.b16 %v4468
    %v4722 = vunpack.c.l.b16 %v4469
    %v4723 = vunpack.c.h.b16 %v4469
    %v4724 = vunpack.c.l.b16 %v4470
    %v4725 = vunpack.c.h.b16 %v4470
    %v4726 = vunpack.c.l.b16 %v4471
    %v4727 = vunpack.c.h.b16 %v4471
    %v4728 = vunpack.c.l.b16 %v4472
    %v4729 = vunpack.c.h.b16 %v4472
    %v4730 = vunpack.c.l.b16 %v4473
    %v4731 = vunpack.c.h.b16 %v4473
    %v4732 = vunpack.c.l.b16 %v4474
    %v4733 = vunpack.c.h.b16 %v4474
    %v4734 = vunpack.c.l.b16 %v4475
    %v4735 = vunpack.c.h.b16 %v4475
    %v4736 = vunpack.c.l.b16 %v4476
    %v4737 = vunpack.c.h.b16 %v4476
    %v4738 = vunpack.c.l.b16 %v4477
    %v4739 = vunpack.c.h.b16 %v4477
    %v4740 = vunpack.c.l.b16 %v4478
    %v4741 = vunpack.c.h.b16 %v4478
    %v4742 = vunpack.c.l.b16 %v4479
    %v4743 = vunpack.c.h.b16 %v4479
    %v4744 = vunpack.c.l.b16 %v4480
    %v4745 = vunpack.c.h.b16 %v4480
    %v4746 = vunpack.c.l.b16 %v4481
    %v4747 = vunpack.c.h.b16 %v4481
    %v4748 = vunpack.c.l.b16 %v4482
    %v4749 = vunpack.c.h.b16 %v4482
    %v4750 = vunpack.c.l.b16 %v4483
    %v4751 = vunpack.c.h.b16 %v4483
    %v4752 = vunpack.c.l.b16 %v4484
    %v4753 = vunpack.c.h.b16 %v4484
    %v4754 = vunpack.c.l.b16 %v4485
    %v4755 = vunpack.c.h.b16 %v4485
    %v4756 = vunpack.c.l.b16 %v4486
    %v4757 = vunpack.c.h.b16 %v4486
    %v4758 = vunpack.c.l.b16 %v4487
    %v4759 = vunpack.c.h.b16 %v4487
    %v4760 = vunpack.c.l.b16 %v4488
    %v4761 = vunpack.c.h.b16 %v4488
    %v4762 = vunpack.c.l.b16 %v4489
    %v4763 = vunpack.c.h.b16 %v4489
    %v4764 = vpack.c.b16 %v4652, %v4636
    %v4765 = vpack.c.b16 %v4653, %v4637
    %v4766 = vpack.c.b16 %v4654, %v4638
    %v4767 = vpack.c.b16 %v4655, %v4639
    %v4768 = vpack.c.b16 %v4656, %v4640
    %v4769 = vpack.c.b16 %v4657, %v4641
    %v4770 = vpack.c.b16 %v4658, %v4642
    %v4771 = vpack.c.b16 %v4659, %v4643
    %v4772 = vpack.c.b16 %v4660, %v4644
    %v4773 = vpack.c.b16 %v4661, %v4645
    %v4774 = vpack.c.b16 %v4662, %v4646
    %v4775 = vpack.c.b16 %v4663, %v4647
    %v4776 = vpack.c.b16 %v4664, %v4648
    %v4777 = vpack.c.b16 %v4665, %v4649
    %v4778 = vpack.c.b16 %v4666, %v4650
    %v4779 = vpack.c.b16 %v4667, %v4651
    %v4780 = vpack.c.b16 %v4684, %v4668
    %v4781 = vpack.c.b16 %v4685, %v4669
    %v4782 = vpack.c.b16 %v4686, %v4670
    %v4783 = vpack.c.b16 %v4687, %v4671
    %v4784 = vpack.c.b16 %v4688, %v4672
    %v4785 = vpack.c.b16 %v4689, %v4673
    %v4786 = vpack.c.b16 %v4690, %v4674
    %v4787 = vpack.c.b16 %v4691, %v4675
    %v4788 = vpack.c.b16 %v4692, %v4676
    %v4789 = vpack.c.b16 %v4693, %v4677
    %v4790 = vpack.c.b16 %v4694, %v4678
    %v4791 = vpack.c.b16 %v4695, %v4679
    %v4792 = vpack.c.b16 %v4696, %v4680
    %v4793 = vpack.c.b16 %v4697, %v4681
    %v4794 = vpack.c.b16 %v4698, %v4682
    %v4795 = vpack.c.b16 %v4699, %v4683
    %v4796 = vpack.c.b16 %v4716, %v4700
    %v4797 = vpack.c.b16 %v4717, %v4701
    %v4798 = vpack.c.b16 %v4718, %v4702
    %v4799 = vpack.c.b16 %v4719, %v4703
    %v4800 = vpack.c.b16 %v4720, %v4704
    %v4801 = vpack.c.b16 %v4721, %v4705
    %v4802 = vpack.c.b16 %v4722, %v4706
    %v4803 = vpack.c.b16 %v4723, %v4707
    %v4804 = vpack.c.b16 %v4724, %v4708
    %v4805 = vpack.c.b16 %v4725, %v4709
    %v4806 = vpack.c.b16 %v4726, %v4710
    %v4807 = vpack.c.b16 %v4727, %v4711
    %v4808 = vpack.c.b16 %v4728, %v4712
    %v4809 = vpack.c.b16 %v4729, %v4713
    %v4810 = vpack.c.b16 %v4730, %v4714
    %v4811 = vpack.c.b16 %v4731, %v4715
    %v4812 = vpack.c.b16 %v4748, %v4732
    %v4813 = vpack.c.b16 %v4749, %v4733
    %v4814 = vpack.c.b16 %v4750, %v4734
    %v4815 = vpack.c.b16 %v4751, %v4735
    %v4816 = vpack.c.b16 %v4752, %v4736
    %v4817 = vpack.c.b16 %v4753, %v4737
    %v4818 = vpack.c.b16 %v4754, %v4738
    %v4819 = vpack.c.b16 %v4755, %v4739
    %v4820 = vpack.c.b16 %v4756, %v4740
    %v4821 = vpack.c.b16 %v4757, %v4741
    %v4822 = vpack.c.b16 %v4758, %v4742
    %v4823 = vpack.c.b16 %v4759, %v4743
    %v4824 = vpack.c.b16 %v4760, %v4744
    %v4825 = vpack.c.b16 %v4761, %v4745
    %v4826 = vpack.c.b16 %v4762, %v4746
    %v4827 = vpack.c.b16 %v4763, %v4747
    %v4893 = vsel %vm484, %v4425, 0
    %4895 = vmatprep.subr.bf16.mxu0 %v4765
    %4896 = vmatpush1.bf16.msra.mxu0 %v4764
    %4897 = vmatprep.subr.bf16.mxu0 %v4781
    %4898 = vmatpush1.bf16.msra.mxu0 %v4780
    %4899 = vmatprep.subr.bf16.mxu0 %v4797
    %4900 = vmatpush1.bf16.msra.mxu0 %v4796
    %4901 = vmatprep.subr.bf16.mxu0 %v4813
    %4902 = vmatpush1.bf16.msra.mxu0 %v4812
    %4903 = vmatprep.subr.bf16.mxu0 0
    %4904 = vmatpush1.bf16.msra.mxu0 0
    %4905 = vmatprep.subr.bf16.mxu0 0
    %4906 = vmatpush1.bf16.msra.mxu0 0
    %4907 = vmatprep.subr.bf16.mxu0 0
    %4908 = vmatpush1.bf16.msra.mxu0 0
    %4909 = vmatprep.subr.bf16.mxu0 0
    %4910 = vmatpush1.bf16.msra.mxu0 0
    %4911 = vmatprep.subr.bf16.mxu0 0
    %4912 = vmatpush1.bf16.msra.mxu0 0
    %4913 = vmatprep.subr.bf16.mxu0 0
    %4914 = vmatpush1.bf16.msra.mxu0 0
    %4915 = vmatprep.subr.bf16.mxu0 0
    %4916 = vmatpush1.bf16.msra.mxu0 0
    %4917 = vmatprep.subr.bf16.mxu0 0
    %4918 = vmatpush1.bf16.msra.mxu0 0
    %4919 = vmatprep.subr.bf16.mxu0 0
    %4920 = vmatpush1.bf16.msra.mxu0 0
    %4921 = vmatprep.subr.bf16.mxu0 0
    %4922 = vmatpush1.bf16.msra.mxu0 0
    %4923 = vmatprep.subr.bf16.mxu0 0
    %4924 = vmatpush1.bf16.msra.mxu0 0
    %4925 = vmatprep.subr.bf16.mxu0 0
    %4926 = vmatpush1.bf16.msra.mxu0 0
    %4927 = vmatprep.mubr.bf16.mxu0 0
    %4928 = vmatmul.mubr.bf16.gmra.mrb[0].mxu0 %v4893
    %v4929 = vpop.f32.mrb[0].mxu0
    %v4930 = vadd.f32 %v4495, %v4929
    %v4931 = vpop.f32.mrb[0].mxu0
    %v4932 = vadd.f32 %v4499, %v4931
    %v4933 = vpop.f32.mrb[0].mxu0
    %v4934 = vadd.f32 %v4495, %v4933
    %v4935 = vpop.f32.mrb[0].mxu0
    %v4936 = vadd.f32 %v4499, %v4935
    %4937 = vdwg.mxu0
    %4938 = vmatprep.subr.bf16.mxu0 %v4767
    %4939 = vmatpush1.bf16.msra.mxu0 %v4766
    %4940 = vmatprep.subr.bf16.mxu0 %v4783
    %4941 = vmatpush1.bf16.msra.mxu0 %v4782
    %4942 = vmatprep.subr.bf16.mxu0 %v4799
    %4943 = vmatpush1.bf16.msra.mxu0 %v4798
    %4944 = vmatprep.subr.bf16.mxu0 %v4815
    %4945 = vmatpush1.bf16.msra.mxu0 %v4814
    %4946 = vmatprep.subr.bf16.mxu0 0
    %4947 = vmatpush1.bf16.msra.mxu0 0
    %4948 = vmatprep.subr.bf16.mxu0 0
    %4949 = vmatpush1.bf16.msra.mxu0 0
    %4950 = vmatprep.subr.bf16.mxu0 0
    %4951 = vmatpush1.bf16.msra.mxu0 0
    %4952 = vmatprep.subr.bf16.mxu0 0
    %4953 = vmatpush1.bf16.msra.mxu0 0
    %4954 = vmatprep.subr.bf16.mxu0 0
    %4955 = vmatpush1.bf16.msra.mxu0 0
    %4956 = vmatprep.subr.bf16.mxu0 0
    %4957 = vmatpush1.bf16.msra.mxu0 0
    %4958 = vmatprep.subr.bf16.mxu0 0
    %4959 = vmatpush1.bf16.msra.mxu0 0
    %4960 = vmatprep.subr.bf16.mxu0 0
    %4961 = vmatpush1.bf16.msra.mxu0 0
    %4962 = vmatprep.subr.bf16.mxu0 0
    %4963 = vmatpush1.bf16.msra.mxu0 0
    %4964 = vmatprep.subr.bf16.mxu0 0
    %4965 = vmatpush1.bf16.msra.mxu0 0
    %4966 = vmatprep.subr.bf16.mxu0 0
    %4967 = vmatpush1.bf16.msra.mxu0 0
    %4968 = vmatprep.subr.bf16.mxu0 0
    %4969 = vmatpush1.bf16.msra.mxu0 0
    %4970 = vmatprep.mubr.bf16.mxu0 0
    %4971 = vmatmul.mubr.bf16.gmra.mrb[0].mxu0 %v4893
    %v4972 = vpop.f32.mrb[0].mxu0
    %v4973 = vadd.f32 %v4503, %v4972
    %v4974 = vpop.f32.mrb[0].mxu0
    %v4975 = vadd.f32 %v4507, %v4974
    %v4976 = vpop.f32.mrb[0].mxu0
    %v4977 = vadd.f32 %v4503, %v4976
    %v4978 = vpop.f32.mrb[0].mxu0
    %v4979 = vadd.f32 %v4507, %v4978
    %4980 = vdwg.mxu0
    %4981 = vmatprep.subr.bf16.mxu0 %v4769
    %4982 = vmatpush1.bf16.msra.mxu0 %v4768
    %4983 = vmatprep.subr.bf16.mxu0 %v4785
    %4984 = vmatpush1.bf16.msra.mxu0 %v4784
    %4985 = vmatprep.subr.bf16.mxu0 %v4801
    %4986 = vmatpush1.bf16.msra.mxu0 %v4800
    %4987 = vmatprep.subr.bf16.mxu0 %v4817
    %4988 = vmatpush1.bf16.msra.mxu0 %v4816
    %4989 = vmatprep.subr.bf16.mxu0 0
    %4990 = vmatpush1.bf16.msra.mxu0 0
    %4991 = vmatprep.subr.bf16.mxu0 0
    %4992 = vmatpush1.bf16.msra.mxu0 0
    %4993 = vmatprep.subr.bf16.mxu0 0
    %4994 = vmatpush1.bf16.msra.mxu0 0
    %4995 = vmatprep.subr.bf16.mxu0 0
    %4996 = vmatpush1.bf16.msra.mxu0 0
    %4997 = vmatprep.subr.bf16.mxu0 0
    %4998 = vmatpush1.bf16.msra.mxu0 0
    %4999 = vmatprep.subr.bf16.mxu0 0
    %5000 = vmatpush1.bf16.msra.mxu0 0
    %5001 = vmatprep.subr.bf16.mxu0 0
    %5002 = vmatpush1.bf16.msra.mxu0 0
    %5003 = vmatprep.subr.bf16.mxu0 0
    %5004 = vmatpush1.bf16.msra.mxu0 0
    %5005 = vmatprep.subr.bf16.mxu0 0
    %5006 = vmatpush1.bf16.msra.mxu0 0
    %5007 = vmatprep.subr.bf16.mxu0 0
    %5008 = vmatpush1.bf16.msra.mxu0 0
    %5009 = vmatprep.subr.bf16.mxu0 0
    %5010 = vmatpush1.bf16.msra.mxu0 0
    %5011 = vmatprep.subr.bf16.mxu0 0
    %5012 = vmatpush1.bf16.msra.mxu0 0
    %5013 = vmatprep.mubr.bf16.mxu0 0
    %5014 = vmatmul.mubr.bf16.gmra.mrb[0].mxu0 %v4893
    %v5015 = vpop.f32.mrb[0].mxu0
    %v5016 = vadd.f32 %v4511, %v5015
    %v5017 = vpop.f32.mrb[0].mxu0
    %v5018 = vadd.f32 %v4515, %v5017
    %v5019 = vpop.f32.mrb[0].mxu0
    %v5020 = vadd.f32 %v4511, %v5019
    %v5021 = vpop.f32.mrb[0].mxu0
    %v5022 = vadd.f32 %v4515, %v5021
    %5023 = vdwg.mxu0
    %5024 = vmatprep.subr.bf16.mxu0 %v4771
    %5025 = vmatpush1.bf16.msra.mxu0 %v4770
    %5026 = vmatprep.subr.bf16.mxu0 %v4787
    %5027 = vmatpush1.bf16.msra.mxu0 %v4786
    %5028 = vmatprep.subr.bf16.mxu0 %v4803
    %5029 = vmatpush1.bf16.msra.mxu0 %v4802
    %5030 = vmatprep.subr.bf16.mxu0 %v4819
    %5031 = vmatpush1.bf16.msra.mxu0 %v4818
    %5032 = vmatprep.subr.bf16.mxu0 0
    %5033 = vmatpush1.bf16.msra.mxu0 0
    %5034 = vmatprep.subr.bf16.mxu0 0
    %5035 = vmatpush1.bf16.msra.mxu0 0
    %5036 = vmatprep.subr.bf16.mxu0 0
    %5037 = vmatpush1.bf16.msra.mxu0 0
    %5038 = vmatprep.subr.bf16.mxu0 0
    %5039 = vmatpush1.bf16.msra.mxu0 0
    %5040 = vmatprep.subr.bf16.mxu0 0
    %5041 = vmatpush1.bf16.msra.mxu0 0
    %5042 = vmatprep.subr.bf16.mxu0 0
    %5043 = vmatpush1.bf16.msra.mxu0 0
    %5044 = vmatprep.subr.bf16.mxu0 0
    %5045 = vmatpush1.bf16.msra.mxu0 0
    %5046 = vmatprep.subr.bf16.mxu0 0
    %5047 = vmatpush1.bf16.msra.mxu0 0
    %5048 = vmatprep.subr.bf16.mxu0 0
    %5049 = vmatpush1.bf16.msra.mxu0 0
    %5050 = vmatprep.subr.bf16.mxu0 0
    %5051 = vmatpush1.bf16.msra.mxu0 0
    %5052 = vmatprep.subr.bf16.mxu0 0
    %5053 = vmatpush1.bf16.msra.mxu0 0
    %5054 = vmatprep.subr.bf16.mxu0 0
    %5055 = vmatpush1.bf16.msra.mxu0 0
    %5056 = vmatprep.mubr.bf16.mxu0 0
    %5057 = vmatmul.mubr.bf16.gmra.mrb[0].mxu0 %v4893
    %v5058 = vpop.f32.mrb[0].mxu0
    %v5059 = vadd.f32 %v4519, %v5058
    %v5060 = vpop.f32.mrb[0].mxu0
    %v5061 = vadd.f32 %v4523, %v5060
    %v5062 = vpop.f32.mrb[0].mxu0
    %v5063 = vadd.f32 %v4519, %v5062
    %v5064 = vpop.f32.mrb[0].mxu0
    %v5065 = vadd.f32 %v4523, %v5064
    %5066 = vdwg.mxu0
    %5067 = vmatprep.subr.bf16.mxu0 %v4773
    %5068 = vmatpush1.bf16.msra.mxu0 %v4772
    %5069 = vmatprep.subr.bf16.mxu0 %v4789
    %5070 = vmatpush1.bf16.msra.mxu0 %v4788
    %5071 = vmatprep.subr.bf16.mxu0 %v4805
    %5072 = vmatpush1.bf16.msra.mxu0 %v4804
    %5073 = vmatprep.subr.bf16.mxu0 %v4821
    %5074 = vmatpush1.bf16.msra.mxu0 %v4820
    %5075 = vmatprep.subr.bf16.mxu0 0
    %5076 = vmatpush1.bf16.msra.mxu0 0
    %5077 = vmatprep.subr.bf16.mxu0 0
    %5078 = vmatpush1.bf16.msra.mxu0 0
    %5079 = vmatprep.subr.bf16.mxu0 0
    %5080 = vmatpush1.bf16.msra.mxu0 0
    %5081 = vmatprep.subr.bf16.mxu0 0
    %5082 = vmatpush1.bf16.msra.mxu0 0
    %5083 = vmatprep.subr.bf16.mxu0 0
    %5084 = vmatpush1.bf16.msra.mxu0 0
    %5085 = vmatprep.subr.bf16.mxu0 0
    %5086 = vmatpush1.bf16.msra.mxu0 0
    %5087 = vmatprep.subr.bf16.mxu0 0
    %5088 = vmatpush1.bf16.msra.mxu0 0
    %5089 = vmatprep.subr.bf16.mxu0 0
    %5090 = vmatpush1.bf16.msra.mxu0 0
    %5091 = vmatprep.subr.bf16.mxu0 0
    %5092 = vmatpush1.bf16.msra.mxu0 0
    %5093 = vmatprep.subr.bf16.mxu0 0
    %5094 = vmatpush1.bf16.msra.mxu0 0
    %5095 = vmatprep.subr.bf16.mxu0 0
    %5096 = vmatpush1.bf16.msra.mxu0 0
    %5097 = vmatprep.subr.bf16.mxu0 0
    %5098 = vmatpush1.bf16.msra.mxu0 0
    %5099 = vmatprep.mubr.bf16.mxu0 0
    %5100 = vmatmul.mubr.bf16.gmra.mrb[0].mxu0 %v4893
    %v5101 = vpop.f32.mrb[0].mxu0
    %v5102 = vadd.f32 %v4527, %v5101
    %v5103 = vpop.f32.mrb[0].mxu0
    %v5104 = vadd.f32 %v4531, %v5103
    %v5105 = vpop.f32.mrb[0].mxu0
    %v5106 = vadd.f32 %v4527, %v5105
    %v5107 = vpop.f32.mrb[0].mxu0
    %v5108 = vadd.f32 %v4531, %v5107
    %5109 = vdwg.mxu0
    %5110 = vmatprep.subr.bf16.mxu0 %v4775
    %5111 = vmatpush1.bf16.msra.mxu0 %v4774
    %5112 = vmatprep.subr.bf16.mxu0 %v4791
    %5113 = vmatpush1.bf16.msra.mxu0 %v4790
    %5114 = vmatprep.subr.bf16.mxu0 %v4807
    %5115 = vmatpush1.bf16.msra.mxu0 %v4806
    %5116 = vmatprep.subr.bf16.mxu0 %v4823
    %5117 = vmatpush1.bf16.msra.mxu0 %v4822
    %5118 = vmatprep.subr.bf16.mxu0 0
    %5119 = vmatpush1.bf16.msra.mxu0 0
    %5120 = vmatprep.subr.bf16.mxu0 0
    %5121 = vmatpush1.bf16.msra.mxu0 0
    %5122 = vmatprep.subr.bf16.mxu0 0
    %5123 = vmatpush1.bf16.msra.mxu0 0
    %5124 = vmatprep.subr.bf16.mxu0 0
    %5125 = vmatpush1.bf16.msra.mxu0 0
    %5126 = vmatprep.subr.bf16.mxu0 0
    %5127 = vmatpush1.bf16.msra.mxu0 0
    %5128 = vmatprep.subr.bf16.mxu0 0
    %5129 = vmatpush1.bf16.msra.mxu0 0
    %5130 = vmatprep.subr.bf16.mxu0 0
    %5131 = vmatpush1.bf16.msra.mxu0 0
    %5132 = vmatprep.subr.bf16.mxu0 0
    %5133 = vmatpush1.bf16.msra.mxu0 0
    %5134 = vmatprep.subr.bf16.mxu0 0
    %5135 = vmatpush1.bf16.msra.mxu0 0
    %5136 = vmatprep.subr.bf16.mxu0 0
    %5137 = vmatpush1.bf16.msra.mxu0 0
    %5138 = vmatprep.subr.bf16.mxu0 0
    %5139 = vmatpush1.bf16.msra.mxu0 0
    %5140 = vmatprep.subr.bf16.mxu0 0
    %5141 = vmatpush1.bf16.msra.mxu0 0
    %5142 = vmatprep.mubr.bf16.mxu0 0
    %5143 = vmatmul.mubr.bf16.gmra.mrb[0].mxu0 %v4893
    %v5144 = vpop.f32.mrb[0].mxu0
    %v5145 = vadd.f32 %v4535, %v5144
    %v5146 = vpop.f32.mrb[0].mxu0
    %v5147 = vadd.f32 %v4539, %v5146
    %v5148 = vpop.f32.mrb[0].mxu0
    %v5149 = vadd.f32 %v4535, %v5148
    %v5150 = vpop.f32.mrb[0].mxu0
    %v5151 = vadd.f32 %v4539, %v5150
    %5152 = vdwg.mxu0
    %5153 = vmatprep.subr.bf16.mxu0 %v4777
    %5154 = vmatpush1.bf16.msra.mxu0 %v4776
    %5155 = vmatprep.subr.bf16.mxu0 %v4793
    %5156 = vmatpush1.bf16.msra.mxu0 %v4792
    %5157 = vmatprep.subr.bf16.mxu0 %v4809
    %5158 = vmatpush1.bf16.msra.mxu0 %v4808
    %5159 = vmatprep.subr.bf16.mxu0 %v4825
    %5160 = vmatpush1.bf16.msra.mxu0 %v4824
    %5161 = vmatprep.subr.bf16.mxu0 0
    %5162 = vmatpush1.bf16.msra.mxu0 0
    %5163 = vmatprep.subr.bf16.mxu0 0
    %5164 = vmatpush1.bf16.msra.mxu0 0
    %5165 = vmatprep.subr.bf16.mxu0 0
    %5166 = vmatpush1.bf16.msra.mxu0 0
    %5167 = vmatprep.subr.bf16.mxu0 0
    %5168 = vmatpush1.bf16.msra.mxu0 0
    %5169 = vmatprep.subr.bf16.mxu0 0
    %5170 = vmatpush1.bf16.msra.mxu0 0
    %5171 = vmatprep.subr.bf16.mxu0 0
    %5172 = vmatpush1.bf16.msra.mxu0 0
    %5173 = vmatprep.subr.bf16.mxu0 0
    %5174 = vmatpush1.bf16.msra.mxu0 0
    %5175 = vmatprep.subr.bf16.mxu0 0
    %5176 = vmatpush1.bf16.msra.mxu0 0
    %5177 = vmatprep.subr.bf16.mxu0 0
    %5178 = vmatpush1.bf16.msra.mxu0 0
    %5179 = vmatprep.subr.bf16.mxu0 0
    %5180 = vmatpush1.bf16.msra.mxu0 0
    %5181 = vmatprep.subr.bf16.mxu0 0
    %5182 = vmatpush1.bf16.msra.mxu0 0
    %5183 = vmatprep.subr.bf16.mxu0 0
    %5184 = vmatpush1.bf16.msra.mxu0 0
    %5185 = vmatprep.mubr.bf16.mxu0 0
    %5186 = vmatmul.mubr.bf16.gmra.mrb[0].mxu0 %v4893
    %v5187 = vpop.f32.mrb[0].mxu0
    %v5188 = vadd.f32 %v4543, %v5187
    %v5189 = vpop.f32.mrb[0].mxu0
    %v5190 = vadd.f32 %v4547, %v5189
    %v5191 = vpop.f32.mrb[0].mxu0
    %v5192 = vadd.f32 %v4543, %v5191
    %v5193 = vpop.f32.mrb[0].mxu0
    %v5194 = vadd.f32 %v4547, %v5193
    %5195 = vdwg.mxu0
    %5196 = vmatprep.subr.bf16.mxu0 %v4779
    %5197 = vmatpush1.bf16.msra.mxu0 %v4778
    %5198 = vmatprep.subr.bf16.mxu0 %v4795
    %5199 = vmatpush1.bf16.msra.mxu0 %v4794
    %5200 = vmatprep.subr.bf16.mxu0 %v4811
    %5201 = vmatpush1.bf16.msra.mxu0 %v4810
    %5202 = vmatprep.subr.bf16.mxu0 %v4827
    %5203 = vmatpush1.bf16.msra.mxu0 %v4826
    %5204 = vmatprep.subr.bf16.mxu0 0
    %5205 = vmatpush1.bf16.msra.mxu0 0
    %5206 = vmatprep.subr.bf16.mxu0 0
    %5207 = vmatpush1.bf16.msra.mxu0 0
    %5208 = vmatprep.subr.bf16.mxu0 0
    %5209 = vmatpush1.bf16.msra.mxu0 0
    %5210 = vmatprep.subr.bf16.mxu0 0
    %5211 = vmatpush1.bf16.msra.mxu0 0
    %5212 = vmatprep.subr.bf16.mxu0 0
    %5213 = vmatpush1.bf16.msra.mxu0 0
    %5214 = vmatprep.subr.bf16.mxu0 0
    %5215 = vmatpush1.bf16.msra.mxu0 0
    %5216 = vmatprep.subr.bf16.mxu0 0
    %5217 = vmatpush1.bf16.msra.mxu0 0
    %5218 = vmatprep.subr.bf16.mxu0 0
    %5219 = vmatpush1.bf16.msra.mxu0 0
    %5220 = vmatprep.subr.bf16.mxu0 0
    %5221 = vmatpush1.bf16.msra.mxu0 0
    %5222 = vmatprep.subr.bf16.mxu0 0
    %5223 = vmatpush1.bf16.msra.mxu0 0
    %5224 = vmatprep.subr.bf16.mxu0 0
    %5225 = vmatpush1.bf16.msra.mxu0 0
    %5226 = vmatprep.subr.bf16.mxu0 0
    %5227 = vmatpush1.bf16.msra.mxu0 0
    %5228 = vmatprep.mubr.bf16.mxu0 0
    %5229 = vmatmul.mubr.bf16.gmra.mrb[0].mxu0 %v4893
    %v5230 = vpop.f32.mrb[0].mxu0
    %v5231 = vadd.f32 %v4551, %v5230
    %v5232 = vpop.f32.mrb[0].mxu0
    %v5233 = vadd.f32 %v4555, %v5232
    %v5234 = vpop.f32.mrb[0].mxu0
    %v5235 = vadd.f32 %v4551, %v5234
    %v5236 = vpop.f32.mrb[0].mxu0
    %v5237 = vadd.f32 %v4555, %v5236
    %5238 = vdwg.mxu0
    %v5239 = vmax.f32 %v4930, 0.0
    %v5240 = vmax.f32 %v4932, 0.0
    %v5241 = vmax.f32 %v4973, 0.0
    %v5242 = vmax.f32 %v4975, 0.0
    %v5243 = vmax.f32 %v5016, 0.0
    %v5244 = vmax.f32 %v5018, 0.0
    %v5245 = vmax.f32 %v5059, 0.0
    %v5246 = vmax.f32 %v5061, 0.0
    %v5247 = vmax.f32 %v5102, 0.0
    %v5248 = vmax.f32 %v5104, 0.0
    %v5249 = vmax.f32 %v5145, 0.0
    %v5250 = vmax.f32 %v5147, 0.0
    %v5251 = vmax.f32 %v5188, 0.0
    %v5252 = vmax.f32 %v5190, 0.0
    %v5253 = vmax.f32 %v5231, 0.0
    %v5254 = vmax.f32 %v5233, 0.0
    %v5255 = vmax.f32 %v4934, 0.0
    %v5256 = vmax.f32 %v4936, 0.0
    %v5257 = vmax.f32 %v4977, 0.0
    %v5258 = vmax.f32 %v4979, 0.0
    %v5259 = vmax.f32 %v5020, 0.0
    %v5260 = vmax.f32 %v5022, 0.0
    %v5261 = vmax.f32 %v5063, 0.0
    %v5262 = vmax.f32 %v5065, 0.0
    %v5263 = vmax.f32 %v5106, 0.0
    %v5264 = vmax.f32 %v5108, 0.0
    %v5265 = vmax.f32 %v5149, 0.0
    %v5266 = vmax.f32 %v5151, 0.0
    %v5267 = vmax.f32 %v5192, 0.0
    %v5268 = vmax.f32 %v5194, 0.0
    %v5269 = vmax.f32 %v5235, 0.0
    %v5270 = vmax.f32 %v5237, 0.0
    %v5271 = vpack.c.bf16 %v5255, %v5239
    %v5272 = vpack.c.bf16 %v5256, %v5240
    %v5273 = vpack.c.bf16 %v5257, %v5241
    %v5274 = vpack.c.bf16 %v5258, %v5242
    %v5275 = vpack.c.bf16 %v5259, %v5243
    %v5276 = vpack.c.bf16 %v5260, %v5244
    %v5277 = vpack.c.bf16 %v5261, %v5245
    %v5278 = vpack.c.bf16 %v5262, %v5246
    %v5279 = vpack.c.bf16 %v5263, %v5247
    %v5280 = vpack.c.bf16 %v5264, %v5248
    %v5281 = vpack.c.bf16 %v5265, %v5249
    %v5282 = vpack.c.bf16 %v5266, %v5250
    %v5283 = vpack.c.bf16 %v5267, %v5251
    %v5284 = vpack.c.bf16 %v5268, %v5252
    %v5285 = vpack.c.bf16 %v5269, %v5253
    %v5286 = vpack.c.bf16 %v5270, %v5254
    %5287 = vmatprep.subr.bf16.mxu0 0
    %5288 = vmatpush1.bf16.msra.mxu0 %v2803
    %5289 = vmatprep.subr.bf16.mxu0 0
    %5290 = vmatpush1.bf16.msra.mxu0 %v2804
    %5291 = vmatprep.subr.bf16.mxu0 0
    %5292 = vmatpush1.bf16.msra.mxu0 %v2805
    %5293 = vmatprep.subr.bf16.mxu0 0
    %5294 = vmatpush1.bf16.msra.mxu0 %v2806
    %5295 = vmatprep.subr.bf16.mxu0 0
    %5296 = vmatpush1.bf16.msra.mxu0 %v2807
    %5297 = vmatprep.subr.bf16.mxu0 0
    %5298 = vmatpush1.bf16.msra.mxu0 %v2808
    %5299 = vmatprep.subr.bf16.mxu0 0
    %5300 = vmatpush1.bf16.msra.mxu0 %v2809
    %5301 = vmatprep.subr.bf16.mxu0 0
    %5302 = vmatpush1.bf16.msra.mxu0 %v2810
    %5303 = vmatprep.subr.bf16.mxu0 0
    %5304 = vmatpush1.bf16.msra.mxu0 %v2811
    %5305 = vmatprep.subr.bf16.mxu0 0
    %5306 = vmatpush1.bf16.msra.mxu0 %v2812
    %5307 = vmatprep.subr.bf16.mxu0 0
    %5308 = vmatpush1.bf16.msra.mxu0 %v2813
    %5309 = vmatprep.subr.bf16.mxu0 0
    %5310 = vmatpush1.bf16.msra.mxu0 %v2814
    %5311 = vmatprep.subr.bf16.mxu0 0
    %5312 = vmatpush1.bf16.msra.mxu0 %v2815
    %5313 = vmatprep.subr.bf16.mxu0 0
    %5314 = vmatpush1.bf16.msra.mxu0 %v2816
    %5315 = vmatprep.subr.bf16.mxu0 0
    %5316 = vmatpush1.bf16.msra.mxu0 %v2817
    %5317 = vmatprep.subr.bf16.mxu0 0
    %5318 = vmatpush1.bf16.msra.mxu0 %v2818
    %5319 = vmatprep.mubr.bf16.mxu0 %v5272
    %5320 = vmatmul.mubr.bf16.gmra.mrb[0].mxu0 %v5271
    %v5321 = vpop.f32.mrb[0].mxu0
    %v5322 = vadd.f32 0.0, %v5321
    %v5323 = vpop.f32.mrb[0].mxu0
    %v5324 = vpop.f32.mrb[0].mxu0
    %v5325 = vadd.f32 0.0, %v5324
    %v5326 = vpop.f32.mrb[0].mxu0
    %5327 = vdwg.mxu0
    %5328 = vmatprep.subr.bf16.mxu0 0
    %5329 = vmatpush1.bf16.msra.mxu0 %v2819
    %5330 = vmatprep.subr.bf16.mxu0 0
    %5331 = vmatpush1.bf16.msra.mxu0 %v2820
    %5332 = vmatprep.subr.bf16.mxu0 0
    %5333 = vmatpush1.bf16.msra.mxu0 %v2821
    %5334 = vmatprep.subr.bf16.mxu0 0
    %5335 = vmatpush1.bf16.msra.mxu0 %v2822
    %5336 = vmatprep.subr.bf16.mxu0 0
    %5337 = vmatpush1.bf16.msra.mxu0 %v2823
    %5338 = vmatprep.subr.bf16.mxu0 0
    %5339 = vmatpush1.bf16.msra.mxu0 %v2824
    %5340 = vmatprep.subr.bf16.mxu0 0
    %5341 = vmatpush1.bf16.msra.mxu0 %v2825
    %5342 = vmatprep.subr.bf16.mxu0 0
    %5343 = vmatpush1.bf16.msra.mxu0 %v2826
    %5344 = vmatprep.subr.bf16.mxu0 0
    %5345 = vmatpush1.bf16.msra.mxu0 %v2827
    %5346 = vmatprep.subr.bf16.mxu0 0
    %5347 = vmatpush1.bf16.msra.mxu0 %v2828
    %5348 = vmatprep.subr.bf16.mxu0 0
    %5349 = vmatpush1.bf16.msra.mxu0 %v2829
    %5350 = vmatprep.subr.bf16.mxu0 0
    %5351 = vmatpush1.bf16.msra.mxu0 %v2830
    %5352 = vmatprep.subr.bf16.mxu0 0
    %5353 = vmatpush1.bf16.msra.mxu0 %v2831
    %5354 = vmatprep.subr.bf16.mxu0 0
    %5355 = vmatpush1.bf16.msra.mxu0 %v2832
    %5356 = vmatprep.subr.bf16.mxu0 0
    %5357 = vmatpush1.bf16.msra.mxu0 %v2833
    %5358 = vmatprep.subr.bf16.mxu0 0
    %5359 = vmatpush1.bf16.msra.mxu0 %v2834
    %5360 = vmatprep.mubr.bf16.mxu0 %v5274
    %5361 = vmatmul.mubr.bf16.gmra.mrb[0].mxu0 %v5273
    %v5362 = vpop.f32.mrb[0].mxu0
    %v5363 = vadd.f32 %v5322, %v5362
    %v5364 = vpop.f32.mrb[0].mxu0
    %v5365 = vpop.f32.mrb[0].mxu0
    %v5366 = vadd.f32 %v5325, %v5365
    %v5367 = vpop.f32.mrb[0].mxu0
    %5368 = vdwg.mxu0
    %5369 = vmatprep.subr.bf16.mxu0 0
    %5370 = vmatpush1.bf16.msra.mxu0 %v2835
    %5371 = vmatprep.subr.bf16.mxu0 0
    %5372 = vmatpush1.bf16.msra.mxu0 %v2836
    %5373 = vmatprep.subr.bf16.mxu0 0
    %5374 = vmatpush1.bf16.msra.mxu0 %v2837
    %5375 = vmatprep.subr.bf16.mxu0 0
    %5376 = vmatpush1.bf16.msra.mxu0 %v2838
    %5377 = vmatprep.subr.bf16.mxu0 0
    %5378 = vmatpush1.bf16.msra.mxu0 %v2839
    %5379 = vmatprep.subr.bf16.mxu0 0
    %5380 = vmatpush1.bf16.msra.mxu0 %v2840
    %5381 = vmatprep.subr.bf16.mxu0 0
    %5382 = vmatpush1.bf16.msra.mxu0 %v2841
    %5383 = vmatprep.subr.bf16.mxu0 0
    %5384 = vmatpush1.bf16.msra.mxu0 %v2842
    %5385 = vmatprep.subr.bf16.mxu0 0
    %5386 = vmatpush1.bf16.msra.mxu0 %v2843
    %5387 = vmatprep.subr.bf16.mxu0 0
    %5388 = vmatpush1.bf16.msra.mxu0 %v2844
    %5389 = vmatprep.subr.bf16.mxu0 0
    %5390 = vmatpush1.bf16.msra.mxu0 %v2845
    %5391 = vmatprep.subr.bf16.mxu0 0
    %5392 = vmatpush1.bf16.msra.mxu0 %v2846
    %5393 = vmatprep.subr.bf16.mxu0 0
    %5394 = vmatpush1.bf16.msra.mxu0 %v2847
    %5395 = vmatprep.subr.bf16.mxu0 0
    %5396 = vmatpush1.bf16.msra.mxu0 %v2848
    %5397 = vmatprep.subr.bf16.mxu0 0
    %5398 = vmatpush1.bf16.msra.mxu0 %v2849
    %5399 = vmatprep.subr.bf16.mxu0 0
    %5400 = vmatpush1.bf16.msra.mxu0 %v2850
    %5401 = vmatprep.mubr.bf16.mxu0 %v5276
    %5402 = vmatmul.mubr.bf16.gmra.mrb[0].mxu0 %v5275
    %v5403 = vpop.f32.mrb[0].mxu0
    %v5404 = vadd.f32 %v5363, %v5403
    %v5405 = vpop.f32.mrb[0].mxu0
    %v5406 = vpop.f32.mrb[0].mxu0
    %v5407 = vadd.f32 %v5366, %v5406
    %v5408 = vpop.f32.mrb[0].mxu0
    %5409 = vdwg.mxu0
    %5410 = vmatprep.subr.bf16.mxu0 0
    %5411 = vmatpush1.bf16.msra.mxu0 %v2851
    %5412 = vmatprep.subr.bf16.mxu0 0
    %5413 = vmatpush1.bf16.msra.mxu0 %v2852
    %5414 = vmatprep.subr.bf16.mxu0 0
    %5415 = vmatpush1.bf16.msra.mxu0 %v2853
    %5416 = vmatprep.subr.bf16.mxu0 0
    %5417 = vmatpush1.bf16.msra.mxu0 %v2854
    %5418 = vmatprep.subr.bf16.mxu0 0
    %5419 = vmatpush1.bf16.msra.mxu0 %v2855
    %5420 = vmatprep.subr.bf16.mxu0 0
    %5421 = vmatpush1.bf16.msra.mxu0 %v2856
    %5422 = vmatprep.subr.bf16.mxu0 0
    %5423 = vmatpush1.bf16.msra.mxu0 %v2857
    %5424 = vmatprep.subr.bf16.mxu0 0
    %5425 = vmatpush1.bf16.msra.mxu0 %v2858
    %5426 = vmatprep.subr.bf16.mxu0 0
    %5427 = vmatpush1.bf16.msra.mxu0 %v2859
    %5428 = vmatprep.subr.bf16.mxu0 0
    %5429 = vmatpush1.bf16.msra.mxu0 %v2860
    %5430 = vmatprep.subr.bf16.mxu0 0
    %5431 = vmatpush1.bf16.msra.mxu0 %v2861
    %5432 = vmatprep.subr.bf16.mxu0 0
    %5433 = vmatpush1.bf16.msra.mxu0 %v2862
    %5434 = vmatprep.subr.bf16.mxu0 0
    %5435 = vmatpush1.bf16.msra.mxu0 %v2863
    %5436 = vmatprep.subr.bf16.mxu0 0
    %5437 = vmatpush1.bf16.msra.mxu0 %v2864
    %5438 = vmatprep.subr.bf16.mxu0 0
    %5439 = vmatpush1.bf16.msra.mxu0 %v2865
    %5440 = vmatprep.subr.bf16.mxu0 0
    %5441 = vmatpush1.bf16.msra.mxu0 %v2866
    %5442 = vmatprep.mubr.bf16.mxu0 %v5278
    %5443 = vmatmul.mubr.bf16.gmra.mrb[0].mxu0 %v5277
    %v5444 = vpop.f32.mrb[0].mxu0
    %v5445 = vadd.f32 %v5404, %v5444
    %v5446 = vpop.f32.mrb[0].mxu0
    %v5447 = vpop.f32.mrb[0].mxu0
    %v5448 = vadd.f32 %v5407, %v5447
    %v5449 = vpop.f32.mrb[0].mxu0
    %5450 = vdwg.mxu0
    %5451 = vmatprep.subr.bf16.mxu0 0
    %5452 = vmatpush1.bf16.msra.mxu0 %v2867
    %5453 = vmatprep.subr.bf16.mxu0 0
    %5454 = vmatpush1.bf16.msra.mxu0 %v2868
    %5455 = vmatprep.subr.bf16.mxu0 0
    %5456 = vmatpush1.bf16.msra.mxu0 %v2869
    %5457 = vmatprep.subr.bf16.mxu0 0
    %5458 = vmatpush1.bf16.msra.mxu0 %v2870
    %5459 = vmatprep.subr.bf16.mxu0 0
    %5460 = vmatpush1.bf16.msra.mxu0 %v2871
    %5461 = vmatprep.subr.bf16.mxu0 0
    %5462 = vmatpush1.bf16.msra.mxu0 %v2872
    %5463 = vmatprep.subr.bf16.mxu0 0
    %5464 = vmatpush1.bf16.msra.mxu0 %v2873
    %5465 = vmatprep.subr.bf16.mxu0 0
    %5466 = vmatpush1.bf16.msra.mxu0 %v2874
    %5467 = vmatprep.subr.bf16.mxu0 0
    %5468 = vmatpush1.bf16.msra.mxu0 %v2875
    %5469 = vmatprep.subr.bf16.mxu0 0
    %5470 = vmatpush1.bf16.msra.mxu0 %v2876
    %5471 = vmatprep.subr.bf16.mxu0 0
    %5472 = vmatpush1.bf16.msra.mxu0 %v2877
    %5473 = vmatprep.subr.bf16.mxu0 0
    %5474 = vmatpush1.bf16.msra.mxu0 %v2878
    %5475 = vmatprep.subr.bf16.mxu0 0
    %5476 = vmatpush1.bf16.msra.mxu0 %v2879
    %5477 = vmatprep.subr.bf16.mxu0 0
    %5478 = vmatpush1.bf16.msra.mxu0 %v2880
    %5479 = vmatprep.subr.bf16.mxu0 0
    %5480 = vmatpush1.bf16.msra.mxu0 %v2881
    %5481 = vmatprep.subr.bf16.mxu0 0
    %5482 = vmatpush1.bf16.msra.mxu0 %v2882
    %5483 = vmatprep.mubr.bf16.mxu0 %v5280
    %5484 = vmatmul.mubr.bf16.gmra.mrb[0].mxu0 %v5279
    %v5485 = vpop.f32.mrb[0].mxu0
    %v5486 = vadd.f32 %v5445, %v5485
    %v5487 = vpop.f32.mrb[0].mxu0
    %v5488 = vpop.f32.mrb[0].mxu0
    %v5489 = vadd.f32 %v5448, %v5488
    %v5490 = vpop.f32.mrb[0].mxu0
    %5491 = vdwg.mxu0
    %5492 = vmatprep.subr.bf16.mxu0 0
    %5493 = vmatpush1.bf16.msra.mxu0 %v2883
    %5494 = vmatprep.subr.bf16.mxu0 0
    %5495 = vmatpush1.bf16.msra.mxu0 %v2884
    %5496 = vmatprep.subr.bf16.mxu0 0
    %5497 = vmatpush1.bf16.msra.mxu0 %v2885
    %5498 = vmatprep.subr.bf16.mxu0 0
    %5499 = vmatpush1.bf16.msra.mxu0 %v2886
    %5500 = vmatprep.subr.bf16.mxu0 0
    %5501 = vmatpush1.bf16.msra.mxu0 %v2887
    %5502 = vmatprep.subr.bf16.mxu0 0
    %5503 = vmatpush1.bf16.msra.mxu0 %v2888
    %5504 = vmatprep.subr.bf16.mxu0 0
    %5505 = vmatpush1.bf16.msra.mxu0 %v2889
    %5506 = vmatprep.subr.bf16.mxu0 0
    %5507 = vmatpush1.bf16.msra.mxu0 %v2890
    %5508 = vmatprep.subr.bf16.mxu0 0
    %5509 = vmatpush1.bf16.msra.mxu0 %v2891
    %5510 = vmatprep.subr.bf16.mxu0 0
    %5511 = vmatpush1.bf16.msra.mxu0 %v2892
    %5512 = vmatprep.subr.bf16.mxu0 0
    %5513 = vmatpush1.bf16.msra.mxu0 %v2893
    %5514 = vmatprep.subr.bf16.mxu0 0
    %5515 = vmatpush1.bf16.msra.mxu0 %v2894
    %5516 = vmatprep.subr.bf16.mxu0 0
    %5517 = vmatpush1.bf16.msra.mxu0 %v2895
    %5518 = vmatprep.subr.bf16.mxu0 0
    %5519 = vmatpush1.bf16.msra.mxu0 %v2896
    %5520 = vmatprep.subr.bf16.mxu0 0
    %5521 = vmatpush1.bf16.msra.mxu0 %v2897
    %5522 = vmatprep.subr.bf16.mxu0 0
    %5523 = vmatpush1.bf16.msra.mxu0 %v2898
    %5524 = vmatprep.mubr.bf16.mxu0 %v5282
    %5525 = vmatmul.mubr.bf16.gmra.mrb[0].mxu0 %v5281
    %v5526 = vpop.f32.mrb[0].mxu0
    %v5527 = vadd.f32 %v5486, %v5526
    %v5528 = vpop.f32.mrb[0].mxu0
    %v5529 = vpop.f32.mrb[0].mxu0
    %v5530 = vadd.f32 %v5489, %v5529
    %v5531 = vpop.f32.mrb[0].mxu0
    %5532 = vdwg.mxu0
    %5533 = vmatprep.subr.bf16.mxu0 0
    %5534 = vmatpush1.bf16.msra.mxu0 %v2899
    %5535 = vmatprep.subr.bf16.mxu0 0
    %5536 = vmatpush1.bf16.msra.mxu0 %v2900
    %5537 = vmatprep.subr.bf16.mxu0 0
    %5538 = vmatpush1.bf16.msra.mxu0 %v2901
    %5539 = vmatprep.subr.bf16.mxu0 0
    %5540 = vmatpush1.bf16.msra.mxu0 %v2902
    %5541 = vmatprep.subr.bf16.mxu0 0
    %5542 = vmatpush1.bf16.msra.mxu0 %v2903
    %5543 = vmatprep.subr.bf16.mxu0 0
    %5544 = vmatpush1.bf16.msra.mxu0 %v2904
    %5545 = vmatprep.subr.bf16.mxu0 0
    %5546 = vmatpush1.bf16.msra.mxu0 %v2905
    %5547 = vmatprep.subr.bf16.mxu0 0
    %5548 = vmatpush1.bf16.msra.mxu0 %v2906
    %5549 = vmatprep.subr.bf16.mxu0 0
    %5550 = vmatpush1.bf16.msra.mxu0 %v2907
    %5551 = vmatprep.subr.bf16.mxu0 0
    %5552 = vmatpush1.bf16.msra.mxu0 %v2908
    %5553 = vmatprep.subr.bf16.mxu0 0
    %5554 = vmatpush1.bf16.msra.mxu0 %v2909
    %5555 = vmatprep.subr.bf16.mxu0 0
    %5556 = vmatpush1.bf16.msra.mxu0 %v2910
    %5557 = vmatprep.subr.bf16.mxu0 0
    %5558 = vmatpush1.bf16.msra.mxu0 %v2911
    %5559 = vmatprep.subr.bf16.mxu0 0
    %5560 = vmatpush1.bf16.msra.mxu0 %v2912
    %5561 = vmatprep.subr.bf16.mxu0 0
    %5562 = vmatpush1.bf16.msra.mxu0 %v2913
    %5563 = vmatprep.subr.bf16.mxu0 0
    %5564 = vmatpush1.bf16.msra.mxu0 %v2914
    %5565 = vmatprep.mubr.bf16.mxu0 %v5284
    %5566 = vmatmul.mubr.bf16.gmra.mrb[0].mxu0 %v5283
    %v5567 = vpop.f32.mrb[0].mxu0
    %v5568 = vadd.f32 %v5527, %v5567
    %v5569 = vpop.f32.mrb[0].mxu0
    %v5570 = vpop.f32.mrb[0].mxu0
    %v5571 = vadd.f32 %v5530, %v5570
    %v5572 = vpop.f32.mrb[0].mxu0
    %5573 = vdwg.mxu0
    %5574 = vmatprep.subr.bf16.mxu0 0
    %5575 = vmatpush1.bf16.msra.mxu0 %v2915
    %5576 = vmatprep.subr.bf16.mxu0 0
    %5577 = vmatpush1.bf16.msra.mxu0 %v2916
    %5578 = vmatprep.subr.bf16.mxu0 0
    %5579 = vmatpush1.bf16.msra.mxu0 %v2917
    %5580 = vmatprep.subr.bf16.mxu0 0
    %5581 = vmatpush1.bf16.msra.mxu0 %v2918
    %5582 = vmatprep.subr.bf16.mxu0 0
    %5583 = vmatpush1.bf16.msra.mxu0 %v2919
    %5584 = vmatprep.subr.bf16.mxu0 0
    %5585 = vmatpush1.bf16.msra.mxu0 %v2920
    %5586 = vmatprep.subr.bf16.mxu0 0
    %5587 = vmatpush1.bf16.msra.mxu0 %v2921
    %5588 = vmatprep.subr.bf16.mxu0 0
    %5589 = vmatpush1.bf16.msra.mxu0 %v2922
    %5590 = vmatprep.subr.bf16.mxu0 0
    %5591 = vmatpush1.bf16.msra.mxu0 %v2923
    %5592 = vmatprep.subr.bf16.mxu0 0
    %5593 = vmatpush1.bf16.msra.mxu0 %v2924
    %5594 = vmatprep.subr.bf16.mxu0 0
    %5595 = vmatpush1.bf16.msra.mxu0 %v2925
    %5596 = vmatprep.subr.bf16.mxu0 0
    %5597 = vmatpush1.bf16.msra.mxu0 %v2926
    %5598 = vmatprep.subr.bf16.mxu0 0
    %5599 = vmatpush1.bf16.msra.mxu0 %v2927
    %5600 = vmatprep.subr.bf16.mxu0 0
    %5601 = vmatpush1.bf16.msra.mxu0 %v2928
    %5602 = vmatprep.subr.bf16.mxu0 0
    %5603 = vmatpush1.bf16.msra.mxu0 %v2929
    %5604 = vmatprep.subr.bf16.mxu0 0
    %5605 = vmatpush1.bf16.msra.mxu0 %v2930
    %5606 = vmatprep.mubr.bf16.mxu0 %v5286
    %5607 = vmatmul.mubr.bf16.gmra.mrb[0].mxu0 %v5285
    %v5608 = vpop.f32.mrb[0].mxu0
    %v5609 = vadd.f32 %v5568, %v5608
    %v5610 = vpop.f32.mrb[0].mxu0
    %v5611 = vpop.f32.mrb[0].mxu0
    %v5612 = vadd.f32 %v5571, %v5611
    %v5613 = vpop.f32.mrb[0].mxu0
    %5614 = vdwg.mxu0
    %v5615 = vlaneseq
    %v5616 = vshrl.u32 %v5615, 7
    %v5617 = vsub.s32 4, %v5616
    %v5618 = vrot.slane %v69, %v5617
    %5620 = vrot.lane.b32.xlu0 %v5618, 64
    %v5621 = vpop.permute.xlu0 %5620
    %v5623 = vadd.f32 %v5609, %v5621
    %v5624 = vadd.f32 %v5612, %v5621
    %5627 = vrot.lane.b32.xlu0 %v5623, 64
    %v5628 = vpop.permute.xlu0 %5627
    %5629 = vrot.lane.b32.xlu0 %v5624, 64
    %v5630 = vpop.permute.xlu0 %5629
    %v5633 = vadd.f32 %v4423, %v5628
    %v5634 = vadd.f32 %v4424, %v5630
    %v5635 = vsel %vm484, %v5633, 0.0
    %5636 = vadd.xlane.f32.xlu0 %v5635
    %v5637 = vpop.xlane.xlu0 %5636
    %v5638 = vsel %vm484, %v5634, 0.0
    %5639 = vadd.xlane.f32.xlu0 %v5638
    %v5640 = vpop.xlane.xlu0 %5639
    %v5641 = vmul.f32 %v5637, %v1396
    %v5642 = vmul.f32 %v5640, %v1396
    %v5643 = vsub.f32 %v5633, %v5641
    %v5644 = vsub.f32 %v5634, %v5642
    %v5645 = vmul.f32 %v5643, %v5643
    %v5646 = vmul.f32 %v5644, %v5644
    %v5647 = vsel %vm484, %v5645, 0.0
    %5648 = vadd.xlane.f32.xlu0 %v5647
    %v5649 = vpop.xlane.xlu0 %5648
    %v5650 = vsel %vm484, %v5646, 0.0
    %5651 = vadd.xlane.f32.xlu0 %v5650
    %v5652 = vpop.xlane.xlu0 %5651
    %v5653 = vmul.f32 %v5649, %v1396
    %v5654 = vmul.f32 %v5652, %v1396
    %v5655 = vadd.f32 %v5653, 1e-05
    %v5656 = vadd.f32 %v5654, 1e-05
    %v5657 = vrsqrt.pop %v5655
    %v5658 = vrsqrt.pop %v5656
    %v5659 = vmul.f32 %v5643, %v5657
    %v5660 = vmul.f32 %v5644, %v5658
    %v5661 = vlaneseq
    %v5662 = vshrl.u32 %v5661, 7
    %v5663 = vsub.s32 5, %v5662
    %v5664 = vrot.slane %v69, %v5663
    %v5665 = vmul.f32 %v5659, %v5664
    %v5666 = vmul.f32 %v5660, %v5664
    %v5667 = vlaneseq
    %v5668 = vshrl.u32 %v5667, 7
    %v5669 = vsub.s32 6, %v5668
    %v5670 = vrot.slane %v69, %v5669
    %v5671 = vadd.f32 %v5665, %v5670
    %v5672 = vadd.f32 %v5666, %v5670
    %v5673 = vadd.f32 %v5671, 0.0
    %v5674 = vadd.f32 %v5673, %v5672
    %v5675 = vmul.f32 %v5674, 0.5
    %v5676 = vlaneseq
    %v5677 = vshrl.u32 %v5676, 7
    %v5678 = vsub.s32 7, %v5677
    %v5679 = vrot.slane %v69, %v5678
    %v5680 = vmul.f32 %v5675, %v5679
    %v5681 = vsel %vm484, %v5680, 0.0
    %5682 = vadd.xlane.f32.xlu0 %v5681
    %v5683 = vpop.xlane.xlu0 %5682
    %v5684 = vlaneseq
    %v5685 = vshrl.u32 %v5684, 7
    %v5686 = vsub.s32 0, %v5685
    %v5687 = vrot.slane %v71, %v5686
    %v5688 = vadd.f32 %v5683, %v5687
    %v5689 = vsub.f32 0.0, %v5688
    %v5690 = vmul.f32 %v5689, 1.442695
    %v5691 = vpow.pop %v5690
    %v5692 = vadd.f32 %v5691, 1.0
    %v5693 = vrcp.pop %v5692
    %v5694 = vmul.f32 1.0, %v5693
    %vm5695 = vcmask 7168
    %5696 = vst.msk [vmem:[%s6] sm:$0xff] %vm5695, %v5694
    // Predicated region
    $region38: #{transformer_forward.1} parent=1 // pred_check
      _
    $region39: #{transformer_forward.1} parent=1 // pred_check_branch
      %5698 = sbr.rel (0) target = $region41
    $region40: #{transformer_forward.1} parent=1 // pred_region
      _
    $region41: #{transformer_forward.1} parent=1 // pred_fallthru
      _
    // Predicated region
    $region42: #{transformer_forward.1} parent=1 // pred_check
      _
    $region43: #{transformer_forward.1} parent=1 // pred_check_branch
      %5700 = sbr.rel (0) target = $region45
    $region44: #{transformer_forward.1} parent=1 // pred_region
      _
    $region45: #{transformer_forward.1} parent=1 // pred_fallthru
      _
    %5701 = vsyncpa [#allocation3], 1
    %5702 = vsyncpa [#allocation5], 1

</llo_original>
